<compile_context>
chip_gen: v7x
topology: tpu7x:2x2x1
jax: 0.10.0
libtpu: 0.0.40
codegen_flags: <defaults>
</compile_context>

<pallas_src>
import jax
import jax.numpy as jnp
from jax import lax
from jax.experimental import pallas as pl
from jax.experimental.pallas import tpu as pltpu

# Model hyper-parameters (small, consistent with the module's __init__).
INPUT_SIZE = 4
HIDDEN_SIZE = 32
NUM_LAYERS = 2
OUTPUT_SIZE = 1
BATCH = 2
SEQ_LEN = 8

# Packed-layout constants.
HP = 128                  # lane-padded hidden: each gate owns one 128-lane tile
G3 = 3 * HP               # packed gate width, order [r | z | n]
D_PAD = 8                 # input feature dim padded 4 -> 8 (sublane multiple)
ROW_IH0 = 0               # weight-slab row offsets (all multiples of 8)
ROW_HH0 = 8
ROW_IH1 = 136
ROW_HH1 = 264
W_ROWS = 392              # 8 + 128 + 128 + 128


# ----------------------------- Pallas kernel ------------------------------- #

def gru_model_kernel(x_ref, w_ref, misc_ref, out_ref):
    """Whole GRUModel forward (2 GRU layers + fc head), single fused kernel.

    x_ref   : (T*B, D_PAD) f32 time-major flattened input (features zero-padded).
    w_ref   : (392, 384) bf16 packed weight slab [w_ih0 | w_hh0 | w_ih1 | w_hh1],
              each gate in its own 128-lane tile, real values in lanes g*128:g*128+32.
    misc_ref: (8, 384) f32  row0 = bx0, row1 = bx1 (r/z input+hidden biases
              pre-summed, n-gate input bias), row2 = [bhn0 | bhn1 | w_fc_row],
              row3[0] = b_fc.
    out_ref : (B, OUTPUT_SIZE) f32.
    """
    B = out_ref.shape[0]
    T = x_ref.shape[0] // B

    # ---- static, vreg-aligned slices of the two packed parameter slabs ------
    w_ih0 = w_ref[ROW_IH0:ROW_IH0 + D_PAD, :]       # (8,  3*HP) bf16
    w_hh0 = w_ref[ROW_HH0:ROW_HH0 + HP, :]          # (HP, 3*HP) bf16
    w_ih1 = w_ref[ROW_IH1:ROW_IH1 + HP, :]          # (HP, 3*HP) bf16
    w_hh1 = w_ref[ROW_HH1:ROW_HH1 + HP, :]          # (HP, 3*HP) bf16

    bx0 = misc_ref[0:1, :]                          # (1, 3*HP)
    bx1 = misc_ref[1:2, :]                          # (1, 3*HP)
    # hoisted broadcasts (JAX does not CSE broadcast_in_dim inside the loop)
    bhn0 = jnp.broadcast_to(misc_ref[2:3, 0:HP], (B, HP))
    bhn1 = jnp.broadcast_to(misc_ref[2:3, HP:2 * HP], (B, HP))
    w_fc = misc_ref[2:3, 2 * HP:3 * HP]             # (1, HP) fc weight as a row
    b_fc = misc_ref[3:4, 0:1]                       # (1, 1)

    # ---- layer-0 input projection hoisted out of the recurrence -------------
    gx0_all = jnp.dot(x_ref[...].astype(jnp.bfloat16), w_ih0,
                      preferred_element_type=jnp.float32) + bx0   # (T*B, 3*HP)

    def gru_cell(gx, h, w_hh, b_hn):
        """One GRU step; every gate slice is a whole-vreg (128-lane) pick."""
        gh = jnp.dot(h.astype(jnp.bfloat16), w_hh,
                     preferred_element_type=jnp.float32)          # (B, 3*HP)
        rz = jax.nn.sigmoid(gx[:, :2 * HP] + gh[:, :2 * HP])      # fused r|z
        r = rz[:, :HP]
        z = rz[:, HP:]
        n = jnp.tanh(gx[:, 2 * HP:] + r * (gh[:, 2 * HP:] + b_hn))
        return (1.0 - z) * n + z * h

    def gx1_of(h0):
        # layer-1 input projection, computed per step (rides in idle MXU slots)
        return jnp.dot(h0.astype(jnp.bfloat16), w_ih1,
                       preferred_element_type=jnp.float32) + bx1

    zeros = jnp.zeros((B, HP), jnp.float32)

    # ---- interleaved (software-pipelined) recurrence, fully unrolled --------
    # layer-1 runs one time-step behind layer-0, so each iteration contains two
    # *independent* dependency chains the scheduler can overlap.
    h0 = gru_cell(gx0_all[0:B, :], zeros, w_hh0, bhn0)            # layer 0, t = 0
    h1 = zeros
    for t in range(1, T):                                         # T = 8: unrolled
        h1_next = gru_cell(gx1_of(h0), h1, w_hh1, bhn1)           # layer 1, t - 1
        h0_next = gru_cell(gx0_all[t * B:(t + 1) * B, :],         # layer 0, t
                           h0, w_hh0, bhn0)
        h0, h1 = h0_next, h1_next
    h1 = gru_cell(gx1_of(h0), h1, w_hh1, bhn1)                    # drain: layer 1, T-1

    # ---- dropout is identity at inference; fc head as multiply + lane-reduce.
    # (padded lanes of both h1 and w_fc are zero, so the 128-lane reduce equals
    #  the true 32-wide dot)
    out_ref[...] = jnp.sum(h1 * w_fc, axis=-1, keepdims=True) + b_fc


# ------------------------------- wrapper ----------------------------------- #

_VMEM = pl.BlockSpec(memory_space=pltpu.MemorySpace.VMEM)


@jax.jit
def gru_model_forward(x, packed):
    """Forward pass matching GRUModel.forward (inference mode).

    x: (B, T, input_size) float32, batch_first like PyTorch.
    """
    B, T, D = x.shape
    # Layout plumbing outside the kernel: time-major flatten + feature pad to 8
    # so every in-kernel access is a static aligned slice.
    x_tm = jnp.transpose(x, (1, 0, 2)).reshape(T * B, D)
    x_tm = jnp.pad(x_tm, ((0, 0), (0, D_PAD - D))).astype(jnp.float32)
    return pl.pallas_call(
        gru_model_kernel,
        out_shape=jax.ShapeDtypeStruct((B, OUTPUT_SIZE), jnp.float32),
        in_specs=[_VMEM, _VMEM, _VMEM],
        out_specs=_VMEM,
    )(x_tm, packed["w_slab"], packed["misc"])


# ---------------------- deterministic parameter init ----------------------- #

def init_params(key):
    """Per-gate parameters (gate order [r, z, n]; weights already transposed
    relative to PyTorch's (3H, D_in) layout)."""
    params = {"gru_layers": []}
    scale = 1.0 / jnp.sqrt(HIDDEN_SIZE)
    for layer in range(NUM_LAYERS):
        d_in = INPUT_SIZE if layer == 0 else HIDDEN_SIZE
        key, k1, k2, k3, k4 = jax.random.split(key, 5)
        w_ih = jax.random.uniform(k1, (3, d_in, HIDDEN_SIZE), jnp.float32,
                                  -scale, scale)
        w_hh = jax.random.uniform(k2, (3, HIDDEN_SIZE, HIDDEN_SIZE), jnp.float32,
                                  -scale, scale)
        b_ih = jax.random.uniform(k3, (3, 1, HIDDEN_SIZE), jnp.float32,
                                  -scale, scale)
        b_hh = jax.random.uniform(k4, (3, 1, HIDDEN_SIZE), jnp.float32,
                                  -scale, scale)
        params["gru_layers"].append((w_ih, w_hh, b_ih, b_hh))
    key, k5, k6 = jax.random.split(key, 3)
    params["w_fc"] = jax.random.uniform(k5, (HIDDEN_SIZE, OUTPUT_SIZE),
                                        jnp.float32, -scale, scale)
    params["b_fc"] = jax.random.uniform(k6, (1, OUTPUT_SIZE),
                                        jnp.float32, -scale, scale)
    return params


def pack_params(params):
    """Host-side packing into two slabs:
       w_slab (392, 384) bf16: [w_ih0(8) | w_hh0(128) | w_ih1(128) | w_hh1(128)],
         each gate zero-padded to its own 128-lane tile (order [r|z|n]).
       misc   (8, 384) f32: fused biases + n-gate hidden biases + fc params."""
    H = HIDDEN_SIZE

    def gate_pack(mats, rows):
        # mats: (3, d, H) -> (rows, 3*HP), gate g in lanes [g*HP : g*HP+H]
        d = mats.shape[1]
        out = jnp.zeros((rows, G3), jnp.float32)
        for g in range(3):
            out = out.at[:d, g * HP:g * HP + H].set(mats[g])
        return out

    def bias_row(b_ih, b_hh):
        # r/z input+hidden biases pre-summed; n keeps only the input bias here
        row = jnp.zeros((1, G3), jnp.float32)
        row = row.at[:, 0 * HP:0 * HP + H].set(b_ih[0] + b_hh[0])
        row = row.at[:, 1 * HP:1 * HP + H].set(b_ih[1] + b_hh[1])
        row = row.at[:, 2 * HP:2 * HP + H].set(b_ih[2])
        return row

    (w_ih0, w_hh0, b_ih0, b_hh0) = params["gru_layers"][0]
    (w_ih1, w_hh1, b_ih1, b_hh1) = params["gru_layers"][1]

    w_slab = jnp.concatenate([
        gate_pack(w_ih0, D_PAD),   # rows   0:  8
        gate_pack(w_hh0, HP),      # rows   8:136
        gate_pack(w_ih1, HP),      # rows 136:264
        gate_pack(w_hh1, HP),      # rows 264:392
    ], axis=0).astype(jnp.bfloat16)

    misc = jnp.zeros((8, G3), jnp.float32)
    misc = misc.at[0:1, :].set(bias_row(b_ih0, b_hh0))
    misc = misc.at[1:2, :].set(bias_row(b_ih1, b_hh1))
    misc = misc.at[2, 0:H].set(b_hh0[2, 0])                        # b_hn layer 0
    misc = misc.at[2, HP:HP + H].set(b_hh1[2, 0])                  # b_hn layer 1
    misc = misc.at[2, 2 * HP:2 * HP + H].set(params["w_fc"][:, 0])  # fc weight row
    misc = misc.at[3, 0].set(params["b_fc"][0, 0])                 # fc bias
    return {"w_slab": w_slab, "misc": misc}


# --------------------------- pure-JAX reference ----------------------------- #

def gru_model_reference(x, params):
    h_seq = jnp.transpose(x, (1, 0, 2)).astype(jnp.float32)
    B = x.shape[0]
    for (w_ih, w_hh, b_ih, b_hh) in params["gru_layers"]:
        def cell(h, x_t):
            r = jax.nn.sigmoid(x_t @ w_ih[0] + b_ih[0] + h @ w_hh[0] + b_hh[0])
            z = jax.nn.sigmoid(x_t @ w_ih[1] + b_ih[1] + h @ w_hh[1] + b_hh[1])
            n = jnp.tanh(x_t @ w_ih[2] + b_ih[2] + r * (h @ w_hh[2] + b_hh[2]))
            h_new = (1.0 - z) * n + z * h
            return h_new, h_new
        h0 = jnp.zeros((B, HIDDEN_SIZE), jnp.float32)
        _, h_seq = lax.scan(cell, h0, h_seq)
    return h_seq[-1] @ params["w_fc"] + params["b_fc"]


# ----------------------------------- main ----------------------------------- #

if __name__ == "__main__":
    key = jax.random.PRNGKey(0)
    key_p, key_x = jax.random.split(key)
    params = init_params(key_p)
    packed = pack_params(params)
    x = jax.random.normal(key_x, (BATCH, SEQ_LEN, INPUT_SIZE), jnp.float32)

    out = jax.block_until_ready(gru_model_forward(x, packed))
    ref = jax.block_until_ready(gru_model_reference(x, params))

    assert out.shape == (BATCH, OUTPUT_SIZE)
    # Kernel uses explicit bf16 MXU operands (single-pass matmuls) with f32
    # accumulation; tolerance vs. the pure-f32 reference is set accordingly.
    assert jnp.allclose(out, ref, atol=2e-2, rtol=2e-2), (out, ref)

    print("KERNEL_OK")
</pallas_src>

<mosaic_0001>
module attributes {stable_mosaic.version = 11 : i64} {
  func.func @gru_model_kernel(%arg0: memref<16x8xf32, #tpu.memory_space<vmem>>, %arg1: memref<392x384xbf16, #tpu.memory_space<vmem>>, %arg2: memref<8x384xf32, #tpu.memory_space<vmem>>, %arg3: memref<2x1xf32, #tpu.memory_space<vmem>>) attributes {dimension_semantics = [], scalar_prefetch = 0 : i64, scratch_operands = 0 : i64, tpu.core_type = #tpu.core_type<tc>} {
    %c0 = arith.constant 0 : index
    %c0_0 = arith.constant 0 : index
    %0 = vector.load %arg1[%c0, %c0_0] : memref<392x384xbf16, #tpu.memory_space<vmem>>, vector<8x384xbf16>
    %c8 = arith.constant 8 : index
    %c0_1 = arith.constant 0 : index
    %1 = vector.load %arg1[%c8, %c0_1] : memref<392x384xbf16, #tpu.memory_space<vmem>>, vector<128x384xbf16>
    %c136 = arith.constant 136 : index
    %c0_2 = arith.constant 0 : index
    %2 = vector.load %arg1[%c136, %c0_2] : memref<392x384xbf16, #tpu.memory_space<vmem>>, vector<128x384xbf16>
    %c264 = arith.constant 264 : index
    %c0_3 = arith.constant 0 : index
    %3 = vector.load %arg1[%c264, %c0_3] : memref<392x384xbf16, #tpu.memory_space<vmem>>, vector<128x384xbf16>
    %c0_4 = arith.constant 0 : index
    %c0_5 = arith.constant 0 : index
    %4 = vector.load %arg2[%c0_4, %c0_5] : memref<8x384xf32, #tpu.memory_space<vmem>>, vector<1x384xf32>
    %c1 = arith.constant 1 : index
    %c0_6 = arith.constant 0 : index
    %5 = vector.load %arg2[%c1, %c0_6] : memref<8x384xf32, #tpu.memory_space<vmem>>, vector<1x384xf32>
    %c2 = arith.constant 2 : index
    %c0_7 = arith.constant 0 : index
    %6 = vector.load %arg2[%c2, %c0_7] : memref<8x384xf32, #tpu.memory_space<vmem>>, vector<1x128xf32>
    %7 = vector.shape_cast %6 : vector<1x128xf32> to vector<1x128xf32>
    %8 = vector.broadcast %7 : vector<1x128xf32> to vector<2x128xf32>
    %c2_8 = arith.constant 2 : index
    %c128 = arith.constant 128 : index
    %9 = vector.load %arg2[%c2_8, %c128] : memref<8x384xf32, #tpu.memory_space<vmem>>, vector<1x128xf32>
    %10 = vector.shape_cast %9 : vector<1x128xf32> to vector<1x128xf32>
    %11 = vector.broadcast %10 : vector<1x128xf32> to vector<2x128xf32>
    %c2_9 = arith.constant 2 : index
    %c256 = arith.constant 256 : index
    %12 = vector.load %arg2[%c2_9, %c256] : memref<8x384xf32, #tpu.memory_space<vmem>>, vector<1x128xf32>
    %c3 = arith.constant 3 : index
    %c0_10 = arith.constant 0 : index
    %13 = vector.load %arg2[%c3, %c0_10] : memref<8x384xf32, #tpu.memory_space<vmem>>, vector<1x1xf32>
    %c0_11 = arith.constant 0 : index
    %c0_12 = arith.constant 0 : index
    %14 = vector.load %arg0[%c0_11, %c0_12] : memref<16x8xf32, #tpu.memory_space<vmem>>, vector<16x8xf32>
    %15 = arith.truncf %14 : vector<16x8xf32> to vector<16x8xbf16>
    %cst = arith.constant dense<0.000000e+00> : vector<16x384xf32>
    %16 = tpu.matmul %15, %0, %cst {dimension_numbers = #tpu.dot_dimension_numbers<[1], [0], [0], [1], [0, 0, 1, 1], [], []>} : vector<16x8xbf16>, vector<8x384xbf16>, vector<16x384xf32> -> vector<16x384xf32>
    %17 = vector.broadcast %4 : vector<1x384xf32> to vector<16x384xf32>
    %18 = arith.addf %16, %17 : vector<16x384xf32>
    %cst_13 = arith.constant 0.000000e+00 : f32
    %19 = vector.broadcast %cst_13 : f32 to vector<2x128xf32>
    %20 = vector.extract_strided_slice %18 {offsets = [0, 0], sizes = [2, 384], strides = [1, 1]} : vector<16x384xf32> to vector<2x384xf32>
    %21 = arith.truncf %19 : vector<2x128xf32> to vector<2x128xbf16>
    %cst_14 = arith.constant dense<0.000000e+00> : vector<2x384xf32>
    %22 = tpu.matmul %21, %1, %cst_14 {dimension_numbers = #tpu.dot_dimension_numbers<[1], [0], [0], [1], [0, 0, 1, 1], [], []>} : vector<2x128xbf16>, vector<128x384xbf16>, vector<2x384xf32> -> vector<2x384xf32>
    %23 = vector.extract_strided_slice %20 {offsets = [0, 0], sizes = [2, 256], strides = [1, 1]} : vector<2x384xf32> to vector<2x256xf32>
    %24 = vector.extract_strided_slice %22 {offsets = [0, 0], sizes = [2, 256], strides = [1, 1]} : vector<2x384xf32> to vector<2x256xf32>
    %25 = arith.addf %23, %24 : vector<2x256xf32>
    %26 = arith.negf %25 : vector<2x256xf32>
    %27 = math.exp %26 : vector<2x256xf32>
    %cst_15 = arith.constant 1.000000e+00 : f32
    %28 = vector.broadcast %cst_15 : f32 to vector<2x256xf32>
    %29 = arith.addf %28, %27 : vector<2x256xf32>
    %30 = arith.divf %28, %29 : vector<2x256xf32>
    %31 = vector.extract_strided_slice %30 {offsets = [0, 0], sizes = [2, 128], strides = [1, 1]} : vector<2x256xf32> to vector<2x128xf32>
    %32 = vector.extract_strided_slice %30 {offsets = [0, 128], sizes = [2, 128], strides = [1, 1]} : vector<2x256xf32> to vector<2x128xf32>
    %33 = vector.extract_strided_slice %20 {offsets = [0, 256], sizes = [2, 128], strides = [1, 1]} : vector<2x384xf32> to vector<2x128xf32>
    %34 = vector.extract_strided_slice %22 {offsets = [0, 256], sizes = [2, 128], strides = [1, 1]} : vector<2x384xf32> to vector<2x128xf32>
    %35 = arith.addf %34, %8 : vector<2x128xf32>
    %36 = arith.mulf %31, %35 : vector<2x128xf32>
    %37 = arith.addf %33, %36 : vector<2x128xf32>
    %38 = math.tanh %37 : vector<2x128xf32>
    %cst_16 = arith.constant 1.000000e+00 : f32
    %39 = vector.broadcast %cst_16 : f32 to vector<2x128xf32>
    %40 = arith.subf %39, %32 : vector<2x128xf32>
    %41 = arith.mulf %40, %38 : vector<2x128xf32>
    %42 = arith.mulf %32, %19 : vector<2x128xf32>
    %43 = arith.addf %41, %42 : vector<2x128xf32>
    %44 = arith.truncf %43 : vector<2x128xf32> to vector<2x128xbf16>
    %cst_17 = arith.constant dense<0.000000e+00> : vector<2x384xf32>
    %45 = tpu.matmul %44, %2, %cst_17 {dimension_numbers = #tpu.dot_dimension_numbers<[1], [0], [0], [1], [0, 0, 1, 1], [], []>} : vector<2x128xbf16>, vector<128x384xbf16>, vector<2x384xf32> -> vector<2x384xf32>
    %46 = vector.broadcast %5 : vector<1x384xf32> to vector<2x384xf32>
    %47 = arith.addf %45, %46 : vector<2x384xf32>
    %48 = arith.truncf %19 : vector<2x128xf32> to vector<2x128xbf16>
    %cst_18 = arith.constant dense<0.000000e+00> : vector<2x384xf32>
    %49 = tpu.matmul %48, %3, %cst_18 {dimension_numbers = #tpu.dot_dimension_numbers<[1], [0], [0], [1], [0, 0, 1, 1], [], []>} : vector<2x128xbf16>, vector<128x384xbf16>, vector<2x384xf32> -> vector<2x384xf32>
    %50 = vector.extract_strided_slice %47 {offsets = [0, 0], sizes = [2, 256], strides = [1, 1]} : vector<2x384xf32> to vector<2x256xf32>
    %51 = vector.extract_strided_slice %49 {offsets = [0, 0], sizes = [2, 256], strides = [1, 1]} : vector<2x384xf32> to vector<2x256xf32>
    %52 = arith.addf %50, %51 : vector<2x256xf32>
    %53 = arith.negf %52 : vector<2x256xf32>
    %54 = math.exp %53 : vector<2x256xf32>
    %cst_19 = arith.constant 1.000000e+00 : f32
    %55 = vector.broadcast %cst_19 : f32 to vector<2x256xf32>
    %56 = arith.addf %55, %54 : vector<2x256xf32>
    %57 = arith.divf %55, %56 : vector<2x256xf32>
    %58 = vector.extract_strided_slice %57 {offsets = [0, 0], sizes = [2, 128], strides = [1, 1]} : vector<2x256xf32> to vector<2x128xf32>
    %59 = vector.extract_strided_slice %57 {offsets = [0, 128], sizes = [2, 128], strides = [1, 1]} : vector<2x256xf32> to vector<2x128xf32>
    %60 = vector.extract_strided_slice %47 {offsets = [0, 256], sizes = [2, 128], strides = [1, 1]} : vector<2x384xf32> to vector<2x128xf32>
    %61 = vector.extract_strided_slice %49 {offsets = [0, 256], sizes = [2, 128], strides = [1, 1]} : vector<2x384xf32> to vector<2x128xf32>
    %62 = arith.addf %61, %11 : vector<2x128xf32>
    %63 = arith.mulf %58, %62 : vector<2x128xf32>
    %64 = arith.addf %60, %63 : vector<2x128xf32>
    %65 = math.tanh %64 : vector<2x128xf32>
    %cst_20 = arith.constant 1.000000e+00 : f32
    %66 = vector.broadcast %cst_20 : f32 to vector<2x128xf32>
    %67 = arith.subf %66, %59 : vector<2x128xf32>
    %68 = arith.mulf %67, %65 : vector<2x128xf32>
    %69 = arith.mulf %59, %19 : vector<2x128xf32>
    %70 = arith.addf %68, %69 : vector<2x128xf32>
    %71 = vector.extract_strided_slice %18 {offsets = [2, 0], sizes = [2, 384], strides = [1, 1]} : vector<16x384xf32> to vector<2x384xf32>
    %72 = arith.truncf %43 : vector<2x128xf32> to vector<2x128xbf16>
    %cst_21 = arith.constant dense<0.000000e+00> : vector<2x384xf32>
    %73 = tpu.matmul %72, %1, %cst_21 {dimension_numbers = #tpu.dot_dimension_numbers<[1], [0], [0], [1], [0, 0, 1, 1], [], []>} : vector<2x128xbf16>, vector<128x384xbf16>, vector<2x384xf32> -> vector<2x384xf32>
    %74 = vector.extract_strided_slice %71 {offsets = [0, 0], sizes = [2, 256], strides = [1, 1]} : vector<2x384xf32> to vector<2x256xf32>
    %75 = vector.extract_strided_slice %73 {offsets = [0, 0], sizes = [2, 256], strides = [1, 1]} : vector<2x384xf32> to vector<2x256xf32>
    %76 = arith.addf %74, %75 : vector<2x256xf32>
    %77 = arith.negf %76 : vector<2x256xf32>
    %78 = math.exp %77 : vector<2x256xf32>
    %cst_22 = arith.constant 1.000000e+00 : f32
    %79 = vector.broadcast %cst_22 : f32 to vector<2x256xf32>
    %80 = arith.addf %79, %78 : vector<2x256xf32>
    %81 = arith.divf %79, %80 : vector<2x256xf32>
    %82 = vector.extract_strided_slice %81 {offsets = [0, 0], sizes = [2, 128], strides = [1, 1]} : vector<2x256xf32> to vector<2x128xf32>
    %83 = vector.extract_strided_slice %81 {offsets = [0, 128], sizes = [2, 128], strides = [1, 1]} : vector<2x256xf32> to vector<2x128xf32>
    %84 = vector.extract_strided_slice %71 {offsets = [0, 256], sizes = [2, 128], strides = [1, 1]} : vector<2x384xf32> to vector<2x128xf32>
    %85 = vector.extract_strided_slice %73 {offsets = [0, 256], sizes = [2, 128], strides = [1, 1]} : vector<2x384xf32> to vector<2x128xf32>
    %86 = arith.addf %85, %8 : vector<2x128xf32>
    %87 = arith.mulf %82, %86 : vector<2x128xf32>
    %88 = arith.addf %84, %87 : vector<2x128xf32>
    %89 = math.tanh %88 : vector<2x128xf32>
    %cst_23 = arith.constant 1.000000e+00 : f32
    %90 = vector.broadcast %cst_23 : f32 to vector<2x128xf32>
    %91 = arith.subf %90, %83 : vector<2x128xf32>
    %92 = arith.mulf %91, %89 : vector<2x128xf32>
    %93 = arith.mulf %83, %43 : vector<2x128xf32>
    %94 = arith.addf %92, %93 : vector<2x128xf32>
    %95 = arith.truncf %94 : vector<2x128xf32> to vector<2x128xbf16>
    %cst_24 = arith.constant dense<0.000000e+00> : vector<2x384xf32>
    %96 = tpu.matmul %95, %2, %cst_24 {dimension_numbers = #tpu.dot_dimension_numbers<[1], [0], [0], [1], [0, 0, 1, 1], [], []>} : vector<2x128xbf16>, vector<128x384xbf16>, vector<2x384xf32> -> vector<2x384xf32>
    %97 = vector.broadcast %5 : vector<1x384xf32> to vector<2x384xf32>
    %98 = arith.addf %96, %97 : vector<2x384xf32>
    %99 = arith.truncf %70 : vector<2x128xf32> to vector<2x128xbf16>
    %cst_25 = arith.constant dense<0.000000e+00> : vector<2x384xf32>
    %100 = tpu.matmul %99, %3, %cst_25 {dimension_numbers = #tpu.dot_dimension_numbers<[1], [0], [0], [1], [0, 0, 1, 1], [], []>} : vector<2x128xbf16>, vector<128x384xbf16>, vector<2x384xf32> -> vector<2x384xf32>
    %101 = vector.extract_strided_slice %98 {offsets = [0, 0], sizes = [2, 256], strides = [1, 1]} : vector<2x384xf32> to vector<2x256xf32>
    %102 = vector.extract_strided_slice %100 {offsets = [0, 0], sizes = [2, 256], strides = [1, 1]} : vector<2x384xf32> to vector<2x256xf32>
    %103 = arith.addf %101, %102 : vector<2x256xf32>
    %104 = arith.negf %103 : vector<2x256xf32>
    %105 = math.exp %104 : vector<2x256xf32>
    %cst_26 = arith.constant 1.000000e+00 : f32
    %106 = vector.broadcast %cst_26 : f32 to vector<2x256xf32>
    %107 = arith.addf %106, %105 : vector<2x256xf32>
    %108 = arith.divf %106, %107 : vector<2x256xf32>
    %109 = vector.extract_strided_slice %108 {offsets = [0, 0], sizes = [2, 128], strides = [1, 1]} : vector<2x256xf32> to vector<2x128xf32>
    %110 = vector.extract_strided_slice %108 {offsets = [0, 128], sizes = [2, 128], strides = [1, 1]} : vector<2x256xf32> to vector<2x128xf32>
    %111 = vector.extract_strided_slice %98 {offsets = [0, 256], sizes = [2, 128], strides = [1, 1]} : vector<2x384xf32> to vector<2x128xf32>
    %112 = vector.extract_strided_slice %100 {offsets = [0, 256], sizes = [2, 128], strides = [1, 1]} : vector<2x384xf32> to vector<2x128xf32>
    %113 = arith.addf %112, %11 : vector<2x128xf32>
    %114 = arith.mulf %109, %113 : vector<2x128xf32>
    %115 = arith.addf %111, %114 : vector<2x128xf32>
    %116 = math.tanh %115 : vector<2x128xf32>
    %cst_27 = arith.constant 1.000000e+00 : f32
    %117 = vector.broadcast %cst_27 : f32 to vector<2x128xf32>
    %118 = arith.subf %117, %110 : vector<2x128xf32>
    %119 = arith.mulf %118, %116 : vector<2x128xf32>
    %120 = arith.mulf %110, %70 : vector<2x128xf32>
    %121 = arith.addf %119, %120 : vector<2x128xf32>
    %122 = vector.extract_strided_slice %18 {offsets = [4, 0], sizes = [2, 384], strides = [1, 1]} : vector<16x384xf32> to vector<2x384xf32>
    %123 = arith.truncf %94 : vector<2x128xf32> to vector<2x128xbf16>
    %cst_28 = arith.constant dense<0.000000e+00> : vector<2x384xf32>
    %124 = tpu.matmul %123, %1, %cst_28 {dimension_numbers = #tpu.dot_dimension_numbers<[1], [0], [0], [1], [0, 0, 1, 1], [], []>} : vector<2x128xbf16>, vector<128x384xbf16>, vector<2x384xf32> -> vector<2x384xf32>
    %125 = vector.extract_strided_slice %122 {offsets = [0, 0], sizes = [2, 256], strides = [1, 1]} : vector<2x384xf32> to vector<2x256xf32>
    %126 = vector.extract_strided_slice %124 {offsets = [0, 0], sizes = [2, 256], strides = [1, 1]} : vector<2x384xf32> to vector<2x256xf32>
    %127 = arith.addf %125, %126 : vector<2x256xf32>
    %128 = arith.negf %127 : vector<2x256xf32>
    %129 = math.exp %128 : vector<2x256xf32>
    %cst_29 = arith.constant 1.000000e+00 : f32
    %130 = vector.broadcast %cst_29 : f32 to vector<2x256xf32>
    %131 = arith.addf %130, %129 : vector<2x256xf32>
    %132 = arith.divf %130, %131 : vector<2x256xf32>
    %133 = vector.extract_strided_slice %132 {offsets = [0, 0], sizes = [2, 128], strides = [1, 1]} : vector<2x256xf32> to vector<2x128xf32>
    %134 = vector.extract_strided_slice %132 {offsets = [0, 128], sizes = [2, 128], strides = [1, 1]} : vector<2x256xf32> to vector<2x128xf32>
    %135 = vector.extract_strided_slice %122 {offsets = [0, 256], sizes = [2, 128], strides = [1, 1]} : vector<2x384xf32> to vector<2x128xf32>
    %136 = vector.extract_strided_slice %124 {offsets = [0, 256], sizes = [2, 128], strides = [1, 1]} : vector<2x384xf32> to vector<2x128xf32>
    %137 = arith.addf %136, %8 : vector<2x128xf32>
    %138 = arith.mulf %133, %137 : vector<2x128xf32>
    %139 = arith.addf %135, %138 : vector<2x128xf32>
    %140 = math.tanh %139 : vector<2x128xf32>
    %cst_30 = arith.constant 1.000000e+00 : f32
    %141 = vector.broadcast %cst_30 : f32 to vector<2x128xf32>
    %142 = arith.subf %141, %134 : vector<2x128xf32>
    %143 = arith.mulf %142, %140 : vector<2x128xf32>
    %144 = arith.mulf %134, %94 : vector<2x128xf32>
    %145 = arith.addf %143, %144 : vector<2x128xf32>
    %146 = arith.truncf %145 : vector<2x128xf32> to vector<2x128xbf16>
    %cst_31 = arith.constant dense<0.000000e+00> : vector<2x384xf32>
    %147 = tpu.matmul %146, %2, %cst_31 {dimension_numbers = #tpu.dot_dimension_numbers<[1], [0], [0], [1], [0, 0, 1, 1], [], []>} : vector<2x128xbf16>, vector<128x384xbf16>, vector<2x384xf32> -> vector<2x384xf32>
    %148 = vector.broadcast %5 : vector<1x384xf32> to vector<2x384xf32>
    %149 = arith.addf %147, %148 : vector<2x384xf32>
    %150 = arith.truncf %121 : vector<2x128xf32> to vector<2x128xbf16>
    %cst_32 = arith.constant dense<0.000000e+00> : vector<2x384xf32>
    %151 = tpu.matmul %150, %3, %cst_32 {dimension_numbers = #tpu.dot_dimension_numbers<[1], [0], [0], [1], [0, 0, 1, 1], [], []>} : vector<2x128xbf16>, vector<128x384xbf16>, vector<2x384xf32> -> vector<2x384xf32>
    %152 = vector.extract_strided_slice %149 {offsets = [0, 0], sizes = [2, 256], strides = [1, 1]} : vector<2x384xf32> to vector<2x256xf32>
    %153 = vector.extract_strided_slice %151 {offsets = [0, 0], sizes = [2, 256], strides = [1, 1]} : vector<2x384xf32> to vector<2x256xf32>
    %154 = arith.addf %152, %153 : vector<2x256xf32>
    %155 = arith.negf %154 : vector<2x256xf32>
    %156 = math.exp %155 : vector<2x256xf32>
    %cst_33 = arith.constant 1.000000e+00 : f32
    %157 = vector.broadcast %cst_33 : f32 to vector<2x256xf32>
    %158 = arith.addf %157, %156 : vector<2x256xf32>
    %159 = arith.divf %157, %158 : vector<2x256xf32>
    %160 = vector.extract_strided_slice %159 {offsets = [0, 0], sizes = [2, 128], strides = [1, 1]} : vector<2x256xf32> to vector<2x128xf32>
    %161 = vector.extract_strided_slice %159 {offsets = [0, 128], sizes = [2, 128], strides = [1, 1]} : vector<2x256xf32> to vector<2x128xf32>
    %162 = vector.extract_strided_slice %149 {offsets = [0, 256], sizes = [2, 128], strides = [1, 1]} : vector<2x384xf32> to vector<2x128xf32>
    %163 = vector.extract_strided_slice %151 {offsets = [0, 256], sizes = [2, 128], strides = [1, 1]} : vector<2x384xf32> to vector<2x128xf32>
    %164 = arith.addf %163, %11 : vector<2x128xf32>
    %165 = arith.mulf %160, %164 : vector<2x128xf32>
    %166 = arith.addf %162, %165 : vector<2x128xf32>
    %167 = math.tanh %166 : vector<2x128xf32>
    %cst_34 = arith.constant 1.000000e+00 : f32
    %168 = vector.broadcast %cst_34 : f32 to vector<2x128xf32>
    %169 = arith.subf %168, %161 : vector<2x128xf32>
    %170 = arith.mulf %169, %167 : vector<2x128xf32>
    %171 = arith.mulf %161, %121 : vector<2x128xf32>
    %172 = arith.addf %170, %171 : vector<2x128xf32>
    %173 = vector.extract_strided_slice %18 {offsets = [6, 0], sizes = [2, 384], strides = [1, 1]} : vector<16x384xf32> to vector<2x384xf32>
    %174 = arith.truncf %145 : vector<2x128xf32> to vector<2x128xbf16>
    %cst_35 = arith.constant dense<0.000000e+00> : vector<2x384xf32>
    %175 = tpu.matmul %174, %1, %cst_35 {dimension_numbers = #tpu.dot_dimension_numbers<[1], [0], [0], [1], [0, 0, 1, 1], [], []>} : vector<2x128xbf16>, vector<128x384xbf16>, vector<2x384xf32> -> vector<2x384xf32>
    %176 = vector.extract_strided_slice %173 {offsets = [0, 0], sizes = [2, 256], strides = [1, 1]} : vector<2x384xf32> to vector<2x256xf32>
    %177 = vector.extract_strided_slice %175 {offsets = [0, 0], sizes = [2, 256], strides = [1, 1]} : vector<2x384xf32> to vector<2x256xf32>
    %178 = arith.addf %176, %177 : vector<2x256xf32>
    %179 = arith.negf %178 : vector<2x256xf32>
    %180 = math.exp %179 : vector<2x256xf32>
    %cst_36 = arith.constant 1.000000e+00 : f32
    %181 = vector.broadcast %cst_36 : f32 to vector<2x256xf32>
    %182 = arith.addf %181, %180 : vector<2x256xf32>
    %183 = arith.divf %181, %182 : vector<2x256xf32>
    %184 = vector.extract_strided_slice %183 {offsets = [0, 0], sizes = [2, 128], strides = [1, 1]} : vector<2x256xf32> to vector<2x128xf32>
    %185 = vector.extract_strided_slice %183 {offsets = [0, 128], sizes = [2, 128], strides = [1, 1]} : vector<2x256xf32> to vector<2x128xf32>
    %186 = vector.extract_strided_slice %173 {offsets = [0, 256], sizes = [2, 128], strides = [1, 1]} : vector<2x384xf32> to vector<2x128xf32>
    %187 = vector.extract_strided_slice %175 {offsets = [0, 256], sizes = [2, 128], strides = [1, 1]} : vector<2x384xf32> to vector<2x128xf32>
    %188 = arith.addf %187, %8 : vector<2x128xf32>
    %189 = arith.mulf %184, %188 : vector<2x128xf32>
    %190 = arith.addf %186, %189 : vector<2x128xf32>
    %191 = math.tanh %190 : vector<2x128xf32>
    %cst_37 = arith.constant 1.000000e+00 : f32
    %192 = vector.broadcast %cst_37 : f32 to vector<2x128xf32>
    %193 = arith.subf %192, %185 : vector<2x128xf32>
    %194 = arith.mulf %193, %191 : vector<2x128xf32>
    %195 = arith.mulf %185, %145 : vector<2x128xf32>
    %196 = arith.addf %194, %195 : vector<2x128xf32>
    %197 = arith.truncf %196 : vector<2x128xf32> to vector<2x128xbf16>
    %cst_38 = arith.constant dense<0.000000e+00> : vector<2x384xf32>
    %198 = tpu.matmul %197, %2, %cst_38 {dimension_numbers = #tpu.dot_dimension_numbers<[1], [0], [0], [1], [0, 0, 1, 1], [], []>} : vector<2x128xbf16>, vector<128x384xbf16>, vector<2x384xf32> -> vector<2x384xf32>
    %199 = vector.broadcast %5 : vector<1x384xf32> to vector<2x384xf32>
    %200 = arith.addf %198, %199 : vector<2x384xf32>
    %201 = arith.truncf %172 : vector<2x128xf32> to vector<2x128xbf16>
    %cst_39 = arith.constant dense<0.000000e+00> : vector<2x384xf32>
    %202 = tpu.matmul %201, %3, %cst_39 {dimension_numbers = #tpu.dot_dimension_numbers<[1], [0], [0], [1], [0, 0, 1, 1], [], []>} : vector<2x128xbf16>, vector<128x384xbf16>, vector<2x384xf32> -> vector<2x384xf32>
    %203 = vector.extract_strided_slice %200 {offsets = [0, 0], sizes = [2, 256], strides = [1, 1]} : vector<2x384xf32> to vector<2x256xf32>
    %204 = vector.extract_strided_slice %202 {offsets = [0, 0], sizes = [2, 256], strides = [1, 1]} : vector<2x384xf32> to vector<2x256xf32>
    %205 = arith.addf %203, %204 : vector<2x256xf32>
    %206 = arith.negf %205 : vector<2x256xf32>
    %207 = math.exp %206 : vector<2x256xf32>
    %cst_40 = arith.constant 1.000000e+00 : f32
    %208 = vector.broadcast %cst_40 : f32 to vector<2x256xf32>
    %209 = arith.addf %208, %207 : vector<2x256xf32>
    %210 = arith.divf %208, %209 : vector<2x256xf32>
    %211 = vector.extract_strided_slice %210 {offsets = [0, 0], sizes = [2, 128], strides = [1, 1]} : vector<2x256xf32> to vector<2x128xf32>
    %212 = vector.extract_strided_slice %210 {offsets = [0, 128], sizes = [2, 128], strides = [1, 1]} : vector<2x256xf32> to vector<2x128xf32>
    %213 = vector.extract_strided_slice %200 {offsets = [0, 256], sizes = [2, 128], strides = [1, 1]} : vector<2x384xf32> to vector<2x128xf32>
    %214 = vector.extract_strided_slice %202 {offsets = [0, 256], sizes = [2, 128], strides = [1, 1]} : vector<2x384xf32> to vector<2x128xf32>
    %215 = arith.addf %214, %11 : vector<2x128xf32>
    %216 = arith.mulf %211, %215 : vector<2x128xf32>
    %217 = arith.addf %213, %216 : vector<2x128xf32>
    %218 = math.tanh %217 : vector<2x128xf32>
    %cst_41 = arith.constant 1.000000e+00 : f32
    %219 = vector.broadcast %cst_41 : f32 to vector<2x128xf32>
    %220 = arith.subf %219, %212 : vector<2x128xf32>
    %221 = arith.mulf %220, %218 : vector<2x128xf32>
    %222 = arith.mulf %212, %172 : vector<2x128xf32>
    %223 = arith.addf %221, %222 : vector<2x128xf32>
    %224 = vector.extract_strided_slice %18 {offsets = [8, 0], sizes = [2, 384], strides = [1, 1]} : vector<16x384xf32> to vector<2x384xf32>
    %225 = arith.truncf %196 : vector<2x128xf32> to vector<2x128xbf16>
    %cst_42 = arith.constant dense<0.000000e+00> : vector<2x384xf32>
    %226 = tpu.matmul %225, %1, %cst_42 {dimension_numbers = #tpu.dot_dimension_numbers<[1], [0], [0], [1], [0, 0, 1, 1], [], []>} : vector<2x128xbf16>, vector<128x384xbf16>, vector<2x384xf32> -> vector<2x384xf32>
    %227 = vector.extract_strided_slice %224 {offsets = [0, 0], sizes = [2, 256], strides = [1, 1]} : vector<2x384xf32> to vector<2x256xf32>
    %228 = vector.extract_strided_slice %226 {offsets = [0, 0], sizes = [2, 256], strides = [1, 1]} : vector<2x384xf32> to vector<2x256xf32>
    %229 = arith.addf %227, %228 : vector<2x256xf32>
    %230 = arith.negf %229 : vector<2x256xf32>
    %231 = math.exp %230 : vector<2x256xf32>
    %cst_43 = arith.constant 1.000000e+00 : f32
    %232 = vector.broadcast %cst_43 : f32 to vector<2x256xf32>
    %233 = arith.addf %232, %231 : vector<2x256xf32>
    %234 = arith.divf %232, %233 : vector<2x256xf32>
    %235 = vector.extract_strided_slice %234 {offsets = [0, 0], sizes = [2, 128], strides = [1, 1]} : vector<2x256xf32> to vector<2x128xf32>
    %236 = vector.extract_strided_slice %234 {offsets = [0, 128], sizes = [2, 128], strides = [1, 1]} : vector<2x256xf32> to vector<2x128xf32>
    %237 = vector.extract_strided_slice %224 {offsets = [0, 256], sizes = [2, 128], strides = [1, 1]} : vector<2x384xf32> to vector<2x128xf32>
    %238 = vector.extract_strided_slice %226 {offsets = [0, 256], sizes = [2, 128], strides = [1, 1]} : vector<2x384xf32> to vector<2x128xf32>
    %239 = arith.addf %238, %8 : vector<2x128xf32>
    %240 = arith.mulf %235, %239 : vector<2x128xf32>
    %241 = arith.addf %237, %240 : vector<2x128xf32>
    %242 = math.tanh %241 : vector<2x128xf32>
    %cst_44 = arith.constant 1.000000e+00 : f32
    %243 = vector.broadcast %cst_44 : f32 to vector<2x128xf32>
    %244 = arith.subf %243, %236 : vector<2x128xf32>
    %245 = arith.mulf %244, %242 : vector<2x128xf32>
    %246 = arith.mulf %236, %196 : vector<2x128xf32>
    %247 = arith.addf %245, %246 : vector<2x128xf32>
    %248 = arith.truncf %247 : vector<2x128xf32> to vector<2x128xbf16>
    %cst_45 = arith.constant dense<0.000000e+00> : vector<2x384xf32>
    %249 = tpu.matmul %248, %2, %cst_45 {dimension_numbers = #tpu.dot_dimension_numbers<[1], [0], [0], [1], [0, 0, 1, 1], [], []>} : vector<2x128xbf16>, vector<128x384xbf16>, vector<2x384xf32> -> vector<2x384xf32>
    %250 = vector.broadcast %5 : vector<1x384xf32> to vector<2x384xf32>
    %251 = arith.addf %249, %250 : vector<2x384xf32>
    %252 = arith.truncf %223 : vector<2x128xf32> to vector<2x128xbf16>
    %cst_46 = arith.constant dense<0.000000e+00> : vector<2x384xf32>
    %253 = tpu.matmul %252, %3, %cst_46 {dimension_numbers = #tpu.dot_dimension_numbers<[1], [0], [0], [1], [0, 0, 1, 1], [], []>} : vector<2x128xbf16>, vector<128x384xbf16>, vector<2x384xf32> -> vector<2x384xf32>
    %254 = vector.extract_strided_slice %251 {offsets = [0, 0], sizes = [2, 256], strides = [1, 1]} : vector<2x384xf32> to vector<2x256xf32>
    %255 = vector.extract_strided_slice %253 {offsets = [0, 0], sizes = [2, 256], strides = [1, 1]} : vector<2x384xf32> to vector<2x256xf32>
    %256 = arith.addf %254, %255 : vector<2x256xf32>
    %257 = arith.negf %256 : vector<2x256xf32>
    %258 = math.exp %257 : vector<2x256xf32>
    %cst_47 = arith.constant 1.000000e+00 : f32
    %259 = vector.broadcast %cst_47 : f32 to vector<2x256xf32>
    %260 = arith.addf %259, %258 : vector<2x256xf32>
    %261 = arith.divf %259, %260 : vector<2x256xf32>
    %262 = vector.extract_strided_slice %261 {offsets = [0, 0], sizes = [2, 128], strides = [1, 1]} : vector<2x256xf32> to vector<2x128xf32>
    %263 = vector.extract_strided_slice %261 {offsets = [0, 128], sizes = [2, 128], strides = [1, 1]} : vector<2x256xf32> to vector<2x128xf32>
    %264 = vector.extract_strided_slice %251 {offsets = [0, 256], sizes = [2, 128], strides = [1, 1]} : vector<2x384xf32> to vector<2x128xf32>
    %265 = vector.extract_strided_slice %253 {offsets = [0, 256], sizes = [2, 128], strides = [1, 1]} : vector<2x384xf32> to vector<2x128xf32>
    %266 = arith.addf %265, %11 : vector<2x128xf32>
    %267 = arith.mulf %262, %266 : vector<2x128xf32>
    %268 = arith.addf %264, %267 : vector<2x128xf32>
    %269 = math.tanh %268 : vector<2x128xf32>
    %cst_48 = arith.constant 1.000000e+00 : f32
    %270 = vector.broadcast %cst_48 : f32 to vector<2x128xf32>
    %271 = arith.subf %270, %263 : vector<2x128xf32>
    %272 = arith.mulf %271, %269 : vector<2x128xf32>
    %273 = arith.mulf %263, %223 : vector<2x128xf32>
    %274 = arith.addf %272, %273 : vector<2x128xf32>
    %275 = vector.extract_strided_slice %18 {offsets = [10, 0], sizes = [2, 384], strides = [1, 1]} : vector<16x384xf32> to vector<2x384xf32>
    %276 = arith.truncf %247 : vector<2x128xf32> to vector<2x128xbf16>
    %cst_49 = arith.constant dense<0.000000e+00> : vector<2x384xf32>
    %277 = tpu.matmul %276, %1, %cst_49 {dimension_numbers = #tpu.dot_dimension_numbers<[1], [0], [0], [1], [0, 0, 1, 1], [], []>} : vector<2x128xbf16>, vector<128x384xbf16>, vector<2x384xf32> -> vector<2x384xf32>
    %278 = vector.extract_strided_slice %275 {offsets = [0, 0], sizes = [2, 256], strides = [1, 1]} : vector<2x384xf32> to vector<2x256xf32>
    %279 = vector.extract_strided_slice %277 {offsets = [0, 0], sizes = [2, 256], strides = [1, 1]} : vector<2x384xf32> to vector<2x256xf32>
    %280 = arith.addf %278, %279 : vector<2x256xf32>
    %281 = arith.negf %280 : vector<2x256xf32>
    %282 = math.exp %281 : vector<2x256xf32>
    %cst_50 = arith.constant 1.000000e+00 : f32
    %283 = vector.broadcast %cst_50 : f32 to vector<2x256xf32>
    %284 = arith.addf %283, %282 : vector<2x256xf32>
    %285 = arith.divf %283, %284 : vector<2x256xf32>
    %286 = vector.extract_strided_slice %285 {offsets = [0, 0], sizes = [2, 128], strides = [1, 1]} : vector<2x256xf32> to vector<2x128xf32>
    %287 = vector.extract_strided_slice %285 {offsets = [0, 128], sizes = [2, 128], strides = [1, 1]} : vector<2x256xf32> to vector<2x128xf32>
    %288 = vector.extract_strided_slice %275 {offsets = [0, 256], sizes = [2, 128], strides = [1, 1]} : vector<2x384xf32> to vector<2x128xf32>
    %289 = vector.extract_strided_slice %277 {offsets = [0, 256], sizes = [2, 128], strides = [1, 1]} : vector<2x384xf32> to vector<2x128xf32>
    %290 = arith.addf %289, %8 : vector<2x128xf32>
    %291 = arith.mulf %286, %290 : vector<2x128xf32>
    %292 = arith.addf %288, %291 : vector<2x128xf32>
    %293 = math.tanh %292 : vector<2x128xf32>
    %cst_51 = arith.constant 1.000000e+00 : f32
    %294 = vector.broadcast %cst_51 : f32 to vector<2x128xf32>
    %295 = arith.subf %294, %287 : vector<2x128xf32>
    %296 = arith.mulf %295, %293 : vector<2x128xf32>
    %297 = arith.mulf %287, %247 : vector<2x128xf32>
    %298 = arith.addf %296, %297 : vector<2x128xf32>
    %299 = arith.truncf %298 : vector<2x128xf32> to vector<2x128xbf16>
    %cst_52 = arith.constant dense<0.000000e+00> : vector<2x384xf32>
    %300 = tpu.matmul %299, %2, %cst_52 {dimension_numbers = #tpu.dot_dimension_numbers<[1], [0], [0], [1], [0, 0, 1, 1], [], []>} : vector<2x128xbf16>, vector<128x384xbf16>, vector<2x384xf32> -> vector<2x384xf32>
    %301 = vector.broadcast %5 : vector<1x384xf32> to vector<2x384xf32>
    %302 = arith.addf %300, %301 : vector<2x384xf32>
    %303 = arith.truncf %274 : vector<2x128xf32> to vector<2x128xbf16>
    %cst_53 = arith.constant dense<0.000000e+00> : vector<2x384xf32>
    %304 = tpu.matmul %303, %3, %cst_53 {dimension_numbers = #tpu.dot_dimension_numbers<[1], [0], [0], [1], [0, 0, 1, 1], [], []>} : vector<2x128xbf16>, vector<128x384xbf16>, vector<2x384xf32> -> vector<2x384xf32>
    %305 = vector.extract_strided_slice %302 {offsets = [0, 0], sizes = [2, 256], strides = [1, 1]} : vector<2x384xf32> to vector<2x256xf32>
    %306 = vector.extract_strided_slice %304 {offsets = [0, 0], sizes = [2, 256], strides = [1, 1]} : vector<2x384xf32> to vector<2x256xf32>
    %307 = arith.addf %305, %306 : vector<2x256xf32>
    %308 = arith.negf %307 : vector<2x256xf32>
    %309 = math.exp %308 : vector<2x256xf32>
    %cst_54 = arith.constant 1.000000e+00 : f32
    %310 = vector.broadcast %cst_54 : f32 to vector<2x256xf32>
    %311 = arith.addf %310, %309 : vector<2x256xf32>
    %312 = arith.divf %310, %311 : vector<2x256xf32>
    %313 = vector.extract_strided_slice %312 {offsets = [0, 0], sizes = [2, 128], strides = [1, 1]} : vector<2x256xf32> to vector<2x128xf32>
    %314 = vector.extract_strided_slice %312 {offsets = [0, 128], sizes = [2, 128], strides = [1, 1]} : vector<2x256xf32> to vector<2x128xf32>
    %315 = vector.extract_strided_slice %302 {offsets = [0, 256], sizes = [2, 128], strides = [1, 1]} : vector<2x384xf32> to vector<2x128xf32>
    %316 = vector.extract_strided_slice %304 {offsets = [0, 256], sizes = [2, 128], strides = [1, 1]} : vector<2x384xf32> to vector<2x128xf32>
    %317 = arith.addf %316, %11 : vector<2x128xf32>
    %318 = arith.mulf %313, %317 : vector<2x128xf32>
    %319 = arith.addf %315, %318 : vector<2x128xf32>
    %320 = math.tanh %319 : vector<2x128xf32>
    %cst_55 = arith.constant 1.000000e+00 : f32
    %321 = vector.broadcast %cst_55 : f32 to vector<2x128xf32>
    %322 = arith.subf %321, %314 : vector<2x128xf32>
    %323 = arith.mulf %322, %320 : vector<2x128xf32>
    %324 = arith.mulf %314, %274 : vector<2x128xf32>
    %325 = arith.addf %323, %324 : vector<2x128xf32>
    %326 = vector.extract_strided_slice %18 {offsets = [12, 0], sizes = [2, 384], strides = [1, 1]} : vector<16x384xf32> to vector<2x384xf32>
    %327 = arith.truncf %298 : vector<2x128xf32> to vector<2x128xbf16>
    %cst_56 = arith.constant dense<0.000000e+00> : vector<2x384xf32>
    %328 = tpu.matmul %327, %1, %cst_56 {dimension_numbers = #tpu.dot_dimension_numbers<[1], [0], [0], [1], [0, 0, 1, 1], [], []>} : vector<2x128xbf16>, vector<128x384xbf16>, vector<2x384xf32> -> vector<2x384xf32>
    %329 = vector.extract_strided_slice %326 {offsets = [0, 0], sizes = [2, 256], strides = [1, 1]} : vector<2x384xf32> to vector<2x256xf32>
    %330 = vector.extract_strided_slice %328 {offsets = [0, 0], sizes = [2, 256], strides = [1, 1]} : vector<2x384xf32> to vector<2x256xf32>
    %331 = arith.addf %329, %330 : vector<2x256xf32>
    %332 = arith.negf %331 : vector<2x256xf32>
    %333 = math.exp %332 : vector<2x256xf32>
    %cst_57 = arith.constant 1.000000e+00 : f32
    %334 = vector.broadcast %cst_57 : f32 to vector<2x256xf32>
    %335 = arith.addf %334, %333 : vector<2x256xf32>
    %336 = arith.divf %334, %335 : vector<2x256xf32>
    %337 = vector.extract_strided_slice %336 {offsets = [0, 0], sizes = [2, 128], strides = [1, 1]} : vector<2x256xf32> to vector<2x128xf32>
    %338 = vector.extract_strided_slice %336 {offsets = [0, 128], sizes = [2, 128], strides = [1, 1]} : vector<2x256xf32> to vector<2x128xf32>
    %339 = vector.extract_strided_slice %326 {offsets = [0, 256], sizes = [2, 128], strides = [1, 1]} : vector<2x384xf32> to vector<2x128xf32>
    %340 = vector.extract_strided_slice %328 {offsets = [0, 256], sizes = [2, 128], strides = [1, 1]} : vector<2x384xf32> to vector<2x128xf32>
    %341 = arith.addf %340, %8 : vector<2x128xf32>
    %342 = arith.mulf %337, %341 : vector<2x128xf32>
    %343 = arith.addf %339, %342 : vector<2x128xf32>
    %344 = math.tanh %343 : vector<2x128xf32>
    %cst_58 = arith.constant 1.000000e+00 : f32
    %345 = vector.broadcast %cst_58 : f32 to vector<2x128xf32>
    %346 = arith.subf %345, %338 : vector<2x128xf32>
    %347 = arith.mulf %346, %344 : vector<2x128xf32>
    %348 = arith.mulf %338, %298 : vector<2x128xf32>
    %349 = arith.addf %347, %348 : vector<2x128xf32>
    %350 = arith.truncf %349 : vector<2x128xf32> to vector<2x128xbf16>
    %cst_59 = arith.constant dense<0.000000e+00> : vector<2x384xf32>
    %351 = tpu.matmul %350, %2, %cst_59 {dimension_numbers = #tpu.dot_dimension_numbers<[1], [0], [0], [1], [0, 0, 1, 1], [], []>} : vector<2x128xbf16>, vector<128x384xbf16>, vector<2x384xf32> -> vector<2x384xf32>
    %352 = vector.broadcast %5 : vector<1x384xf32> to vector<2x384xf32>
    %353 = arith.addf %351, %352 : vector<2x384xf32>
    %354 = arith.truncf %325 : vector<2x128xf32> to vector<2x128xbf16>
    %cst_60 = arith.constant dense<0.000000e+00> : vector<2x384xf32>
    %355 = tpu.matmul %354, %3, %cst_60 {dimension_numbers = #tpu.dot_dimension_numbers<[1], [0], [0], [1], [0, 0, 1, 1], [], []>} : vector<2x128xbf16>, vector<128x384xbf16>, vector<2x384xf32> -> vector<2x384xf32>
    %356 = vector.extract_strided_slice %353 {offsets = [0, 0], sizes = [2, 256], strides = [1, 1]} : vector<2x384xf32> to vector<2x256xf32>
    %357 = vector.extract_strided_slice %355 {offsets = [0, 0], sizes = [2, 256], strides = [1, 1]} : vector<2x384xf32> to vector<2x256xf32>
    %358 = arith.addf %356, %357 : vector<2x256xf32>
    %359 = arith.negf %358 : vector<2x256xf32>
    %360 = math.exp %359 : vector<2x256xf32>
    %cst_61 = arith.constant 1.000000e+00 : f32
    %361 = vector.broadcast %cst_61 : f32 to vector<2x256xf32>
    %362 = arith.addf %361, %360 : vector<2x256xf32>
    %363 = arith.divf %361, %362 : vector<2x256xf32>
    %364 = vector.extract_strided_slice %363 {offsets = [0, 0], sizes = [2, 128], strides = [1, 1]} : vector<2x256xf32> to vector<2x128xf32>
    %365 = vector.extract_strided_slice %363 {offsets = [0, 128], sizes = [2, 128], strides = [1, 1]} : vector<2x256xf32> to vector<2x128xf32>
    %366 = vector.extract_strided_slice %353 {offsets = [0, 256], sizes = [2, 128], strides = [1, 1]} : vector<2x384xf32> to vector<2x128xf32>
    %367 = vector.extract_strided_slice %355 {offsets = [0, 256], sizes = [2, 128], strides = [1, 1]} : vector<2x384xf32> to vector<2x128xf32>
    %368 = arith.addf %367, %11 : vector<2x128xf32>
    %369 = arith.mulf %364, %368 : vector<2x128xf32>
    %370 = arith.addf %366, %369 : vector<2x128xf32>
    %371 = math.tanh %370 : vector<2x128xf32>
    %cst_62 = arith.constant 1.000000e+00 : f32
    %372 = vector.broadcast %cst_62 : f32 to vector<2x128xf32>
    %373 = arith.subf %372, %365 : vector<2x128xf32>
    %374 = arith.mulf %373, %371 : vector<2x128xf32>
    %375 = arith.mulf %365, %325 : vector<2x128xf32>
    %376 = arith.addf %374, %375 : vector<2x128xf32>
    %377 = vector.extract_strided_slice %18 {offsets = [14, 0], sizes = [2, 384], strides = [1, 1]} : vector<16x384xf32> to vector<2x384xf32>
    %378 = arith.truncf %349 : vector<2x128xf32> to vector<2x128xbf16>
    %cst_63 = arith.constant dense<0.000000e+00> : vector<2x384xf32>
    %379 = tpu.matmul %378, %1, %cst_63 {dimension_numbers = #tpu.dot_dimension_numbers<[1], [0], [0], [1], [0, 0, 1, 1], [], []>} : vector<2x128xbf16>, vector<128x384xbf16>, vector<2x384xf32> -> vector<2x384xf32>
    %380 = vector.extract_strided_slice %377 {offsets = [0, 0], sizes = [2, 256], strides = [1, 1]} : vector<2x384xf32> to vector<2x256xf32>
    %381 = vector.extract_strided_slice %379 {offsets = [0, 0], sizes = [2, 256], strides = [1, 1]} : vector<2x384xf32> to vector<2x256xf32>
    %382 = arith.addf %380, %381 : vector<2x256xf32>
    %383 = arith.negf %382 : vector<2x256xf32>
    %384 = math.exp %383 : vector<2x256xf32>
    %cst_64 = arith.constant 1.000000e+00 : f32
    %385 = vector.broadcast %cst_64 : f32 to vector<2x256xf32>
    %386 = arith.addf %385, %384 : vector<2x256xf32>
    %387 = arith.divf %385, %386 : vector<2x256xf32>
    %388 = vector.extract_strided_slice %387 {offsets = [0, 0], sizes = [2, 128], strides = [1, 1]} : vector<2x256xf32> to vector<2x128xf32>
    %389 = vector.extract_strided_slice %387 {offsets = [0, 128], sizes = [2, 128], strides = [1, 1]} : vector<2x256xf32> to vector<2x128xf32>
    %390 = vector.extract_strided_slice %377 {offsets = [0, 256], sizes = [2, 128], strides = [1, 1]} : vector<2x384xf32> to vector<2x128xf32>
    %391 = vector.extract_strided_slice %379 {offsets = [0, 256], sizes = [2, 128], strides = [1, 1]} : vector<2x384xf32> to vector<2x128xf32>
    %392 = arith.addf %391, %8 : vector<2x128xf32>
    %393 = arith.mulf %388, %392 : vector<2x128xf32>
    %394 = arith.addf %390, %393 : vector<2x128xf32>
    %395 = math.tanh %394 : vector<2x128xf32>
    %cst_65 = arith.constant 1.000000e+00 : f32
    %396 = vector.broadcast %cst_65 : f32 to vector<2x128xf32>
    %397 = arith.subf %396, %389 : vector<2x128xf32>
    %398 = arith.mulf %397, %395 : vector<2x128xf32>
    %399 = arith.mulf %389, %349 : vector<2x128xf32>
    %400 = arith.addf %398, %399 : vector<2x128xf32>
    %401 = arith.truncf %400 : vector<2x128xf32> to vector<2x128xbf16>
    %cst_66 = arith.constant dense<0.000000e+00> : vector<2x384xf32>
    %402 = tpu.matmul %401, %2, %cst_66 {dimension_numbers = #tpu.dot_dimension_numbers<[1], [0], [0], [1], [0, 0, 1, 1], [], []>} : vector<2x128xbf16>, vector<128x384xbf16>, vector<2x384xf32> -> vector<2x384xf32>
    %403 = vector.broadcast %5 : vector<1x384xf32> to vector<2x384xf32>
    %404 = arith.addf %402, %403 : vector<2x384xf32>
    %405 = arith.truncf %376 : vector<2x128xf32> to vector<2x128xbf16>
    %cst_67 = arith.constant dense<0.000000e+00> : vector<2x384xf32>
    %406 = tpu.matmul %405, %3, %cst_67 {dimension_numbers = #tpu.dot_dimension_numbers<[1], [0], [0], [1], [0, 0, 1, 1], [], []>} : vector<2x128xbf16>, vector<128x384xbf16>, vector<2x384xf32> -> vector<2x384xf32>
    %407 = vector.extract_strided_slice %404 {offsets = [0, 0], sizes = [2, 256], strides = [1, 1]} : vector<2x384xf32> to vector<2x256xf32>
    %408 = vector.extract_strided_slice %406 {offsets = [0, 0], sizes = [2, 256], strides = [1, 1]} : vector<2x384xf32> to vector<2x256xf32>
    %409 = arith.addf %407, %408 : vector<2x256xf32>
    %410 = arith.negf %409 : vector<2x256xf32>
    %411 = math.exp %410 : vector<2x256xf32>
    %cst_68 = arith.constant 1.000000e+00 : f32
    %412 = vector.broadcast %cst_68 : f32 to vector<2x256xf32>
    %413 = arith.addf %412, %411 : vector<2x256xf32>
    %414 = arith.divf %412, %413 : vector<2x256xf32>
    %415 = vector.extract_strided_slice %414 {offsets = [0, 0], sizes = [2, 128], strides = [1, 1]} : vector<2x256xf32> to vector<2x128xf32>
    %416 = vector.extract_strided_slice %414 {offsets = [0, 128], sizes = [2, 128], strides = [1, 1]} : vector<2x256xf32> to vector<2x128xf32>
    %417 = vector.extract_strided_slice %404 {offsets = [0, 256], sizes = [2, 128], strides = [1, 1]} : vector<2x384xf32> to vector<2x128xf32>
    %418 = vector.extract_strided_slice %406 {offsets = [0, 256], sizes = [2, 128], strides = [1, 1]} : vector<2x384xf32> to vector<2x128xf32>
    %419 = arith.addf %418, %11 : vector<2x128xf32>
    %420 = arith.mulf %415, %419 : vector<2x128xf32>
    %421 = arith.addf %417, %420 : vector<2x128xf32>
    %422 = math.tanh %421 : vector<2x128xf32>
    %cst_69 = arith.constant 1.000000e+00 : f32
    %423 = vector.broadcast %cst_69 : f32 to vector<2x128xf32>
    %424 = arith.subf %423, %416 : vector<2x128xf32>
    %425 = arith.mulf %424, %422 : vector<2x128xf32>
    %426 = arith.mulf %416, %376 : vector<2x128xf32>
    %427 = arith.addf %425, %426 : vector<2x128xf32>
    %428 = vector.broadcast %12 : vector<1x128xf32> to vector<2x128xf32>
    %429 = arith.mulf %427, %428 : vector<2x128xf32>
    %cst_70 = arith.constant dense<0.000000e+00> : vector<2xf32>
    %430 = vector.multi_reduction <add>, %429, %cst_70 [1] : vector<2x128xf32> to vector<2xf32>
    %431 = vector.shape_cast %430 : vector<2xf32> to vector<2x1xf32>
    %432 = vector.broadcast %13 : vector<1x1xf32> to vector<2x1xf32>
    %433 = arith.addf %431, %432 : vector<2x1xf32>
    %c0_71 = arith.constant 0 : index
    %c0_72 = arith.constant 0 : index
    %434 = vector.load %arg3[%c0_71, %c0_72] : memref<2x1xf32, #tpu.memory_space<vmem>>, vector<2x1xf32>
    tpu.vector_store %arg3[%c0_71, %c0_72], %433 {strides = array<i32>} : memref<2x1xf32, #tpu.memory_space<vmem>>, vector<2x1xf32>,
    return
  }
}

</mosaic_0001>

<llo_original>
// kernel: gru_model_forward.1
$region0: #{gru_model_forward.1}
  #allocation0 [shape = 'u32[]', space=smem, size = 0x4, offset = 0x4, fixed_abs, tag = 'smem constant byte address 0x4 - core index']
  #allocation1 [shape = 'u32[144,128]{1,0:T(1,128)}', space=vmem, size = 0x12000, scoped, tag = 'internal scratch']
  %s0 = inlined_call_operand.vmem [shape: f32[16,8], index: 0, kind: input, shape index: {}]
  %s1 = inlined_call_operand.hbm [shape: bf16[392,384], index: 1, kind: input, shape index: {}]
  %s2 = inlined_call_operand.vmem [shape: f32[8,384], index: 2, kind: input, shape index: {}]
  %s3 = inlined_call_operand.vmem [shape: f32[2,1], index: 3, kind: output, shape index: {}]
  %s4 = sld [smem:[#allocation0]]
  $region26: #{gru_model_forward.1} parent=0
    _
  %s6 = ssub.s32 1, %s4
  %s7 = scalar_select 0, %s6, %s4
  $region1: #{gru_model_forward.1} parent=0
    #allocation2 [shape = 'u8[301056]{0}', space=vmem, size = 0x49800, scoped, tag = 'input window, operand 1, single buffered']
    #allocation3 [shape = 's32[1]{0}', space=sflag, size = 0x4, scoped, tag = 'scoped memory for gru_model_forward.1']
    %8 = vsyncpa [#allocation3], 0
    // Predicated region
    $region2: #{gru_model_forward.1} parent=1 // pred_check
      _
    $region3: #{gru_model_forward.1} parent=1 // pred_check_branch
      %10 = sbr.rel (0) target = $region5
    $region4: #{gru_model_forward.1} parent=1 // pred_region
      _
    $region5: #{gru_model_forward.1} parent=1 // pred_fallthru
      _
    // Predicated region
    $region6: #{gru_model_forward.1} parent=1 // pred_check
      _
    $region7: #{gru_model_forward.1} parent=1 // pred_check_branch
      %12 = sbr.rel (0) target = $region9
    $region8: #{gru_model_forward.1} parent=1 // pred_region
      %s14 = ssub.s32 9408, 9408
      %15 = vsyncadd [#allocation3], %s14
      %s16 = sshll.u32 [#allocation2], 4
      %s17 = int_to_ptr.vmem [resolvable:$true] %s16
      %22 = dma.hbm_to_vmem [thread:$0]  %s1, 9408, %s17, [#allocation3], 192, 192, 12
    $region9: #{gru_model_forward.1} parent=1 // pred_fallthru
      _
    // Predicated region
    $region10: #{gru_model_forward.1} parent=1 // pred_check
      _
    $region11: #{gru_model_forward.1} parent=1 // pred_check_branch
      %24 = sbr.rel (0) target = $region13
    $region12: #{gru_model_forward.1} parent=1 // pred_region
      _
    $region13: #{gru_model_forward.1} parent=1 // pred_fallthru
      _
    // Predicated region
    $region14: #{gru_model_forward.1} parent=1 // pred_check
      _
    $region15: #{gru_model_forward.1} parent=1 // pred_check_branch
      %26 = sbr.rel (0) target = $region17
    $region16: #{gru_model_forward.1} parent=1 // pred_region
      %27 = dma.done [#allocation3], 9408
    $region17: #{gru_model_forward.1} parent=1 // pred_fallthru
      _
    %v29 = vld [vmem:[#allocation2] sm:$0xff]
    %v30 = vld [vmem:[#allocation2 + $0x8] sm:$0xf]
    %v31 = vld [vmem:[#allocation2 + $0xc] sm:$0xff]
    %v32 = vld [vmem:[#allocation2 + $0x14] sm:$0xf]
    %v33 = vld [vmem:[#allocation2 + $0x18] sm:$0xff]
    %v34 = vld [vmem:[#allocation2 + $0x20] sm:$0xf]
    %v35 = vld [vmem:[#allocation2 + $0x24] sm:$0xff]
    %v36 = vld [vmem:[#allocation2 + $0x2c] sm:$0xf]
    %v37 = vld [vmem:[#allocation2 + $0x30] sm:$0xff]
    %v38 = vld [vmem:[#allocation2 + $0x38] sm:$0xf]
    %v39 = vld [vmem:[#allocation2 + $0x3c] sm:$0xff]
    %v40 = vld [vmem:[#allocation2 + $0x44] sm:$0xf]
    %v41 = vld [vmem:[#allocation2 + $0x48] sm:$0xff]
    %v42 = vld [vmem:[#allocation2 + $0x50] sm:$0xf]
    %v43 = vld [vmem:[#allocation2 + $0x54] sm:$0xff]
    %v44 = vld [vmem:[#allocation2 + $0x5c] sm:$0xf]
    %v45 = vld [vmem:[#allocation2 + $0x60] sm:$0xff]
    %v46 = vld [vmem:[#allocation2 + $0x68] sm:$0xf]
    %v47 = vld [vmem:[#allocation2 + $0x6c] sm:$0xff]
    %v48 = vld [vmem:[#allocation2 + $0x74] sm:$0xf]
    %v49 = vld [vmem:[#allocation2 + $0x78] sm:$0xff]
    %v50 = vld [vmem:[#allocation2 + $0x80] sm:$0xf]
    %v51 = vld [vmem:[#allocation2 + $0x84] sm:$0xff]
    %v52 = vld [vmem:[#allocation2 + $0x8c] sm:$0xf]
    %v53 = vld [vmem:[#allocation2 + $0x90] sm:$0xff]
    %v54 = vld [vmem:[#allocation2 + $0x98] sm:$0xf]
    %v55 = vld [vmem:[#allocation2 + $0x9c] sm:$0xff]
    %v56 = vld [vmem:[#allocation2 + $0xa4] sm:$0xf]
    %v57 = vld [vmem:[#allocation2 + $0xa8] sm:$0xff]
    %v58 = vld [vmem:[#allocation2 + $0xb0] sm:$0xf]
    %v59 = vld [vmem:[#allocation2 + $0xb4] sm:$0xff]
    %v60 = vld [vmem:[#allocation2 + $0xbc] sm:$0xf]
    %v61 = vld [vmem:[#allocation2 + $0xc0] sm:$0xff]
    %v62 = vld [vmem:[#allocation2 + $0xc8] sm:$0xf]
    %v63 = vld [vmem:[#allocation2 + $0xcc] sm:$0xff]
    %v64 = vld [vmem:[#allocation2 + $0xd4] sm:$0xf]
    %v65 = vld [vmem:[#allocation2 + $0xd8] sm:$0xff]
    %v66 = vld [vmem:[#allocation2 + $0xe0] sm:$0xf]
    %v67 = vld [vmem:[#allocation2 + $0xe4] sm:$0xff]
    %v68 = vld [vmem:[#allocation2 + $0xec] sm:$0xf]
    %v69 = vld [vmem:[#allocation2 + $0xf0] sm:$0xff]
    %v70 = vld [vmem:[#allocation2 + $0xf8] sm:$0xf]
    %v71 = vld [vmem:[#allocation2 + $0xfc] sm:$0xff]
    %v72 = vld [vmem:[#allocation2 + $0x104] sm:$0xf]
    %v73 = vld [vmem:[#allocation2 + $0x108] sm:$0xff]
    %v74 = vld [vmem:[#allocation2 + $0x110] sm:$0xf]
    %v75 = vld [vmem:[#allocation2 + $0x114] sm:$0xff]
    %v76 = vld [vmem:[#allocation2 + $0x11c] sm:$0xf]
    %v77 = vld [vmem:[#allocation2 + $0x120] sm:$0xff]
    %v78 = vld [vmem:[#allocation2 + $0x128] sm:$0xf]
    %v79 = vld [vmem:[#allocation2 + $0x12c] sm:$0xff]
    %v80 = vld [vmem:[#allocation2 + $0x134] sm:$0xf]
    %v81 = vld [vmem:[#allocation2 + $0x138] sm:$0xff]
    %v82 = vld [vmem:[#allocation2 + $0x140] sm:$0xf]
    %v83 = vld [vmem:[#allocation2 + $0x144] sm:$0xff]
    %v84 = vld [vmem:[#allocation2 + $0x14c] sm:$0xf]
    %v85 = vld [vmem:[#allocation2 + $0x150] sm:$0xff]
    %v86 = vld [vmem:[#allocation2 + $0x158] sm:$0xf]
    %v87 = vld [vmem:[#allocation2 + $0x15c] sm:$0xff]
    %v88 = vld [vmem:[#allocation2 + $0x164] sm:$0xf]
    %v89 = vld [vmem:[#allocation2 + $0x168] sm:$0xff]
    %v90 = vld [vmem:[#allocation2 + $0x170] sm:$0xf]
    %v91 = vld [vmem:[#allocation2 + $0x174] sm:$0xff]
    %v92 = vld [vmem:[#allocation2 + $0x17c] sm:$0xf]
    %v93 = vld [vmem:[#allocation2 + $0x180] sm:$0xff]
    %v94 = vld [vmem:[#allocation2 + $0x188] sm:$0xf]
    %v95 = vld [vmem:[#allocation2 + $0x18c] sm:$0xff]
    %v96 = vld [vmem:[#allocation2 + $0x194] sm:$0xf]
    %v97 = vld [vmem:[#allocation2 + $0x198] sm:$0xff]
    %v98 = vld [vmem:[#allocation2 + $0x1a0] sm:$0xf]
    %v99 = vld [vmem:[#allocation2 + $0x1a4] sm:$0xff]
    %v100 = vld [vmem:[#allocation2 + $0x1ac] sm:$0xf]
    %v101 = vld [vmem:[#allocation2 + $0x1b0] sm:$0xff]
    %v102 = vld [vmem:[#allocation2 + $0x1b8] sm:$0xf]
    %v103 = vld [vmem:[#allocation2 + $0x1bc] sm:$0xff]
    %v104 = vld [vmem:[#allocation2 + $0x1c4] sm:$0xf]
    %v105 = vld [vmem:[#allocation2 + $0x1c8] sm:$0xff]
    %v106 = vld [vmem:[#allocation2 + $0x1d0] sm:$0xf]
    %v107 = vld [vmem:[#allocation2 + $0x1d4] sm:$0xff]
    %v108 = vld [vmem:[#allocation2 + $0x1dc] sm:$0xf]
    %v109 = vld [vmem:[#allocation2 + $0x1e0] sm:$0xff]
    %v110 = vld [vmem:[#allocation2 + $0x1e8] sm:$0xf]
    %v111 = vld [vmem:[#allocation2 + $0x1ec] sm:$0xff]
    %v112 = vld [vmem:[#allocation2 + $0x1f4] sm:$0xf]
    %v113 = vld [vmem:[#allocation2 + $0x1f8] sm:$0xff]
    %v114 = vld [vmem:[#allocation2 + $0x200] sm:$0xf]
    %v115 = vld [vmem:[#allocation2 + $0x204] sm:$0xff]
    %v116 = vld [vmem:[#allocation2 + $0x20c] sm:$0xf]
    %v117 = vld [vmem:[#allocation2 + $0x210] sm:$0xff]
    %v118 = vld [vmem:[#allocation2 + $0x218] sm:$0xf]
    %v119 = vld [vmem:[#allocation2 + $0x21c] sm:$0xff]
    %v120 = vld [vmem:[#allocation2 + $0x224] sm:$0xf]
    %v121 = vld [vmem:[#allocation2 + $0x228] sm:$0xff]
    %v122 = vld [vmem:[#allocation2 + $0x230] sm:$0xf]
    %v123 = vld [vmem:[#allocation2 + $0x234] sm:$0xff]
    %v124 = vld [vmem:[#allocation2 + $0x23c] sm:$0xf]
    %v125 = vld [vmem:[#allocation2 + $0x240] sm:$0xff]
    %v126 = vld [vmem:[#allocation2 + $0x248] sm:$0xf]
    %v127 = vld [vmem:[%s2] ss:$8 sm:$0x7]
    %s128 = scalar_lea.vmem %s2, 1
    %v129 = vld [vmem:[%s128] ss:$8 sm:$0x7]
    %v130 = vld [vmem:[%s2 + $0x2] ss:$0 sm:$0xff]
    %v131 = vld [vmem:[%s2 + $0xa] ss:$0 sm:$0xff]
    %v132 = vld [vmem:[%s2 + $0x12] ss:$0 sm:$0xff]
    %v133 = vld [vmem:[%s2 + $0x3] ss:$0 sm:$0xff]
    %v134 = vld [vmem:[%s0] sm:$0xff]
    %v135 = vld [vmem:[%s0 + $0x8] sm:$0xff]
    %v136 = vpack.c.bf16 %v135, %v134
    %v138 = vlaneseq
    %v139 = vshrl.u32 %v138, 7
    %v140 = vsub.s32 0, %v139
    %v141 = vrot.slane %v127, %v140
    %v142 = vlaneseq
    %v143 = vshrl.u32 %v142, 7
    %v144 = vsub.s32 1, %v143
    %v145 = vrot.slane %v127, %v144
    %v146 = vlaneseq
    %v147 = vshrl.u32 %v146, 7
    %v148 = vsub.s32 2, %v147
    %v149 = vrot.slane %v127, %v148
    %v155 = vunpack.c.l.b16 %v29
    %v156 = vunpack.c.h.b16 %v29
    %v157 = vunpack.c.l.b16 %v30
    %v158 = vpack.c.b16 %v155, %v155
    %v159 = vpack.c.b16 %v156, %v156
    %v160 = vpack.c.b16 %v157, %v157
    %vm161 = vcmask 64512
    %v163 = vsel %vm161, %v136, 0
    %vm165 = vcmask 1043456
    %v167 = vsel %vm165, %v158, 0
    %v170 = vsel %vm165, %v159, 0
    %v173 = vsel %vm165, %v160, 0
    %175 = vmatprep.subr.bf16.mxu0 %v170
    %176 = vmatpush1.bf16.msra.mxu0 %v167
    %177 = vmatprep.subr.bf16.mxu0 0
    %178 = vmatpush1.bf16.msra.mxu0 0
    %179 = vmatprep.subr.bf16.mxu0 0
    %180 = vmatpush1.bf16.msra.mxu0 0
    %181 = vmatprep.subr.bf16.mxu0 0
    %182 = vmatpush1.bf16.msra.mxu0 0
    %183 = vmatprep.subr.bf16.mxu0 0
    %184 = vmatpush1.bf16.msra.mxu0 0
    %185 = vmatprep.subr.bf16.mxu0 0
    %186 = vmatpush1.bf16.msra.mxu0 0
    %187 = vmatprep.subr.bf16.mxu0 0
    %188 = vmatpush1.bf16.msra.mxu0 0
    %189 = vmatprep.subr.bf16.mxu0 0
    %190 = vmatpush1.bf16.msra.mxu0 0
    %191 = vmatprep.subr.bf16.mxu0 0
    %192 = vmatpush1.bf16.msra.mxu0 0
    %193 = vmatprep.subr.bf16.mxu0 0
    %194 = vmatpush1.bf16.msra.mxu0 0
    %195 = vmatprep.subr.bf16.mxu0 0
    %196 = vmatpush1.bf16.msra.mxu0 0
    %197 = vmatprep.subr.bf16.mxu0 0
    %198 = vmatpush1.bf16.msra.mxu0 0
    %199 = vmatprep.subr.bf16.mxu0 0
    %200 = vmatpush1.bf16.msra.mxu0 0
    %201 = vmatprep.subr.bf16.mxu0 0
    %202 = vmatpush1.bf16.msra.mxu0 0
    %203 = vmatprep.subr.bf16.mxu0 0
    %204 = vmatpush1.bf16.msra.mxu0 0
    %205 = vmatprep.subr.bf16.mxu0 0
    %206 = vmatpush1.bf16.msra.mxu0 0
    %207 = vmatprep.mubr.bf16.mxu0 0
    %208 = vmatmul.mubr.bf16.gmra.mrb[0].mxu0 %v163
    %v209 = vpop.f32.mrb[0].mxu0
    %v210 = vadd.f32 %v141, %v209
    %v211 = vpop.f32.mrb[0].mxu0
    %v212 = vadd.f32 %v145, %v211
    %v213 = vpop.f32.mrb[0].mxu0
    %v214 = vadd.f32 %v141, %v213
    %v215 = vpop.f32.mrb[0].mxu0
    %v216 = vadd.f32 %v145, %v215
    %217 = vdwg.mxu0
    %218 = vmatprep.subr.bf16.mxu0 0
    %219 = vmatpush1.bf16.msra.mxu0 %v173
    %220 = vmatprep.subr.bf16.mxu0 0
    %221 = vmatpush1.bf16.msra.mxu0 0
    %222 = vmatprep.subr.bf16.mxu0 0
    %223 = vmatpush1.bf16.msra.mxu0 0
    %224 = vmatprep.subr.bf16.mxu0 0
    %225 = vmatpush1.bf16.msra.mxu0 0
    %226 = vmatprep.subr.bf16.mxu0 0
    %227 = vmatpush1.bf16.msra.mxu0 0
    %228 = vmatprep.subr.bf16.mxu0 0
    %229 = vmatpush1.bf16.msra.mxu0 0
    %230 = vmatprep.subr.bf16.mxu0 0
    %231 = vmatpush1.bf16.msra.mxu0 0
    %232 = vmatprep.subr.bf16.mxu0 0
    %233 = vmatpush1.bf16.msra.mxu0 0
    %234 = vmatprep.subr.bf16.mxu0 0
    %235 = vmatpush1.bf16.msra.mxu0 0
    %236 = vmatprep.subr.bf16.mxu0 0
    %237 = vmatpush1.bf16.msra.mxu0 0
    %238 = vmatprep.subr.bf16.mxu0 0
    %239 = vmatpush1.bf16.msra.mxu0 0
    %240 = vmatprep.subr.bf16.mxu0 0
    %241 = vmatpush1.bf16.msra.mxu0 0
    %242 = vmatprep.subr.bf16.mxu0 0
    %243 = vmatpush1.bf16.msra.mxu0 0
    %244 = vmatprep.subr.bf16.mxu0 0
    %245 = vmatpush1.bf16.msra.mxu0 0
    %246 = vmatprep.subr.bf16.mxu0 0
    %247 = vmatpush1.bf16.msra.mxu0 0
    %248 = vmatprep.subr.bf16.mxu0 0
    %249 = vmatpush1.bf16.msra.mxu0 0
    %250 = vmatprep.mubr.bf16.mxu0 0
    %251 = vmatmul.mubr.bf16.gmra.mrb[0].mxu0 %v163
    %v252 = vpop.f32.mrb[0].mxu0
    %v253 = vadd.f32 %v149, %v252
    %v254 = vpop.f32.mrb[0].mxu0
    %v255 = vpop.f32.mrb[0].mxu0
    %v256 = vadd.f32 %v149, %v255
    %v257 = vpop.f32.mrb[0].mxu0
    %258 = vdwg.mxu0
    %v291 = vunpack.c.l.b16 %v31
    %v292 = vunpack.c.h.b16 %v31
    %v293 = vunpack.c.l.b16 %v32
    %v294 = vunpack.c.l.b16 %v33
    %v295 = vunpack.c.h.b16 %v33
    %v296 = vunpack.c.l.b16 %v34
    %v297 = vunpack.c.l.b16 %v35
    %v298 = vunpack.c.h.b16 %v35
    %v299 = vunpack.c.l.b16 %v36
    %v300 = vunpack.c.l.b16 %v37
    %v301 = vunpack.c.h.b16 %v37
    %v302 = vunpack.c.l.b16 %v38
    %v303 = vunpack.c.l.b16 %v39
    %v304 = vunpack.c.h.b16 %v39
    %v305 = vunpack.c.l.b16 %v40
    %v306 = vunpack.c.l.b16 %v41
    %v307 = vunpack.c.h.b16 %v41
    %v308 = vunpack.c.l.b16 %v42
    %v309 = vunpack.c.l.b16 %v43
    %v310 = vunpack.c.h.b16 %v43
    %v311 = vunpack.c.l.b16 %v44
    %v312 = vunpack.c.l.b16 %v45
    %v313 = vunpack.c.h.b16 %v45
    %v314 = vunpack.c.l.b16 %v46
    %v315 = vunpack.c.l.b16 %v47
    %v316 = vunpack.c.h.b16 %v47
    %v317 = vunpack.c.l.b16 %v48
    %v318 = vunpack.c.l.b16 %v49
    %v319 = vunpack.c.h.b16 %v49
    %v320 = vunpack.c.l.b16 %v50
    %v321 = vunpack.c.l.b16 %v51
    %v322 = vunpack.c.h.b16 %v51
    %v323 = vunpack.c.l.b16 %v52
    %v324 = vunpack.c.l.b16 %v53
    %v325 = vunpack.c.h.b16 %v53
    %v326 = vunpack.c.l.b16 %v54
    %v327 = vunpack.c.l.b16 %v55
    %v328 = vunpack.c.h.b16 %v55
    %v329 = vunpack.c.l.b16 %v56
    %v330 = vunpack.c.l.b16 %v57
    %v331 = vunpack.c.h.b16 %v57
    %v332 = vunpack.c.l.b16 %v58
    %v333 = vunpack.c.l.b16 %v59
    %v334 = vunpack.c.h.b16 %v59
    %v335 = vunpack.c.l.b16 %v60
    %v336 = vunpack.c.l.b16 %v61
    %v337 = vunpack.c.h.b16 %v61
    %v338 = vunpack.c.l.b16 %v62
    %v339 = vpack.c.b16 %v294, %v291
    %v340 = vpack.c.b16 %v295, %v292
    %v341 = vpack.c.b16 %v296, %v293
    %v342 = vpack.c.b16 %v300, %v297
    %v343 = vpack.c.b16 %v301, %v298
    %v344 = vpack.c.b16 %v302, %v299
    %v345 = vpack.c.b16 %v306, %v303
    %v346 = vpack.c.b16 %v307, %v304
    %v347 = vpack.c.b16 %v308, %v305
    %v348 = vpack.c.b16 %v312, %v309
    %v349 = vpack.c.b16 %v313, %v310
    %v350 = vpack.c.b16 %v314, %v311
    %v351 = vpack.c.b16 %v318, %v315
    %v352 = vpack.c.b16 %v319, %v316
    %v353 = vpack.c.b16 %v320, %v317
    %v354 = vpack.c.b16 %v324, %v321
    %v355 = vpack.c.b16 %v325, %v322
    %v356 = vpack.c.b16 %v326, %v323
    %v357 = vpack.c.b16 %v330, %v327
    %v358 = vpack.c.b16 %v331, %v328
    %v359 = vpack.c.b16 %v332, %v329
    %v360 = vpack.c.b16 %v336, %v333
    %v361 = vpack.c.b16 %v337, %v334
    %v362 = vpack.c.b16 %v338, %v335
    %387 = vmatprep.subr.bf16.mxu0 %v340
    %388 = vmatpush1.bf16.msra.mxu0 %v339
    %389 = vmatprep.subr.bf16.mxu0 %v343
    %390 = vmatpush1.bf16.msra.mxu0 %v342
    %391 = vmatprep.subr.bf16.mxu0 %v346
    %392 = vmatpush1.bf16.msra.mxu0 %v345
    %393 = vmatprep.subr.bf16.mxu0 %v349
    %394 = vmatpush1.bf16.msra.mxu0 %v348
    %395 = vmatprep.subr.bf16.mxu0 %v352
    %396 = vmatpush1.bf16.msra.mxu0 %v351
    %397 = vmatprep.subr.bf16.mxu0 %v355
    %398 = vmatpush1.bf16.msra.mxu0 %v354
    %399 = vmatprep.subr.bf16.mxu0 %v358
    %400 = vmatpush1.bf16.msra.mxu0 %v357
    %401 = vmatprep.subr.bf16.mxu0 %v361
    %402 = vmatpush1.bf16.msra.mxu0 %v360
    %403 = vmatprep.subr.bf16.mxu0 0
    %404 = vmatpush1.bf16.msra.mxu0 0
    %405 = vmatprep.subr.bf16.mxu0 0
    %406 = vmatpush1.bf16.msra.mxu0 0
    %407 = vmatprep.subr.bf16.mxu0 0
    %408 = vmatpush1.bf16.msra.mxu0 0
    %409 = vmatprep.subr.bf16.mxu0 0
    %410 = vmatpush1.bf16.msra.mxu0 0
    %411 = vmatprep.subr.bf16.mxu0 0
    %412 = vmatpush1.bf16.msra.mxu0 0
    %413 = vmatprep.subr.bf16.mxu0 0
    %414 = vmatpush1.bf16.msra.mxu0 0
    %415 = vmatprep.subr.bf16.mxu0 0
    %416 = vmatpush1.bf16.msra.mxu0 0
    %417 = vmatprep.subr.bf16.mxu0 0
    %418 = vmatpush1.bf16.msra.mxu0 0
    %419 = vmatprep.mubr.bf16.mxu0 0
    %420 = vmatmul.mubr.bf16.gmra.mrb[0].mxu0 0
    %v421 = vpop.f32.mrb[0].mxu0
    %v422 = vadd.f32 0.0, %v421
    %v423 = vpop.f32.mrb[0].mxu0
    %v424 = vadd.f32 0.0, %v423
    %v425 = vpop.f32.mrb[0].mxu0
    %v426 = vpop.f32.mrb[0].mxu0
    %427 = vdwg.mxu0
    %428 = vmatprep.subr.bf16.mxu0 0
    %429 = vmatpush1.bf16.msra.mxu0 %v341
    %430 = vmatprep.subr.bf16.mxu0 0
    %431 = vmatpush1.bf16.msra.mxu0 %v344
    %432 = vmatprep.subr.bf16.mxu0 0
    %433 = vmatpush1.bf16.msra.mxu0 %v347
    %434 = vmatprep.subr.bf16.mxu0 0
    %435 = vmatpush1.bf16.msra.mxu0 %v350
    %436 = vmatprep.subr.bf16.mxu0 0
    %437 = vmatpush1.bf16.msra.mxu0 %v353
    %438 = vmatprep.subr.bf16.mxu0 0
    %439 = vmatpush1.bf16.msra.mxu0 %v356
    %440 = vmatprep.subr.bf16.mxu0 0
    %441 = vmatpush1.bf16.msra.mxu0 %v359
    %442 = vmatprep.subr.bf16.mxu0 0
    %443 = vmatpush1.bf16.msra.mxu0 %v362
    %444 = vmatprep.subr.bf16.mxu0 0
    %445 = vmatpush1.bf16.msra.mxu0 0
    %446 = vmatprep.subr.bf16.mxu0 0
    %447 = vmatpush1.bf16.msra.mxu0 0
    %448 = vmatprep.subr.bf16.mxu0 0
    %449 = vmatpush1.bf16.msra.mxu0 0
    %450 = vmatprep.subr.bf16.mxu0 0
    %451 = vmatpush1.bf16.msra.mxu0 0
    %452 = vmatprep.subr.bf16.mxu0 0
    %453 = vmatpush1.bf16.msra.mxu0 0
    %454 = vmatprep.subr.bf16.mxu0 0
    %455 = vmatpush1.bf16.msra.mxu0 0
    %456 = vmatprep.subr.bf16.mxu0 0
    %457 = vmatpush1.bf16.msra.mxu0 0
    %458 = vmatprep.subr.bf16.mxu0 0
    %459 = vmatpush1.bf16.msra.mxu0 0
    %460 = vmatprep.mubr.bf16.mxu0 0
    %461 = vmatmul.mubr.bf16.gmra.mrb[0].mxu0 0
    %v462 = vpop.f32.mrb[0].mxu0
    %v463 = vadd.f32 0.0, %v462
    %v464 = vpop.f32.mrb[0].mxu0
    %v465 = vpop.f32.mrb[0].mxu0
    %v466 = vpop.f32.mrb[0].mxu0
    %467 = vdwg.mxu0
    %v468 = vadd.f32 %v210, %v422
    %v469 = vadd.f32 %v212, %v424
    %v470 = vxor.u32 %v468, 2147483648
    %v471 = vxor.u32 %v469, 2147483648
    %v472 = vmul.f32 %v470, 1.442695
    %v473 = vpow.pop %v472
    %v474 = vmul.f32 %v471, 1.442695
    %v475 = vpow.pop %v474
    %v476 = vadd.f32 %v473, 1.0
    %v477 = vadd.f32 %v475, 1.0
    %v478 = vrcp.pop %v476
    %v479 = vmul.f32 1.0, %v478
    %v480 = vrcp.pop %v477
    %v481 = vmul.f32 1.0, %v480
    %v482 = vadd.f32 %v463, %v130
    %v483 = vmul.f32 %v479, %v482
    %v484 = vadd.f32 %v253, %v483
    %v485 = vtanh.pop %v484
    %v486 = vsub.f32 1.0, %v481
    %v487 = vmul.f32 %v486, %v485
    %v488 = vmul.f32 %v481, 0.0
    %v489 = vadd.f32 %v487, %v488
    %v490 = vpack.c.bf16 %v489, %v489
    %v492 = vlaneseq
    %v493 = vshrl.u32 %v492, 7
    %v494 = vsub.s32 0, %v493
    %v495 = vrot.slane %v129, %v494
    %v496 = vlaneseq
    %v497 = vshrl.u32 %v496, 7
    %v498 = vsub.s32 1, %v497
    %v499 = vrot.slane %v129, %v498
    %v500 = vlaneseq
    %v501 = vshrl.u32 %v500, 7
    %v502 = vsub.s32 2, %v501
    %v503 = vrot.slane %v129, %v502
    %v539 = vunpack.c.l.b16 %v63
    %v540 = vunpack.c.h.b16 %v63
    %v541 = vunpack.c.l.b16 %v64
    %v542 = vunpack.c.l.b16 %v65
    %v543 = vunpack.c.h.b16 %v65
    %v544 = vunpack.c.l.b16 %v66
    %v545 = vunpack.c.l.b16 %v67
    %v546 = vunpack.c.h.b16 %v67
    %v547 = vunpack.c.l.b16 %v68
    %v548 = vunpack.c.l.b16 %v69
    %v549 = vunpack.c.h.b16 %v69
    %v550 = vunpack.c.l.b16 %v70
    %v551 = vunpack.c.l.b16 %v71
    %v552 = vunpack.c.h.b16 %v71
    %v553 = vunpack.c.l.b16 %v72
    %v554 = vunpack.c.l.b16 %v73
    %v555 = vunpack.c.h.b16 %v73
    %v556 = vunpack.c.l.b16 %v74
    %v557 = vunpack.c.l.b16 %v75
    %v558 = vunpack.c.h.b16 %v75
    %v559 = vunpack.c.l.b16 %v76
    %v560 = vunpack.c.l.b16 %v77
    %v561 = vunpack.c.h.b16 %v77
    %v562 = vunpack.c.l.b16 %v78
    %v563 = vunpack.c.l.b16 %v79
    %v564 = vunpack.c.h.b16 %v79
    %v565 = vunpack.c.l.b16 %v80
    %v566 = vunpack.c.l.b16 %v81
    %v567 = vunpack.c.h.b16 %v81
    %v568 = vunpack.c.l.b16 %v82
    %v569 = vunpack.c.l.b16 %v83
    %v570 = vunpack.c.h.b16 %v83
    %v571 = vunpack.c.l.b16 %v84
    %v572 = vunpack.c.l.b16 %v85
    %v573 = vunpack.c.h.b16 %v85
    %v574 = vunpack.c.l.b16 %v86
    %v575 = vunpack.c.l.b16 %v87
    %v576 = vunpack.c.h.b16 %v87
    %v577 = vunpack.c.l.b16 %v88
    %v578 = vunpack.c.l.b16 %v89
    %v579 = vunpack.c.h.b16 %v89
    %v580 = vunpack.c.l.b16 %v90
    %v581 = vunpack.c.l.b16 %v91
    %v582 = vunpack.c.h.b16 %v91
    %v583 = vunpack.c.l.b16 %v92
    %v584 = vunpack.c.l.b16 %v93
    %v585 = vunpack.c.h.b16 %v93
    %v586 = vunpack.c.l.b16 %v94
    %v587 = vpack.c.b16 %v542, %v539
    %v588 = vpack.c.b16 %v543, %v540
    %v589 = vpack.c.b16 %v544, %v541
    %v590 = vpack.c.b16 %v548, %v545
    %v591 = vpack.c.b16 %v549, %v546
    %v592 = vpack.c.b16 %v550, %v547
    %v593 = vpack.c.b16 %v554, %v551
    %v594 = vpack.c.b16 %v555, %v552
    %v595 = vpack.c.b16 %v556, %v553
    %v596 = vpack.c.b16 %v560, %v557
    %v597 = vpack.c.b16 %v561, %v558
    %v598 = vpack.c.b16 %v562, %v559
    %v599 = vpack.c.b16 %v566, %v563
    %v600 = vpack.c.b16 %v567, %v564
    %v601 = vpack.c.b16 %v568, %v565
    %v602 = vpack.c.b16 %v572, %v569
    %v603 = vpack.c.b16 %v573, %v570
    %v604 = vpack.c.b16 %v574, %v571
    %v605 = vpack.c.b16 %v578, %v575
    %v606 = vpack.c.b16 %v579, %v576
    %v607 = vpack.c.b16 %v580, %v577
    %v608 = vpack.c.b16 %v584, %v581
    %v609 = vpack.c.b16 %v585, %v582
    %v610 = vpack.c.b16 %v586, %v583
    %635 = vmatprep.subr.bf16.mxu0 %v588
    %636 = vmatpush1.bf16.msra.mxu0 %v587
    %637 = vmatprep.subr.bf16.mxu0 %v591
    %638 = vmatpush1.bf16.msra.mxu0 %v590
    %639 = vmatprep.subr.bf16.mxu0 %v594
    %640 = vmatpush1.bf16.msra.mxu0 %v593
    %641 = vmatprep.subr.bf16.mxu0 %v597
    %642 = vmatpush1.bf16.msra.mxu0 %v596
    %643 = vmatprep.subr.bf16.mxu0 %v600
    %644 = vmatpush1.bf16.msra.mxu0 %v599
    %645 = vmatprep.subr.bf16.mxu0 %v603
    %646 = vmatpush1.bf16.msra.mxu0 %v602
    %647 = vmatprep.subr.bf16.mxu0 %v606
    %648 = vmatpush1.bf16.msra.mxu0 %v605
    %649 = vmatprep.subr.bf16.mxu0 %v609
    %650 = vmatpush1.bf16.msra.mxu0 %v608
    %651 = vmatprep.subr.bf16.mxu0 0
    %652 = vmatpush1.bf16.msra.mxu0 0
    %653 = vmatprep.subr.bf16.mxu0 0
    %654 = vmatpush1.bf16.msra.mxu0 0
    %655 = vmatprep.subr.bf16.mxu0 0
    %656 = vmatpush1.bf16.msra.mxu0 0
    %657 = vmatprep.subr.bf16.mxu0 0
    %658 = vmatpush1.bf16.msra.mxu0 0
    %659 = vmatprep.subr.bf16.mxu0 0
    %660 = vmatpush1.bf16.msra.mxu0 0
    %661 = vmatprep.subr.bf16.mxu0 0
    %662 = vmatpush1.bf16.msra.mxu0 0
    %663 = vmatprep.subr.bf16.mxu0 0
    %664 = vmatpush1.bf16.msra.mxu0 0
    %665 = vmatprep.subr.bf16.mxu0 0
    %666 = vmatpush1.bf16.msra.mxu0 0
    %667 = vmatprep.mubr.bf16.mxu0 0
    %668 = vmatmul.mubr.bf16.gmra.mrb[0].mxu0 %v490
    %v669 = vpop.f32.mrb[0].mxu0
    %v670 = vadd.f32 %v495, %v669
    %v671 = vpop.f32.mrb[0].mxu0
    %v672 = vadd.f32 %v499, %v671
    %v673 = vpop.f32.mrb[0].mxu0
    %v674 = vpop.f32.mrb[0].mxu0
    %675 = vdwg.mxu0
    %676 = vmatprep.subr.bf16.mxu0 0
    %677 = vmatpush1.bf16.msra.mxu0 %v589
    %678 = vmatprep.subr.bf16.mxu0 0
    %679 = vmatpush1.bf16.msra.mxu0 %v592
    %680 = vmatprep.subr.bf16.mxu0 0
    %681 = vmatpush1.bf16.msra.mxu0 %v595
    %682 = vmatprep.subr.bf16.mxu0 0
    %683 = vmatpush1.bf16.msra.mxu0 %v598
    %684 = vmatprep.subr.bf16.mxu0 0
    %685 = vmatpush1.bf16.msra.mxu0 %v601
    %686 = vmatprep.subr.bf16.mxu0 0
    %687 = vmatpush1.bf16.msra.mxu0 %v604
    %688 = vmatprep.subr.bf16.mxu0 0
    %689 = vmatpush1.bf16.msra.mxu0 %v607
    %690 = vmatprep.subr.bf16.mxu0 0
    %691 = vmatpush1.bf16.msra.mxu0 %v610
    %692 = vmatprep.subr.bf16.mxu0 0
    %693 = vmatpush1.bf16.msra.mxu0 0
    %694 = vmatprep.subr.bf16.mxu0 0
    %695 = vmatpush1.bf16.msra.mxu0 0
    %696 = vmatprep.subr.bf16.mxu0 0
    %697 = vmatpush1.bf16.msra.mxu0 0
    %698 = vmatprep.subr.bf16.mxu0 0
    %699 = vmatpush1.bf16.msra.mxu0 0
    %700 = vmatprep.subr.bf16.mxu0 0
    %701 = vmatpush1.bf16.msra.mxu0 0
    %702 = vmatprep.subr.bf16.mxu0 0
    %703 = vmatpush1.bf16.msra.mxu0 0
    %704 = vmatprep.subr.bf16.mxu0 0
    %705 = vmatpush1.bf16.msra.mxu0 0
    %706 = vmatprep.subr.bf16.mxu0 0
    %707 = vmatpush1.bf16.msra.mxu0 0
    %708 = vmatprep.mubr.bf16.mxu0 0
    %709 = vmatmul.mubr.bf16.gmra.mrb[0].mxu0 %v490
    %v710 = vpop.f32.mrb[0].mxu0
    %v711 = vadd.f32 %v503, %v710
    %v712 = vpop.f32.mrb[0].mxu0
    %v713 = vpop.f32.mrb[0].mxu0
    %v714 = vpop.f32.mrb[0].mxu0
    %715 = vdwg.mxu0
    %v748 = vunpack.c.l.b16 %v95
    %v749 = vunpack.c.h.b16 %v95
    %v750 = vunpack.c.l.b16 %v96
    %v751 = vunpack.c.l.b16 %v97
    %v752 = vunpack.c.h.b16 %v97
    %v753 = vunpack.c.l.b16 %v98
    %v754 = vunpack.c.l.b16 %v99
    %v755 = vunpack.c.h.b16 %v99
    %v756 = vunpack.c.l.b16 %v100
    %v757 = vunpack.c.l.b16 %v101
    %v758 = vunpack.c.h.b16 %v101
    %v759 = vunpack.c.l.b16 %v102
    %v760 = vunpack.c.l.b16 %v103
    %v761 = vunpack.c.h.b16 %v103
    %v762 = vunpack.c.l.b16 %v104
    %v763 = vunpack.c.l.b16 %v105
    %v764 = vunpack.c.h.b16 %v105
    %v765 = vunpack.c.l.b16 %v106
    %v766 = vunpack.c.l.b16 %v107
    %v767 = vunpack.c.h.b16 %v107
    %v768 = vunpack.c.l.b16 %v108
    %v769 = vunpack.c.l.b16 %v109
    %v770 = vunpack.c.h.b16 %v109
    %v771 = vunpack.c.l.b16 %v110
    %v772 = vunpack.c.l.b16 %v111
    %v773 = vunpack.c.h.b16 %v111
    %v774 = vunpack.c.l.b16 %v112
    %v775 = vunpack.c.l.b16 %v113
    %v776 = vunpack.c.h.b16 %v113
    %v777 = vunpack.c.l.b16 %v114
    %v778 = vunpack.c.l.b16 %v115
    %v779 = vunpack.c.h.b16 %v115
    %v780 = vunpack.c.l.b16 %v116
    %v781 = vunpack.c.l.b16 %v117
    %v782 = vunpack.c.h.b16 %v117
    %v783 = vunpack.c.l.b16 %v118
    %v784 = vunpack.c.l.b16 %v119
    %v785 = vunpack.c.h.b16 %v119
    %v786 = vunpack.c.l.b16 %v120
    %v787 = vunpack.c.l.b16 %v121
    %v788 = vunpack.c.h.b16 %v121
    %v789 = vunpack.c.l.b16 %v122
    %v790 = vunpack.c.l.b16 %v123
    %v791 = vunpack.c.h.b16 %v123
    %v792 = vunpack.c.l.b16 %v124
    %v793 = vunpack.c.l.b16 %v125
    %v794 = vunpack.c.h.b16 %v125
    %v795 = vunpack.c.l.b16 %v126
    %v796 = vpack.c.b16 %v751, %v748
    %v797 = vpack.c.b16 %v752, %v749
    %v798 = vpack.c.b16 %v753, %v750
    %v799 = vpack.c.b16 %v757, %v754
    %v800 = vpack.c.b16 %v758, %v755
    %v801 = vpack.c.b16 %v759, %v756
    %v802 = vpack.c.b16 %v763, %v760
    %v803 = vpack.c.b16 %v764, %v761
    %v804 = vpack.c.b16 %v765, %v762
    %v805 = vpack.c.b16 %v769, %v766
    %v806 = vpack.c.b16 %v770, %v767
    %v807 = vpack.c.b16 %v771, %v768
    %v808 = vpack.c.b16 %v775, %v772
    %v809 = vpack.c.b16 %v776, %v773
    %v810 = vpack.c.b16 %v777, %v774
    %v811 = vpack.c.b16 %v781, %v778
    %v812 = vpack.c.b16 %v782, %v779
    %v813 = vpack.c.b16 %v783, %v780
    %v814 = vpack.c.b16 %v787, %v784
    %v815 = vpack.c.b16 %v788, %v785
    %v816 = vpack.c.b16 %v789, %v786
    %v817 = vpack.c.b16 %v793, %v790
    %v818 = vpack.c.b16 %v794, %v791
    %v819 = vpack.c.b16 %v795, %v792
    %844 = vmatprep.subr.bf16.mxu0 %v797
    %845 = vmatpush1.bf16.msra.mxu0 %v796
    %846 = vmatprep.subr.bf16.mxu0 %v800
    %847 = vmatpush1.bf16.msra.mxu0 %v799
    %848 = vmatprep.subr.bf16.mxu0 %v803
    %849 = vmatpush1.bf16.msra.mxu0 %v802
    %850 = vmatprep.subr.bf16.mxu0 %v806
    %851 = vmatpush1.bf16.msra.mxu0 %v805
    %852 = vmatprep.subr.bf16.mxu0 %v809
    %853 = vmatpush1.bf16.msra.mxu0 %v808
    %854 = vmatprep.subr.bf16.mxu0 %v812
    %855 = vmatpush1.bf16.msra.mxu0 %v811
    %856 = vmatprep.subr.bf16.mxu0 %v815
    %857 = vmatpush1.bf16.msra.mxu0 %v814
    %858 = vmatprep.subr.bf16.mxu0 %v818
    %859 = vmatpush1.bf16.msra.mxu0 %v817
    %860 = vmatprep.subr.bf16.mxu0 0
    %861 = vmatpush1.bf16.msra.mxu0 0
    %862 = vmatprep.subr.bf16.mxu0 0
    %863 = vmatpush1.bf16.msra.mxu0 0
    %864 = vmatprep.subr.bf16.mxu0 0
    %865 = vmatpush1.bf16.msra.mxu0 0
    %866 = vmatprep.subr.bf16.mxu0 0
    %867 = vmatpush1.bf16.msra.mxu0 0
    %868 = vmatprep.subr.bf16.mxu0 0
    %869 = vmatpush1.bf16.msra.mxu0 0
    %870 = vmatprep.subr.bf16.mxu0 0
    %871 = vmatpush1.bf16.msra.mxu0 0
    %872 = vmatprep.subr.bf16.mxu0 0
    %873 = vmatpush1.bf16.msra.mxu0 0
    %874 = vmatprep.subr.bf16.mxu0 0
    %875 = vmatpush1.bf16.msra.mxu0 0
    %876 = vmatprep.mubr.bf16.mxu0 0
    %877 = vmatmul.mubr.bf16.gmra.mrb[0].mxu0 0
    %v878 = vpop.f32.mrb[0].mxu0
    %v879 = vadd.f32 0.0, %v878
    %v880 = vpop.f32.mrb[0].mxu0
    %v881 = vadd.f32 0.0, %v880
    %v882 = vpop.f32.mrb[0].mxu0
    %v883 = vpop.f32.mrb[0].mxu0
    %884 = vdwg.mxu0
    %885 = vmatprep.subr.bf16.mxu0 0
    %886 = vmatpush1.bf16.msra.mxu0 %v798
    %887 = vmatprep.subr.bf16.mxu0 0
    %888 = vmatpush1.bf16.msra.mxu0 %v801
    %889 = vmatprep.subr.bf16.mxu0 0
    %890 = vmatpush1.bf16.msra.mxu0 %v804
    %891 = vmatprep.subr.bf16.mxu0 0
    %892 = vmatpush1.bf16.msra.mxu0 %v807
    %893 = vmatprep.subr.bf16.mxu0 0
    %894 = vmatpush1.bf16.msra.mxu0 %v810
    %895 = vmatprep.subr.bf16.mxu0 0
    %896 = vmatpush1.bf16.msra.mxu0 %v813
    %897 = vmatprep.subr.bf16.mxu0 0
    %898 = vmatpush1.bf16.msra.mxu0 %v816
    %899 = vmatprep.subr.bf16.mxu0 0
    %900 = vmatpush1.bf16.msra.mxu0 %v819
    %901 = vmatprep.subr.bf16.mxu0 0
    %902 = vmatpush1.bf16.msra.mxu0 0
    %903 = vmatprep.subr.bf16.mxu0 0
    %904 = vmatpush1.bf16.msra.mxu0 0
    %905 = vmatprep.subr.bf16.mxu0 0
    %906 = vmatpush1.bf16.msra.mxu0 0
    %907 = vmatprep.subr.bf16.mxu0 0
    %908 = vmatpush1.bf16.msra.mxu0 0
    %909 = vmatprep.subr.bf16.mxu0 0
    %910 = vmatpush1.bf16.msra.mxu0 0
    %911 = vmatprep.subr.bf16.mxu0 0
    %912 = vmatpush1.bf16.msra.mxu0 0
    %913 = vmatprep.subr.bf16.mxu0 0
    %914 = vmatpush1.bf16.msra.mxu0 0
    %915 = vmatprep.subr.bf16.mxu0 0
    %916 = vmatpush1.bf16.msra.mxu0 0
    %917 = vmatprep.mubr.bf16.mxu0 0
    %918 = vmatmul.mubr.bf16.gmra.mrb[0].mxu0 0
    %v919 = vpop.f32.mrb[0].mxu0
    %v920 = vadd.f32 0.0, %v919
    %v921 = vpop.f32.mrb[0].mxu0
    %v922 = vpop.f32.mrb[0].mxu0
    %v923 = vpop.f32.mrb[0].mxu0
    %924 = vdwg.mxu0
    %v925 = vadd.f32 %v670, %v879
    %v926 = vadd.f32 %v672, %v881
    %v927 = vxor.u32 %v925, 2147483648
    %v928 = vxor.u32 %v926, 2147483648
    %v929 = vmul.f32 %v927, 1.442695
    %v930 = vpow.pop %v929
    %v931 = vmul.f32 %v928, 1.442695
    %v932 = vpow.pop %v931
    %v933 = vadd.f32 %v930, 1.0
    %v934 = vadd.f32 %v932, 1.0
    %v935 = vrcp.pop %v933
    %v936 = vmul.f32 1.0, %v935
    %v937 = vrcp.pop %v934
    %v938 = vmul.f32 1.0, %v937
    %v939 = vadd.f32 %v920, %v131
    %v940 = vmul.f32 %v936, %v939
    %v941 = vadd.f32 %v711, %v940
    %v942 = vtanh.pop %v941
    %v943 = vsub.f32 1.0, %v938
    %v944 = vmul.f32 %v943, %v942
    %v945 = vmul.f32 %v938, 0.0
    %v946 = vadd.f32 %v944, %v945
    %947 = vmatprep.subr.bf16.mxu0 %v340
    %948 = vmatpush1.bf16.msra.mxu0 %v339
    %949 = vmatprep.subr.bf16.mxu0 %v343
    %950 = vmatpush1.bf16.msra.mxu0 %v342
    %951 = vmatprep.subr.bf16.mxu0 %v346
    %952 = vmatpush1.bf16.msra.mxu0 %v345
    %953 = vmatprep.subr.bf16.mxu0 %v349
    %954 = vmatpush1.bf16.msra.mxu0 %v348
    %955 = vmatprep.subr.bf16.mxu0 %v352
    %956 = vmatpush1.bf16.msra.mxu0 %v351
    %957 = vmatprep.subr.bf16.mxu0 %v355
    %958 = vmatpush1.bf16.msra.mxu0 %v354
    %959 = vmatprep.subr.bf16.mxu0 %v358
    %960 = vmatpush1.bf16.msra.mxu0 %v357
    %961 = vmatprep.subr.bf16.mxu0 %v361
    %962 = vmatpush1.bf16.msra.mxu0 %v360
    %963 = vmatprep.subr.bf16.mxu0 0
    %964 = vmatpush1.bf16.msra.mxu0 0
    %965 = vmatprep.subr.bf16.mxu0 0
    %966 = vmatpush1.bf16.msra.mxu0 0
    %967 = vmatprep.subr.bf16.mxu0 0
    %968 = vmatpush1.bf16.msra.mxu0 0
    %969 = vmatprep.subr.bf16.mxu0 0
    %970 = vmatpush1.bf16.msra.mxu0 0
    %971 = vmatprep.subr.bf16.mxu0 0
    %972 = vmatpush1.bf16.msra.mxu0 0
    %973 = vmatprep.subr.bf16.mxu0 0
    %974 = vmatpush1.bf16.msra.mxu0 0
    %975 = vmatprep.subr.bf16.mxu0 0
    %976 = vmatpush1.bf16.msra.mxu0 0
    %977 = vmatprep.subr.bf16.mxu0 0
    %978 = vmatpush1.bf16.msra.mxu0 0
    %979 = vmatprep.mubr.bf16.mxu0 0
    %980 = vmatmul.mubr.bf16.gmra.mrb[0].mxu0 %v490
    %v981 = vpop.f32.mrb[0].mxu0
    %v982 = vadd.f32 0.0, %v981
    %v983 = vpop.f32.mrb[0].mxu0
    %v984 = vadd.f32 0.0, %v983
    %v985 = vpop.f32.mrb[0].mxu0
    %v986 = vpop.f32.mrb[0].mxu0
    %987 = vdwg.mxu0
    %988 = vmatprep.subr.bf16.mxu0 0
    %989 = vmatpush1.bf16.msra.mxu0 %v341
    %990 = vmatprep.subr.bf16.mxu0 0
    %991 = vmatpush1.bf16.msra.mxu0 %v344
    %992 = vmatprep.subr.bf16.mxu0 0
    %993 = vmatpush1.bf16.msra.mxu0 %v347
    %994 = vmatprep.subr.bf16.mxu0 0
    %995 = vmatpush1.bf16.msra.mxu0 %v350
    %996 = vmatprep.subr.bf16.mxu0 0
    %997 = vmatpush1.bf16.msra.mxu0 %v353
    %998 = vmatprep.subr.bf16.mxu0 0
    %999 = vmatpush1.bf16.msra.mxu0 %v356
    %1000 = vmatprep.subr.bf16.mxu0 0
    %1001 = vmatpush1.bf16.msra.mxu0 %v359
    %1002 = vmatprep.subr.bf16.mxu0 0
    %1003 = vmatpush1.bf16.msra.mxu0 %v362
    %1004 = vmatprep.subr.bf16.mxu0 0
    %1005 = vmatpush1.bf16.msra.mxu0 0
    %1006 = vmatprep.subr.bf16.mxu0 0
    %1007 = vmatpush1.bf16.msra.mxu0 0
    %1008 = vmatprep.subr.bf16.mxu0 0
    %1009 = vmatpush1.bf16.msra.mxu0 0
    %1010 = vmatprep.subr.bf16.mxu0 0
    %1011 = vmatpush1.bf16.msra.mxu0 0
    %1012 = vmatprep.subr.bf16.mxu0 0
    %1013 = vmatpush1.bf16.msra.mxu0 0
    %1014 = vmatprep.subr.bf16.mxu0 0
    %1015 = vmatpush1.bf16.msra.mxu0 0
    %1016 = vmatprep.subr.bf16.mxu0 0
    %1017 = vmatpush1.bf16.msra.mxu0 0
    %1018 = vmatprep.subr.bf16.mxu0 0
    %1019 = vmatpush1.bf16.msra.mxu0 0
    %1020 = vmatprep.mubr.bf16.mxu0 0
    %1021 = vmatmul.mubr.bf16.gmra.mrb[0].mxu0 %v490
    %v1022 = vpop.f32.mrb[0].mxu0
    %v1023 = vadd.f32 0.0, %v1022
    %v1024 = vpop.f32.mrb[0].mxu0
    %v1025 = vpop.f32.mrb[0].mxu0
    %v1026 = vpop.f32.mrb[0].mxu0
    %1027 = vdwg.mxu0
    %v1030 = vrot.slane %v982, 6
    %v1031 = vrot.slane %v984, 6
    %v1034 = vadd.f32 %v210, %v1030
    %v1035 = vadd.f32 %v212, %v1031
    %v1036 = vxor.u32 %v1034, 2147483648
    %v1037 = vxor.u32 %v1035, 2147483648
    %v1038 = vmul.f32 %v1036, 1.442695
    %v1039 = vpow.pop %v1038
    %v1040 = vmul.f32 %v1037, 1.442695
    %v1041 = vpow.pop %v1040
    %v1042 = vadd.f32 %v1039, 1.0
    %v1043 = vadd.f32 %v1041, 1.0
    %v1044 = vrcp.pop %v1042
    %v1045 = vmul.f32 1.0, %v1044
    %v1046 = vrcp.pop %v1043
    %v1047 = vmul.f32 1.0, %v1046
    %v1048 = vadd.f32 %v1023, %v130
    %v1050 = vrot.slane %v1048, 6
    %v1052 = vmul.f32 %v1045, %v1050
    %v1053 = vadd.f32 %v253, %v1052
    %v1054 = vtanh.pop %v1053
    %v1055 = vsub.f32 1.0, %v1047
    %v1056 = vmul.f32 %v1055, %v1054
    %v1058 = vrot.slane %v489, 6
    %v1060 = vmul.f32 %v1047, %v1058
    %v1061 = vadd.f32 %v1056, %v1060
    %v1062 = vpack.c.bf16 %v1061, %v1061
    %v1064 = vrot.slane %v1062, 1
    %1066 = vmatprep.subr.bf16.mxu0 %v588
    %1067 = vmatpush1.bf16.msra.mxu0 %v587
    %1068 = vmatprep.subr.bf16.mxu0 %v591
    %1069 = vmatpush1.bf16.msra.mxu0 %v590
    %1070 = vmatprep.subr.bf16.mxu0 %v594
    %1071 = vmatpush1.bf16.msra.mxu0 %v593
    %1072 = vmatprep.subr.bf16.mxu0 %v597
    %1073 = vmatpush1.bf16.msra.mxu0 %v596
    %1074 = vmatprep.subr.bf16.mxu0 %v600
    %1075 = vmatpush1.bf16.msra.mxu0 %v599
    %1076 = vmatprep.subr.bf16.mxu0 %v603
    %1077 = vmatpush1.bf16.msra.mxu0 %v602
    %1078 = vmatprep.subr.bf16.mxu0 %v606
    %1079 = vmatpush1.bf16.msra.mxu0 %v605
    %1080 = vmatprep.subr.bf16.mxu0 %v609
    %1081 = vmatpush1.bf16.msra.mxu0 %v608
    %1082 = vmatprep.subr.bf16.mxu0 0
    %1083 = vmatpush1.bf16.msra.mxu0 0
    %1084 = vmatprep.subr.bf16.mxu0 0
    %1085 = vmatpush1.bf16.msra.mxu0 0
    %1086 = vmatprep.subr.bf16.mxu0 0
    %1087 = vmatpush1.bf16.msra.mxu0 0
    %1088 = vmatprep.subr.bf16.mxu0 0
    %1089 = vmatpush1.bf16.msra.mxu0 0
    %1090 = vmatprep.subr.bf16.mxu0 0
    %1091 = vmatpush1.bf16.msra.mxu0 0
    %1092 = vmatprep.subr.bf16.mxu0 0
    %1093 = vmatpush1.bf16.msra.mxu0 0
    %1094 = vmatprep.subr.bf16.mxu0 0
    %1095 = vmatpush1.bf16.msra.mxu0 0
    %1096 = vmatprep.subr.bf16.mxu0 0
    %1097 = vmatpush1.bf16.msra.mxu0 0
    %1098 = vmatprep.mubr.bf16.mxu0 0
    %1099 = vmatmul.mubr.bf16.gmra.mrb[0].mxu0 %v1064
    %v1100 = vpop.f32.mrb[0].mxu0
    %v1101 = vadd.f32 %v495, %v1100
    %v1102 = vpop.f32.mrb[0].mxu0
    %v1103 = vadd.f32 %v499, %v1102
    %v1104 = vpop.f32.mrb[0].mxu0
    %v1105 = vpop.f32.mrb[0].mxu0
    %1106 = vdwg.mxu0
    %1107 = vmatprep.subr.bf16.mxu0 0
    %1108 = vmatpush1.bf16.msra.mxu0 %v589
    %1109 = vmatprep.subr.bf16.mxu0 0
    %1110 = vmatpush1.bf16.msra.mxu0 %v592
    %1111 = vmatprep.subr.bf16.mxu0 0
    %1112 = vmatpush1.bf16.msra.mxu0 %v595
    %1113 = vmatprep.subr.bf16.mxu0 0
    %1114 = vmatpush1.bf16.msra.mxu0 %v598
    %1115 = vmatprep.subr.bf16.mxu0 0
    %1116 = vmatpush1.bf16.msra.mxu0 %v601
    %1117 = vmatprep.subr.bf16.mxu0 0
    %1118 = vmatpush1.bf16.msra.mxu0 %v604
    %1119 = vmatprep.subr.bf16.mxu0 0
    %1120 = vmatpush1.bf16.msra.mxu0 %v607
    %1121 = vmatprep.subr.bf16.mxu0 0
    %1122 = vmatpush1.bf16.msra.mxu0 %v610
    %1123 = vmatprep.subr.bf16.mxu0 0
    %1124 = vmatpush1.bf16.msra.mxu0 0
    %1125 = vmatprep.subr.bf16.mxu0 0
    %1126 = vmatpush1.bf16.msra.mxu0 0
    %1127 = vmatprep.subr.bf16.mxu0 0
    %1128 = vmatpush1.bf16.msra.mxu0 0
    %1129 = vmatprep.subr.bf16.mxu0 0
    %1130 = vmatpush1.bf16.msra.mxu0 0
    %1131 = vmatprep.subr.bf16.mxu0 0
    %1132 = vmatpush1.bf16.msra.mxu0 0
    %1133 = vmatprep.subr.bf16.mxu0 0
    %1134 = vmatpush1.bf16.msra.mxu0 0
    %1135 = vmatprep.subr.bf16.mxu0 0
    %1136 = vmatpush1.bf16.msra.mxu0 0
    %1137 = vmatprep.subr.bf16.mxu0 0
    %1138 = vmatpush1.bf16.msra.mxu0 0
    %1139 = vmatprep.mubr.bf16.mxu0 0
    %1140 = vmatmul.mubr.bf16.gmra.mrb[0].mxu0 %v1064
    %v1141 = vpop.f32.mrb[0].mxu0
    %v1142 = vadd.f32 %v503, %v1141
    %v1143 = vpop.f32.mrb[0].mxu0
    %v1144 = vpop.f32.mrb[0].mxu0
    %v1145 = vpop.f32.mrb[0].mxu0
    %1146 = vdwg.mxu0
    %v1147 = vpack.c.bf16 %v946, %v946
    %1148 = vmatprep.subr.bf16.mxu0 %v797
    %1149 = vmatpush1.bf16.msra.mxu0 %v796
    %1150 = vmatprep.subr.bf16.mxu0 %v800
    %1151 = vmatpush1.bf16.msra.mxu0 %v799
    %1152 = vmatprep.subr.bf16.mxu0 %v803
    %1153 = vmatpush1.bf16.msra.mxu0 %v802
    %1154 = vmatprep.subr.bf16.mxu0 %v806
    %1155 = vmatpush1.bf16.msra.mxu0 %v805
    %1156 = vmatprep.subr.bf16.mxu0 %v809
    %1157 = vmatpush1.bf16.msra.mxu0 %v808
    %1158 = vmatprep.subr.bf16.mxu0 %v812
    %1159 = vmatpush1.bf16.msra.mxu0 %v811
    %1160 = vmatprep.subr.bf16.mxu0 %v815
    %1161 = vmatpush1.bf16.msra.mxu0 %v814
    %1162 = vmatprep.subr.bf16.mxu0 %v818
    %1163 = vmatpush1.bf16.msra.mxu0 %v817
    %1164 = vmatprep.subr.bf16.mxu0 0
    %1165 = vmatpush1.bf16.msra.mxu0 0
    %1166 = vmatprep.subr.bf16.mxu0 0
    %1167 = vmatpush1.bf16.msra.mxu0 0
    %1168 = vmatprep.subr.bf16.mxu0 0
    %1169 = vmatpush1.bf16.msra.mxu0 0
    %1170 = vmatprep.subr.bf16.mxu0 0
    %1171 = vmatpush1.bf16.msra.mxu0 0
    %1172 = vmatprep.subr.bf16.mxu0 0
    %1173 = vmatpush1.bf16.msra.mxu0 0
    %1174 = vmatprep.subr.bf16.mxu0 0
    %1175 = vmatpush1.bf16.msra.mxu0 0
    %1176 = vmatprep.subr.bf16.mxu0 0
    %1177 = vmatpush1.bf16.msra.mxu0 0
    %1178 = vmatprep.subr.bf16.mxu0 0
    %1179 = vmatpush1.bf16.msra.mxu0 0
    %1180 = vmatprep.mubr.bf16.mxu0 0
    %1181 = vmatmul.mubr.bf16.gmra.mrb[0].mxu0 %v1147
    %v1182 = vpop.f32.mrb[0].mxu0
    %v1183 = vadd.f32 0.0, %v1182
    %v1184 = vpop.f32.mrb[0].mxu0
    %v1185 = vadd.f32 0.0, %v1184
    %v1186 = vpop.f32.mrb[0].mxu0
    %v1187 = vpop.f32.mrb[0].mxu0
    %1188 = vdwg.mxu0
    %1189 = vmatprep.subr.bf16.mxu0 0
    %1190 = vmatpush1.bf16.msra.mxu0 %v798
    %1191 = vmatprep.subr.bf16.mxu0 0
    %1192 = vmatpush1.bf16.msra.mxu0 %v801
    %1193 = vmatprep.subr.bf16.mxu0 0
    %1194 = vmatpush1.bf16.msra.mxu0 %v804
    %1195 = vmatprep.subr.bf16.mxu0 0
    %1196 = vmatpush1.bf16.msra.mxu0 %v807
    %1197 = vmatprep.subr.bf16.mxu0 0
    %1198 = vmatpush1.bf16.msra.mxu0 %v810
    %1199 = vmatprep.subr.bf16.mxu0 0
    %1200 = vmatpush1.bf16.msra.mxu0 %v813
    %1201 = vmatprep.subr.bf16.mxu0 0
    %1202 = vmatpush1.bf16.msra.mxu0 %v816
    %1203 = vmatprep.subr.bf16.mxu0 0
    %1204 = vmatpush1.bf16.msra.mxu0 %v819
    %1205 = vmatprep.subr.bf16.mxu0 0
    %1206 = vmatpush1.bf16.msra.mxu0 0
    %1207 = vmatprep.subr.bf16.mxu0 0
    %1208 = vmatpush1.bf16.msra.mxu0 0
    %1209 = vmatprep.subr.bf16.mxu0 0
    %1210 = vmatpush1.bf16.msra.mxu0 0
    %1211 = vmatprep.subr.bf16.mxu0 0
    %1212 = vmatpush1.bf16.msra.mxu0 0
    %1213 = vmatprep.subr.bf16.mxu0 0
    %1214 = vmatpush1.bf16.msra.mxu0 0
    %1215 = vmatprep.subr.bf16.mxu0 0
    %1216 = vmatpush1.bf16.msra.mxu0 0
    %1217 = vmatprep.subr.bf16.mxu0 0
    %1218 = vmatpush1.bf16.msra.mxu0 0
    %1219 = vmatprep.subr.bf16.mxu0 0
    %1220 = vmatpush1.bf16.msra.mxu0 0
    %1221 = vmatprep.mubr.bf16.mxu0 0
    %1222 = vmatmul.mubr.bf16.gmra.mrb[0].mxu0 %v1147
    %v1223 = vpop.f32.mrb[0].mxu0
    %v1224 = vadd.f32 0.0, %v1223
    %v1225 = vpop.f32.mrb[0].mxu0
    %v1226 = vpop.f32.mrb[0].mxu0
    %v1227 = vpop.f32.mrb[0].mxu0
    %1228 = vdwg.mxu0
    %v1229 = vadd.f32 %v1101, %v1183
    %v1230 = vadd.f32 %v1103, %v1185
    %v1231 = vxor.u32 %v1229, 2147483648
    %v1232 = vxor.u32 %v1230, 2147483648
    %v1233 = vmul.f32 %v1231, 1.442695
    %v1234 = vpow.pop %v1233
    %v1235 = vmul.f32 %v1232, 1.442695
    %v1236 = vpow.pop %v1235
    %v1237 = vadd.f32 %v1234, 1.0
    %v1238 = vadd.f32 %v1236, 1.0
    %v1239 = vrcp.pop %v1237
    %v1240 = vmul.f32 1.0, %v1239
    %v1241 = vrcp.pop %v1238
    %v1242 = vmul.f32 1.0, %v1241
    %v1243 = vadd.f32 %v1224, %v131
    %v1244 = vmul.f32 %v1240, %v1243
    %v1245 = vadd.f32 %v1142, %v1244
    %v1246 = vtanh.pop %v1245
    %v1247 = vsub.f32 1.0, %v1242
    %v1248 = vmul.f32 %v1247, %v1246
    %v1249 = vmul.f32 %v1242, %v946
    %v1250 = vadd.f32 %v1248, %v1249
    %1251 = vmatprep.subr.bf16.mxu0 %v340
    %1252 = vmatpush1.bf16.msra.mxu0 %v339
    %1253 = vmatprep.subr.bf16.mxu0 %v343
    %1254 = vmatpush1.bf16.msra.mxu0 %v342
    %1255 = vmatprep.subr.bf16.mxu0 %v346
    %1256 = vmatpush1.bf16.msra.mxu0 %v345
    %1257 = vmatprep.subr.bf16.mxu0 %v349
    %1258 = vmatpush1.bf16.msra.mxu0 %v348
    %1259 = vmatprep.subr.bf16.mxu0 %v352
    %1260 = vmatpush1.bf16.msra.mxu0 %v351
    %1261 = vmatprep.subr.bf16.mxu0 %v355
    %1262 = vmatpush1.bf16.msra.mxu0 %v354
    %1263 = vmatprep.subr.bf16.mxu0 %v358
    %1264 = vmatpush1.bf16.msra.mxu0 %v357
    %1265 = vmatprep.subr.bf16.mxu0 %v361
    %1266 = vmatpush1.bf16.msra.mxu0 %v360
    %1267 = vmatprep.subr.bf16.mxu0 0
    %1268 = vmatpush1.bf16.msra.mxu0 0
    %1269 = vmatprep.subr.bf16.mxu0 0
    %1270 = vmatpush1.bf16.msra.mxu0 0
    %1271 = vmatprep.subr.bf16.mxu0 0
    %1272 = vmatpush1.bf16.msra.mxu0 0
    %1273 = vmatprep.subr.bf16.mxu0 0
    %1274 = vmatpush1.bf16.msra.mxu0 0
    %1275 = vmatprep.subr.bf16.mxu0 0
    %1276 = vmatpush1.bf16.msra.mxu0 0
    %1277 = vmatprep.subr.bf16.mxu0 0
    %1278 = vmatpush1.bf16.msra.mxu0 0
    %1279 = vmatprep.subr.bf16.mxu0 0
    %1280 = vmatpush1.bf16.msra.mxu0 0
    %1281 = vmatprep.subr.bf16.mxu0 0
    %1282 = vmatpush1.bf16.msra.mxu0 0
    %1283 = vmatprep.mubr.bf16.mxu0 0
    %1284 = vmatmul.mubr.bf16.gmra.mrb[0].mxu0 %v1064
    %v1285 = vpop.f32.mrb[0].mxu0
    %v1286 = vadd.f32 0.0, %v1285
    %v1287 = vpop.f32.mrb[0].mxu0
    %v1288 = vadd.f32 0.0, %v1287
    %v1289 = vpop.f32.mrb[0].mxu0
    %v1290 = vpop.f32.mrb[0].mxu0
    %1291 = vdwg.mxu0
    %1292 = vmatprep.subr.bf16.mxu0 0
    %1293 = vmatpush1.bf16.msra.mxu0 %v341
    %1294 = vmatprep.subr.bf16.mxu0 0
    %1295 = vmatpush1.bf16.msra.mxu0 %v344
    %1296 = vmatprep.subr.bf16.mxu0 0
    %1297 = vmatpush1.bf16.msra.mxu0 %v347
    %1298 = vmatprep.subr.bf16.mxu0 0
    %1299 = vmatpush1.bf16.msra.mxu0 %v350
    %1300 = vmatprep.subr.bf16.mxu0 0
    %1301 = vmatpush1.bf16.msra.mxu0 %v353
    %1302 = vmatprep.subr.bf16.mxu0 0
    %1303 = vmatpush1.bf16.msra.mxu0 %v356
    %1304 = vmatprep.subr.bf16.mxu0 0
    %1305 = vmatpush1.bf16.msra.mxu0 %v359
    %1306 = vmatprep.subr.bf16.mxu0 0
    %1307 = vmatpush1.bf16.msra.mxu0 %v362
    %1308 = vmatprep.subr.bf16.mxu0 0
    %1309 = vmatpush1.bf16.msra.mxu0 0
    %1310 = vmatprep.subr.bf16.mxu0 0
    %1311 = vmatpush1.bf16.msra.mxu0 0
    %1312 = vmatprep.subr.bf16.mxu0 0
    %1313 = vmatpush1.bf16.msra.mxu0 0
    %1314 = vmatprep.subr.bf16.mxu0 0
    %1315 = vmatpush1.bf16.msra.mxu0 0
    %1316 = vmatprep.subr.bf16.mxu0 0
    %1317 = vmatpush1.bf16.msra.mxu0 0
    %1318 = vmatprep.subr.bf16.mxu0 0
    %1319 = vmatpush1.bf16.msra.mxu0 0
    %1320 = vmatprep.subr.bf16.mxu0 0
    %1321 = vmatpush1.bf16.msra.mxu0 0
    %1322 = vmatprep.subr.bf16.mxu0 0
    %1323 = vmatpush1.bf16.msra.mxu0 0
    %1324 = vmatprep.mubr.bf16.mxu0 0
    %1325 = vmatmul.mubr.bf16.gmra.mrb[0].mxu0 %v1064
    %v1326 = vpop.f32.mrb[0].mxu0
    %v1327 = vadd.f32 0.0, %v1326
    %v1328 = vpop.f32.mrb[0].mxu0
    %v1329 = vpop.f32.mrb[0].mxu0
    %v1330 = vpop.f32.mrb[0].mxu0
    %1331 = vdwg.mxu0
    %v1334 = vrot.slane %v1286, 4
    %v1335 = vrot.slane %v1288, 4
    %v1338 = vadd.f32 %v210, %v1334
    %v1339 = vadd.f32 %v212, %v1335
    %v1340 = vxor.u32 %v1338, 2147483648
    %v1341 = vxor.u32 %v1339, 2147483648
    %v1342 = vmul.f32 %v1340, 1.442695
    %v1343 = vpow.pop %v1342
    %v1344 = vmul.f32 %v1341, 1.442695
    %v1345 = vpow.pop %v1344
    %v1346 = vadd.f32 %v1343, 1.0
    %v1347 = vadd.f32 %v1345, 1.0
    %v1348 = vrcp.pop %v1346
    %v1349 = vmul.f32 1.0, %v1348
    %v1350 = vrcp.pop %v1347
    %v1351 = vmul.f32 1.0, %v1350
    %v1352 = vadd.f32 %v1327, %v130
    %v1354 = vrot.slane %v1352, 4
    %v1356 = vmul.f32 %v1349, %v1354
    %v1357 = vadd.f32 %v253, %v1356
    %v1358 = vtanh.pop %v1357
    %v1359 = vsub.f32 1.0, %v1351
    %v1360 = vmul.f32 %v1359, %v1358
    %v1362 = vrot.slane %v1061, 6
    %v1364 = vmul.f32 %v1351, %v1362
    %v1365 = vadd.f32 %v1360, %v1364
    %v1366 = vpack.c.bf16 %v1365, %v1365
    %v1368 = vrot.slane %v1366, 2
    %1370 = vmatprep.subr.bf16.mxu0 %v588
    %1371 = vmatpush1.bf16.msra.mxu0 %v587
    %1372 = vmatprep.subr.bf16.mxu0 %v591
    %1373 = vmatpush1.bf16.msra.mxu0 %v590
    %1374 = vmatprep.subr.bf16.mxu0 %v594
    %1375 = vmatpush1.bf16.msra.mxu0 %v593
    %1376 = vmatprep.subr.bf16.mxu0 %v597
    %1377 = vmatpush1.bf16.msra.mxu0 %v596
    %1378 = vmatprep.subr.bf16.mxu0 %v600
    %1379 = vmatpush1.bf16.msra.mxu0 %v599
    %1380 = vmatprep.subr.bf16.mxu0 %v603
    %1381 = vmatpush1.bf16.msra.mxu0 %v602
    %1382 = vmatprep.subr.bf16.mxu0 %v606
    %1383 = vmatpush1.bf16.msra.mxu0 %v605
    %1384 = vmatprep.subr.bf16.mxu0 %v609
    %1385 = vmatpush1.bf16.msra.mxu0 %v608
    %1386 = vmatprep.subr.bf16.mxu0 0
    %1387 = vmatpush1.bf16.msra.mxu0 0
    %1388 = vmatprep.subr.bf16.mxu0 0
    %1389 = vmatpush1.bf16.msra.mxu0 0
    %1390 = vmatprep.subr.bf16.mxu0 0
    %1391 = vmatpush1.bf16.msra.mxu0 0
    %1392 = vmatprep.subr.bf16.mxu0 0
    %1393 = vmatpush1.bf16.msra.mxu0 0
    %1394 = vmatprep.subr.bf16.mxu0 0
    %1395 = vmatpush1.bf16.msra.mxu0 0
    %1396 = vmatprep.subr.bf16.mxu0 0
    %1397 = vmatpush1.bf16.msra.mxu0 0
    %1398 = vmatprep.subr.bf16.mxu0 0
    %1399 = vmatpush1.bf16.msra.mxu0 0
    %1400 = vmatprep.subr.bf16.mxu0 0
    %1401 = vmatpush1.bf16.msra.mxu0 0
    %1402 = vmatprep.mubr.bf16.mxu0 0
    %1403 = vmatmul.mubr.bf16.gmra.mrb[0].mxu0 %v1368
    %v1404 = vpop.f32.mrb[0].mxu0
    %v1405 = vadd.f32 %v495, %v1404
    %v1406 = vpop.f32.mrb[0].mxu0
    %v1407 = vadd.f32 %v499, %v1406
    %v1408 = vpop.f32.mrb[0].mxu0
    %v1409 = vpop.f32.mrb[0].mxu0
    %1410 = vdwg.mxu0
    %1411 = vmatprep.subr.bf16.mxu0 0
    %1412 = vmatpush1.bf16.msra.mxu0 %v589
    %1413 = vmatprep.subr.bf16.mxu0 0
    %1414 = vmatpush1.bf16.msra.mxu0 %v592
    %1415 = vmatprep.subr.bf16.mxu0 0
    %1416 = vmatpush1.bf16.msra.mxu0 %v595
    %1417 = vmatprep.subr.bf16.mxu0 0
    %1418 = vmatpush1.bf16.msra.mxu0 %v598
    %1419 = vmatprep.subr.bf16.mxu0 0
    %1420 = vmatpush1.bf16.msra.mxu0 %v601
    %1421 = vmatprep.subr.bf16.mxu0 0
    %1422 = vmatpush1.bf16.msra.mxu0 %v604
    %1423 = vmatprep.subr.bf16.mxu0 0
    %1424 = vmatpush1.bf16.msra.mxu0 %v607
    %1425 = vmatprep.subr.bf16.mxu0 0
    %1426 = vmatpush1.bf16.msra.mxu0 %v610
    %1427 = vmatprep.subr.bf16.mxu0 0
    %1428 = vmatpush1.bf16.msra.mxu0 0
    %1429 = vmatprep.subr.bf16.mxu0 0
    %1430 = vmatpush1.bf16.msra.mxu0 0
    %1431 = vmatprep.subr.bf16.mxu0 0
    %1432 = vmatpush1.bf16.msra.mxu0 0
    %1433 = vmatprep.subr.bf16.mxu0 0
    %1434 = vmatpush1.bf16.msra.mxu0 0
    %1435 = vmatprep.subr.bf16.mxu0 0
    %1436 = vmatpush1.bf16.msra.mxu0 0
    %1437 = vmatprep.subr.bf16.mxu0 0
    %1438 = vmatpush1.bf16.msra.mxu0 0
    %1439 = vmatprep.subr.bf16.mxu0 0
    %1440 = vmatpush1.bf16.msra.mxu0 0
    %1441 = vmatprep.subr.bf16.mxu0 0
    %1442 = vmatpush1.bf16.msra.mxu0 0
    %1443 = vmatprep.mubr.bf16.mxu0 0
    %1444 = vmatmul.mubr.bf16.gmra.mrb[0].mxu0 %v1368
    %v1445 = vpop.f32.mrb[0].mxu0
    %v1446 = vadd.f32 %v503, %v1445
    %v1447 = vpop.f32.mrb[0].mxu0
    %v1448 = vpop.f32.mrb[0].mxu0
    %v1449 = vpop.f32.mrb[0].mxu0
    %1450 = vdwg.mxu0
    %v1451 = vpack.c.bf16 %v1250, %v1250
    %1452 = vmatprep.subr.bf16.mxu0 %v797
    %1453 = vmatpush1.bf16.msra.mxu0 %v796
    %1454 = vmatprep.subr.bf16.mxu0 %v800
    %1455 = vmatpush1.bf16.msra.mxu0 %v799
    %1456 = vmatprep.subr.bf16.mxu0 %v803
    %1457 = vmatpush1.bf16.msra.mxu0 %v802
    %1458 = vmatprep.subr.bf16.mxu0 %v806
    %1459 = vmatpush1.bf16.msra.mxu0 %v805
    %1460 = vmatprep.subr.bf16.mxu0 %v809
    %1461 = vmatpush1.bf16.msra.mxu0 %v808
    %1462 = vmatprep.subr.bf16.mxu0 %v812
    %1463 = vmatpush1.bf16.msra.mxu0 %v811
    %1464 = vmatprep.subr.bf16.mxu0 %v815
    %1465 = vmatpush1.bf16.msra.mxu0 %v814
    %1466 = vmatprep.subr.bf16.mxu0 %v818
    %1467 = vmatpush1.bf16.msra.mxu0 %v817
    %1468 = vmatprep.subr.bf16.mxu0 0
    %1469 = vmatpush1.bf16.msra.mxu0 0
    %1470 = vmatprep.subr.bf16.mxu0 0
    %1471 = vmatpush1.bf16.msra.mxu0 0
    %1472 = vmatprep.subr.bf16.mxu0 0
    %1473 = vmatpush1.bf16.msra.mxu0 0
    %1474 = vmatprep.subr.bf16.mxu0 0
    %1475 = vmatpush1.bf16.msra.mxu0 0
    %1476 = vmatprep.subr.bf16.mxu0 0
    %1477 = vmatpush1.bf16.msra.mxu0 0
    %1478 = vmatprep.subr.bf16.mxu0 0
    %1479 = vmatpush1.bf16.msra.mxu0 0
    %1480 = vmatprep.subr.bf16.mxu0 0
    %1481 = vmatpush1.bf16.msra.mxu0 0
    %1482 = vmatprep.subr.bf16.mxu0 0
    %1483 = vmatpush1.bf16.msra.mxu0 0
    %1484 = vmatprep.mubr.bf16.mxu0 0
    %1485 = vmatmul.mubr.bf16.gmra.mrb[0].mxu0 %v1451
    %v1486 = vpop.f32.mrb[0].mxu0
    %v1487 = vadd.f32 0.0, %v1486
    %v1488 = vpop.f32.mrb[0].mxu0
    %v1489 = vadd.f32 0.0, %v1488
    %v1490 = vpop.f32.mrb[0].mxu0
    %v1491 = vpop.f32.mrb[0].mxu0
    %1492 = vdwg.mxu0
    %1493 = vmatprep.subr.bf16.mxu0 0
    %1494 = vmatpush1.bf16.msra.mxu0 %v798
    %1495 = vmatprep.subr.bf16.mxu0 0
    %1496 = vmatpush1.bf16.msra.mxu0 %v801
    %1497 = vmatprep.subr.bf16.mxu0 0
    %1498 = vmatpush1.bf16.msra.mxu0 %v804
    %1499 = vmatprep.subr.bf16.mxu0 0
    %1500 = vmatpush1.bf16.msra.mxu0 %v807
    %1501 = vmatprep.subr.bf16.mxu0 0
    %1502 = vmatpush1.bf16.msra.mxu0 %v810
    %1503 = vmatprep.subr.bf16.mxu0 0
    %1504 = vmatpush1.bf16.msra.mxu0 %v813
    %1505 = vmatprep.subr.bf16.mxu0 0
    %1506 = vmatpush1.bf16.msra.mxu0 %v816
    %1507 = vmatprep.subr.bf16.mxu0 0
    %1508 = vmatpush1.bf16.msra.mxu0 %v819
    %1509 = vmatprep.subr.bf16.mxu0 0
    %1510 = vmatpush1.bf16.msra.mxu0 0
    %1511 = vmatprep.subr.bf16.mxu0 0
    %1512 = vmatpush1.bf16.msra.mxu0 0
    %1513 = vmatprep.subr.bf16.mxu0 0
    %1514 = vmatpush1.bf16.msra.mxu0 0
    %1515 = vmatprep.subr.bf16.mxu0 0
    %1516 = vmatpush1.bf16.msra.mxu0 0
    %1517 = vmatprep.subr.bf16.mxu0 0
    %1518 = vmatpush1.bf16.msra.mxu0 0
    %1519 = vmatprep.subr.bf16.mxu0 0
    %1520 = vmatpush1.bf16.msra.mxu0 0
    %1521 = vmatprep.subr.bf16.mxu0 0
    %1522 = vmatpush1.bf16.msra.mxu0 0
    %1523 = vmatprep.subr.bf16.mxu0 0
    %1524 = vmatpush1.bf16.msra.mxu0 0
    %1525 = vmatprep.mubr.bf16.mxu0 0
    %1526 = vmatmul.mubr.bf16.gmra.mrb[0].mxu0 %v1451
    %v1527 = vpop.f32.mrb[0].mxu0
    %v1528 = vadd.f32 0.0, %v1527
    %v1529 = vpop.f32.mrb[0].mxu0
    %v1530 = vpop.f32.mrb[0].mxu0
    %v1531 = vpop.f32.mrb[0].mxu0
    %1532 = vdwg.mxu0
    %v1533 = vadd.f32 %v1405, %v1487
    %v1534 = vadd.f32 %v1407, %v1489
    %v1535 = vxor.u32 %v1533, 2147483648
    %v1536 = vxor.u32 %v1534, 2147483648
    %v1537 = vmul.f32 %v1535, 1.442695
    %v1538 = vpow.pop %v1537
    %v1539 = vmul.f32 %v1536, 1.442695
    %v1540 = vpow.pop %v1539
    %v1541 = vadd.f32 %v1538, 1.0
    %v1542 = vadd.f32 %v1540, 1.0
    %v1543 = vrcp.pop %v1541
    %v1544 = vmul.f32 1.0, %v1543
    %v1545 = vrcp.pop %v1542
    %v1546 = vmul.f32 1.0, %v1545
    %v1547 = vadd.f32 %v1528, %v131
    %v1548 = vmul.f32 %v1544, %v1547
    %v1549 = vadd.f32 %v1446, %v1548
    %v1550 = vtanh.pop %v1549
    %v1551 = vsub.f32 1.0, %v1546
    %v1552 = vmul.f32 %v1551, %v1550
    %v1553 = vmul.f32 %v1546, %v1250
    %v1554 = vadd.f32 %v1552, %v1553
    %1555 = vmatprep.subr.bf16.mxu0 %v340
    %1556 = vmatpush1.bf16.msra.mxu0 %v339
    %1557 = vmatprep.subr.bf16.mxu0 %v343
    %1558 = vmatpush1.bf16.msra.mxu0 %v342
    %1559 = vmatprep.subr.bf16.mxu0 %v346
    %1560 = vmatpush1.bf16.msra.mxu0 %v345
    %1561 = vmatprep.subr.bf16.mxu0 %v349
    %1562 = vmatpush1.bf16.msra.mxu0 %v348
    %1563 = vmatprep.subr.bf16.mxu0 %v352
    %1564 = vmatpush1.bf16.msra.mxu0 %v351
    %1565 = vmatprep.subr.bf16.mxu0 %v355
    %1566 = vmatpush1.bf16.msra.mxu0 %v354
    %1567 = vmatprep.subr.bf16.mxu0 %v358
    %1568 = vmatpush1.bf16.msra.mxu0 %v357
    %1569 = vmatprep.subr.bf16.mxu0 %v361
    %1570 = vmatpush1.bf16.msra.mxu0 %v360
    %1571 = vmatprep.subr.bf16.mxu0 0
    %1572 = vmatpush1.bf16.msra.mxu0 0
    %1573 = vmatprep.subr.bf16.mxu0 0
    %1574 = vmatpush1.bf16.msra.mxu0 0
    %1575 = vmatprep.subr.bf16.mxu0 0
    %1576 = vmatpush1.bf16.msra.mxu0 0
    %1577 = vmatprep.subr.bf16.mxu0 0
    %1578 = vmatpush1.bf16.msra.mxu0 0
    %1579 = vmatprep.subr.bf16.mxu0 0
    %1580 = vmatpush1.bf16.msra.mxu0 0
    %1581 = vmatprep.subr.bf16.mxu0 0
    %1582 = vmatpush1.bf16.msra.mxu0 0
    %1583 = vmatprep.subr.bf16.mxu0 0
    %1584 = vmatpush1.bf16.msra.mxu0 0
    %1585 = vmatprep.subr.bf16.mxu0 0
    %1586 = vmatpush1.bf16.msra.mxu0 0
    %1587 = vmatprep.mubr.bf16.mxu0 0
    %1588 = vmatmul.mubr.bf16.gmra.mrb[0].mxu0 %v1368
    %v1589 = vpop.f32.mrb[0].mxu0
    %v1590 = vadd.f32 0.0, %v1589
    %v1591 = vpop.f32.mrb[0].mxu0
    %v1592 = vadd.f32 0.0, %v1591
    %v1593 = vpop.f32.mrb[0].mxu0
    %v1594 = vpop.f32.mrb[0].mxu0
    %1595 = vdwg.mxu0
    %1596 = vmatprep.subr.bf16.mxu0 0
    %1597 = vmatpush1.bf16.msra.mxu0 %v341
    %1598 = vmatprep.subr.bf16.mxu0 0
    %1599 = vmatpush1.bf16.msra.mxu0 %v344
    %1600 = vmatprep.subr.bf16.mxu0 0
    %1601 = vmatpush1.bf16.msra.mxu0 %v347
    %1602 = vmatprep.subr.bf16.mxu0 0
    %1603 = vmatpush1.bf16.msra.mxu0 %v350
    %1604 = vmatprep.subr.bf16.mxu0 0
    %1605 = vmatpush1.bf16.msra.mxu0 %v353
    %1606 = vmatprep.subr.bf16.mxu0 0
    %1607 = vmatpush1.bf16.msra.mxu0 %v356
    %1608 = vmatprep.subr.bf16.mxu0 0
    %1609 = vmatpush1.bf16.msra.mxu0 %v359
    %1610 = vmatprep.subr.bf16.mxu0 0
    %1611 = vmatpush1.bf16.msra.mxu0 %v362
    %1612 = vmatprep.subr.bf16.mxu0 0
    %1613 = vmatpush1.bf16.msra.mxu0 0
    %1614 = vmatprep.subr.bf16.mxu0 0
    %1615 = vmatpush1.bf16.msra.mxu0 0
    %1616 = vmatprep.subr.bf16.mxu0 0
    %1617 = vmatpush1.bf16.msra.mxu0 0
    %1618 = vmatprep.subr.bf16.mxu0 0
    %1619 = vmatpush1.bf16.msra.mxu0 0
    %1620 = vmatprep.subr.bf16.mxu0 0
    %1621 = vmatpush1.bf16.msra.mxu0 0
    %1622 = vmatprep.subr.bf16.mxu0 0
    %1623 = vmatpush1.bf16.msra.mxu0 0
    %1624 = vmatprep.subr.bf16.mxu0 0
    %1625 = vmatpush1.bf16.msra.mxu0 0
    %1626 = vmatprep.subr.bf16.mxu0 0
    %1627 = vmatpush1.bf16.msra.mxu0 0
    %1628 = vmatprep.mubr.bf16.mxu0 0
    %1629 = vmatmul.mubr.bf16.gmra.mrb[0].mxu0 %v1368
    %v1630 = vpop.f32.mrb[0].mxu0
    %v1631 = vadd.f32 0.0, %v1630
    %v1632 = vpop.f32.mrb[0].mxu0
    %v1633 = vpop.f32.mrb[0].mxu0
    %v1634 = vpop.f32.mrb[0].mxu0
    %1635 = vdwg.mxu0
    %v1638 = vrot.slane %v1590, 2
    %v1639 = vrot.slane %v1592, 2
    %v1642 = vadd.f32 %v210, %v1638
    %v1643 = vadd.f32 %v212, %v1639
    %v1644 = vxor.u32 %v1642, 2147483648
    %v1645 = vxor.u32 %v1643, 2147483648
    %v1646 = vmul.f32 %v1644, 1.442695
    %v1647 = vpow.pop %v1646
    %v1648 = vmul.f32 %v1645, 1.442695
    %v1649 = vpow.pop %v1648
    %v1650 = vadd.f32 %v1647, 1.0
    %v1651 = vadd.f32 %v1649, 1.0
    %v1652 = vrcp.pop %v1650
    %v1653 = vmul.f32 1.0, %v1652
    %v1654 = vrcp.pop %v1651
    %v1655 = vmul.f32 1.0, %v1654
    %v1656 = vadd.f32 %v1631, %v130
    %v1658 = vrot.slane %v1656, 2
    %v1660 = vmul.f32 %v1653, %v1658
    %v1661 = vadd.f32 %v253, %v1660
    %v1662 = vtanh.pop %v1661
    %v1663 = vsub.f32 1.0, %v1655
    %v1664 = vmul.f32 %v1663, %v1662
    %v1666 = vrot.slane %v1365, 6
    %v1668 = vmul.f32 %v1655, %v1666
    %v1669 = vadd.f32 %v1664, %v1668
    %v1670 = vpack.c.bf16 %v1669, %v1669
    %v1672 = vrot.slane %v1670, 3
    %1674 = vmatprep.subr.bf16.mxu0 %v588
    %1675 = vmatpush1.bf16.msra.mxu0 %v587
    %1676 = vmatprep.subr.bf16.mxu0 %v591
    %1677 = vmatpush1.bf16.msra.mxu0 %v590
    %1678 = vmatprep.subr.bf16.mxu0 %v594
    %1679 = vmatpush1.bf16.msra.mxu0 %v593
    %1680 = vmatprep.subr.bf16.mxu0 %v597
    %1681 = vmatpush1.bf16.msra.mxu0 %v596
    %1682 = vmatprep.subr.bf16.mxu0 %v600
    %1683 = vmatpush1.bf16.msra.mxu0 %v599
    %1684 = vmatprep.subr.bf16.mxu0 %v603
    %1685 = vmatpush1.bf16.msra.mxu0 %v602
    %1686 = vmatprep.subr.bf16.mxu0 %v606
    %1687 = vmatpush1.bf16.msra.mxu0 %v605
    %1688 = vmatprep.subr.bf16.mxu0 %v609
    %1689 = vmatpush1.bf16.msra.mxu0 %v608
    %1690 = vmatprep.subr.bf16.mxu0 0
    %1691 = vmatpush1.bf16.msra.mxu0 0
    %1692 = vmatprep.subr.bf16.mxu0 0
    %1693 = vmatpush1.bf16.msra.mxu0 0
    %1694 = vmatprep.subr.bf16.mxu0 0
    %1695 = vmatpush1.bf16.msra.mxu0 0
    %1696 = vmatprep.subr.bf16.mxu0 0
    %1697 = vmatpush1.bf16.msra.mxu0 0
    %1698 = vmatprep.subr.bf16.mxu0 0
    %1699 = vmatpush1.bf16.msra.mxu0 0
    %1700 = vmatprep.subr.bf16.mxu0 0
    %1701 = vmatpush1.bf16.msra.mxu0 0
    %1702 = vmatprep.subr.bf16.mxu0 0
    %1703 = vmatpush1.bf16.msra.mxu0 0
    %1704 = vmatprep.subr.bf16.mxu0 0
    %1705 = vmatpush1.bf16.msra.mxu0 0
    %1706 = vmatprep.mubr.bf16.mxu0 0
    %1707 = vmatmul.mubr.bf16.gmra.mrb[0].mxu0 %v1672
    %v1708 = vpop.f32.mrb[0].mxu0
    %v1709 = vadd.f32 %v495, %v1708
    %v1710 = vpop.f32.mrb[0].mxu0
    %v1711 = vadd.f32 %v499, %v1710
    %v1712 = vpop.f32.mrb[0].mxu0
    %v1713 = vpop.f32.mrb[0].mxu0
    %1714 = vdwg.mxu0
    %1715 = vmatprep.subr.bf16.mxu0 0
    %1716 = vmatpush1.bf16.msra.mxu0 %v589
    %1717 = vmatprep.subr.bf16.mxu0 0
    %1718 = vmatpush1.bf16.msra.mxu0 %v592
    %1719 = vmatprep.subr.bf16.mxu0 0
    %1720 = vmatpush1.bf16.msra.mxu0 %v595
    %1721 = vmatprep.subr.bf16.mxu0 0
    %1722 = vmatpush1.bf16.msra.mxu0 %v598
    %1723 = vmatprep.subr.bf16.mxu0 0
    %1724 = vmatpush1.bf16.msra.mxu0 %v601
    %1725 = vmatprep.subr.bf16.mxu0 0
    %1726 = vmatpush1.bf16.msra.mxu0 %v604
    %1727 = vmatprep.subr.bf16.mxu0 0
    %1728 = vmatpush1.bf16.msra.mxu0 %v607
    %1729 = vmatprep.subr.bf16.mxu0 0
    %1730 = vmatpush1.bf16.msra.mxu0 %v610
    %1731 = vmatprep.subr.bf16.mxu0 0
    %1732 = vmatpush1.bf16.msra.mxu0 0
    %1733 = vmatprep.subr.bf16.mxu0 0
    %1734 = vmatpush1.bf16.msra.mxu0 0
    %1735 = vmatprep.subr.bf16.mxu0 0
    %1736 = vmatpush1.bf16.msra.mxu0 0
    %1737 = vmatprep.subr.bf16.mxu0 0
    %1738 = vmatpush1.bf16.msra.mxu0 0
    %1739 = vmatprep.subr.bf16.mxu0 0
    %1740 = vmatpush1.bf16.msra.mxu0 0
    %1741 = vmatprep.subr.bf16.mxu0 0
    %1742 = vmatpush1.bf16.msra.mxu0 0
    %1743 = vmatprep.subr.bf16.mxu0 0
    %1744 = vmatpush1.bf16.msra.mxu0 0
    %1745 = vmatprep.subr.bf16.mxu0 0
    %1746 = vmatpush1.bf16.msra.mxu0 0
    %1747 = vmatprep.mubr.bf16.mxu0 0
    %1748 = vmatmul.mubr.bf16.gmra.mrb[0].mxu0 %v1672
    %v1749 = vpop.f32.mrb[0].mxu0
    %v1750 = vadd.f32 %v503, %v1749
    %v1751 = vpop.f32.mrb[0].mxu0
    %v1752 = vpop.f32.mrb[0].mxu0
    %v1753 = vpop.f32.mrb[0].mxu0
    %1754 = vdwg.mxu0
    %v1755 = vpack.c.bf16 %v1554, %v1554
    %1756 = vmatprep.subr.bf16.mxu0 %v797
    %1757 = vmatpush1.bf16.msra.mxu0 %v796
    %1758 = vmatprep.subr.bf16.mxu0 %v800
    %1759 = vmatpush1.bf16.msra.mxu0 %v799
    %1760 = vmatprep.subr.bf16.mxu0 %v803
    %1761 = vmatpush1.bf16.msra.mxu0 %v802
    %1762 = vmatprep.subr.bf16.mxu0 %v806
    %1763 = vmatpush1.bf16.msra.mxu0 %v805
    %1764 = vmatprep.subr.bf16.mxu0 %v809
    %1765 = vmatpush1.bf16.msra.mxu0 %v808
    %1766 = vmatprep.subr.bf16.mxu0 %v812
    %1767 = vmatpush1.bf16.msra.mxu0 %v811
    %1768 = vmatprep.subr.bf16.mxu0 %v815
    %1769 = vmatpush1.bf16.msra.mxu0 %v814
    %1770 = vmatprep.subr.bf16.mxu0 %v818
    %1771 = vmatpush1.bf16.msra.mxu0 %v817
    %1772 = vmatprep.subr.bf16.mxu0 0
    %1773 = vmatpush1.bf16.msra.mxu0 0
    %1774 = vmatprep.subr.bf16.mxu0 0
    %1775 = vmatpush1.bf16.msra.mxu0 0
    %1776 = vmatprep.subr.bf16.mxu0 0
    %1777 = vmatpush1.bf16.msra.mxu0 0
    %1778 = vmatprep.subr.bf16.mxu0 0
    %1779 = vmatpush1.bf16.msra.mxu0 0
    %1780 = vmatprep.subr.bf16.mxu0 0
    %1781 = vmatpush1.bf16.msra.mxu0 0
    %1782 = vmatprep.subr.bf16.mxu0 0
    %1783 = vmatpush1.bf16.msra.mxu0 0
    %1784 = vmatprep.subr.bf16.mxu0 0
    %1785 = vmatpush1.bf16.msra.mxu0 0
    %1786 = vmatprep.subr.bf16.mxu0 0
    %1787 = vmatpush1.bf16.msra.mxu0 0
    %1788 = vmatprep.mubr.bf16.mxu0 0
    %1789 = vmatmul.mubr.bf16.gmra.mrb[0].mxu0 %v1755
    %v1790 = vpop.f32.mrb[0].mxu0
    %v1791 = vadd.f32 0.0, %v1790
    %v1792 = vpop.f32.mrb[0].mxu0
    %v1793 = vadd.f32 0.0, %v1792
    %v1794 = vpop.f32.mrb[0].mxu0
    %v1795 = vpop.f32.mrb[0].mxu0
    %1796 = vdwg.mxu0
    %1797 = vmatprep.subr.bf16.mxu0 0
    %1798 = vmatpush1.bf16.msra.mxu0 %v798
    %1799 = vmatprep.subr.bf16.mxu0 0
    %1800 = vmatpush1.bf16.msra.mxu0 %v801
    %1801 = vmatprep.subr.bf16.mxu0 0
    %1802 = vmatpush1.bf16.msra.mxu0 %v804
    %1803 = vmatprep.subr.bf16.mxu0 0
    %1804 = vmatpush1.bf16.msra.mxu0 %v807
    %1805 = vmatprep.subr.bf16.mxu0 0
    %1806 = vmatpush1.bf16.msra.mxu0 %v810
    %1807 = vmatprep.subr.bf16.mxu0 0
    %1808 = vmatpush1.bf16.msra.mxu0 %v813
    %1809 = vmatprep.subr.bf16.mxu0 0
    %1810 = vmatpush1.bf16.msra.mxu0 %v816
    %1811 = vmatprep.subr.bf16.mxu0 0
    %1812 = vmatpush1.bf16.msra.mxu0 %v819
    %1813 = vmatprep.subr.bf16.mxu0 0
    %1814 = vmatpush1.bf16.msra.mxu0 0
    %1815 = vmatprep.subr.bf16.mxu0 0
    %1816 = vmatpush1.bf16.msra.mxu0 0
    %1817 = vmatprep.subr.bf16.mxu0 0
    %1818 = vmatpush1.bf16.msra.mxu0 0
    %1819 = vmatprep.subr.bf16.mxu0 0
    %1820 = vmatpush1.bf16.msra.mxu0 0
    %1821 = vmatprep.subr.bf16.mxu0 0
    %1822 = vmatpush1.bf16.msra.mxu0 0
    %1823 = vmatprep.subr.bf16.mxu0 0
    %1824 = vmatpush1.bf16.msra.mxu0 0
    %1825 = vmatprep.subr.bf16.mxu0 0
    %1826 = vmatpush1.bf16.msra.mxu0 0
    %1827 = vmatprep.subr.bf16.mxu0 0
    %1828 = vmatpush1.bf16.msra.mxu0 0
    %1829 = vmatprep.mubr.bf16.mxu0 0
    %1830 = vmatmul.mubr.bf16.gmra.mrb[0].mxu0 %v1755
    %v1831 = vpop.f32.mrb[0].mxu0
    %v1832 = vadd.f32 0.0, %v1831
    %v1833 = vpop.f32.mrb[0].mxu0
    %v1834 = vpop.f32.mrb[0].mxu0
    %v1835 = vpop.f32.mrb[0].mxu0
    %1836 = vdwg.mxu0
    %v1837 = vadd.f32 %v1709, %v1791
    %v1838 = vadd.f32 %v1711, %v1793
    %v1839 = vxor.u32 %v1837, 2147483648
    %v1840 = vxor.u32 %v1838, 2147483648
    %v1841 = vmul.f32 %v1839, 1.442695
    %v1842 = vpow.pop %v1841
    %v1843 = vmul.f32 %v1840, 1.442695
    %v1844 = vpow.pop %v1843
    %v1845 = vadd.f32 %v1842, 1.0
    %v1846 = vadd.f32 %v1844, 1.0
    %v1847 = vrcp.pop %v1845
    %v1848 = vmul.f32 1.0, %v1847
    %v1849 = vrcp.pop %v1846
    %v1850 = vmul.f32 1.0, %v1849
    %v1851 = vadd.f32 %v1832, %v131
    %v1852 = vmul.f32 %v1848, %v1851
    %v1853 = vadd.f32 %v1750, %v1852
    %v1854 = vtanh.pop %v1853
    %v1855 = vsub.f32 1.0, %v1850
    %v1856 = vmul.f32 %v1855, %v1854
    %v1857 = vmul.f32 %v1850, %v1554
    %v1858 = vadd.f32 %v1856, %v1857
    %1859 = vmatprep.subr.bf16.mxu0 %v340
    %1860 = vmatpush1.bf16.msra.mxu0 %v339
    %1861 = vmatprep.subr.bf16.mxu0 %v343
    %1862 = vmatpush1.bf16.msra.mxu0 %v342
    %1863 = vmatprep.subr.bf16.mxu0 %v346
    %1864 = vmatpush1.bf16.msra.mxu0 %v345
    %1865 = vmatprep.subr.bf16.mxu0 %v349
    %1866 = vmatpush1.bf16.msra.mxu0 %v348
    %1867 = vmatprep.subr.bf16.mxu0 %v352
    %1868 = vmatpush1.bf16.msra.mxu0 %v351
    %1869 = vmatprep.subr.bf16.mxu0 %v355
    %1870 = vmatpush1.bf16.msra.mxu0 %v354
    %1871 = vmatprep.subr.bf16.mxu0 %v358
    %1872 = vmatpush1.bf16.msra.mxu0 %v357
    %1873 = vmatprep.subr.bf16.mxu0 %v361
    %1874 = vmatpush1.bf16.msra.mxu0 %v360
    %1875 = vmatprep.subr.bf16.mxu0 0
    %1876 = vmatpush1.bf16.msra.mxu0 0
    %1877 = vmatprep.subr.bf16.mxu0 0
    %1878 = vmatpush1.bf16.msra.mxu0 0
    %1879 = vmatprep.subr.bf16.mxu0 0
    %1880 = vmatpush1.bf16.msra.mxu0 0
    %1881 = vmatprep.subr.bf16.mxu0 0
    %1882 = vmatpush1.bf16.msra.mxu0 0
    %1883 = vmatprep.subr.bf16.mxu0 0
    %1884 = vmatpush1.bf16.msra.mxu0 0
    %1885 = vmatprep.subr.bf16.mxu0 0
    %1886 = vmatpush1.bf16.msra.mxu0 0
    %1887 = vmatprep.subr.bf16.mxu0 0
    %1888 = vmatpush1.bf16.msra.mxu0 0
    %1889 = vmatprep.subr.bf16.mxu0 0
    %1890 = vmatpush1.bf16.msra.mxu0 0
    %1891 = vmatprep.mubr.bf16.mxu0 0
    %1892 = vmatmul.mubr.bf16.gmra.mrb[0].mxu0 %v1672
    %v1893 = vpop.f32.mrb[0].mxu0
    %v1894 = vadd.f32 0.0, %v1893
    %v1895 = vpop.f32.mrb[0].mxu0
    %v1896 = vadd.f32 0.0, %v1895
    %v1897 = vpop.f32.mrb[0].mxu0
    %v1898 = vpop.f32.mrb[0].mxu0
    %1899 = vdwg.mxu0
    %1900 = vmatprep.subr.bf16.mxu0 0
    %1901 = vmatpush1.bf16.msra.mxu0 %v341
    %1902 = vmatprep.subr.bf16.mxu0 0
    %1903 = vmatpush1.bf16.msra.mxu0 %v344
    %1904 = vmatprep.subr.bf16.mxu0 0
    %1905 = vmatpush1.bf16.msra.mxu0 %v347
    %1906 = vmatprep.subr.bf16.mxu0 0
    %1907 = vmatpush1.bf16.msra.mxu0 %v350
    %1908 = vmatprep.subr.bf16.mxu0 0
    %1909 = vmatpush1.bf16.msra.mxu0 %v353
    %1910 = vmatprep.subr.bf16.mxu0 0
    %1911 = vmatpush1.bf16.msra.mxu0 %v356
    %1912 = vmatprep.subr.bf16.mxu0 0
    %1913 = vmatpush1.bf16.msra.mxu0 %v359
    %1914 = vmatprep.subr.bf16.mxu0 0
    %1915 = vmatpush1.bf16.msra.mxu0 %v362
    %1916 = vmatprep.subr.bf16.mxu0 0
    %1917 = vmatpush1.bf16.msra.mxu0 0
    %1918 = vmatprep.subr.bf16.mxu0 0
    %1919 = vmatpush1.bf16.msra.mxu0 0
    %1920 = vmatprep.subr.bf16.mxu0 0
    %1921 = vmatpush1.bf16.msra.mxu0 0
    %1922 = vmatprep.subr.bf16.mxu0 0
    %1923 = vmatpush1.bf16.msra.mxu0 0
    %1924 = vmatprep.subr.bf16.mxu0 0
    %1925 = vmatpush1.bf16.msra.mxu0 0
    %1926 = vmatprep.subr.bf16.mxu0 0
    %1927 = vmatpush1.bf16.msra.mxu0 0
    %1928 = vmatprep.subr.bf16.mxu0 0
    %1929 = vmatpush1.bf16.msra.mxu0 0
    %1930 = vmatprep.subr.bf16.mxu0 0
    %1931 = vmatpush1.bf16.msra.mxu0 0
    %1932 = vmatprep.mubr.bf16.mxu0 0
    %1933 = vmatmul.mubr.bf16.gmra.mrb[0].mxu0 %v1672
    %v1934 = vpop.f32.mrb[0].mxu0
    %v1935 = vadd.f32 0.0, %v1934
    %v1936 = vpop.f32.mrb[0].mxu0
    %v1937 = vpop.f32.mrb[0].mxu0
    %v1938 = vpop.f32.mrb[0].mxu0
    %1939 = vdwg.mxu0
    %v1940 = vadd.f32 %v214, %v1894
    %v1941 = vadd.f32 %v216, %v1896
    %v1942 = vxor.u32 %v1940, 2147483648
    %v1943 = vxor.u32 %v1941, 2147483648
    %v1944 = vmul.f32 %v1942, 1.442695
    %v1945 = vpow.pop %v1944
    %v1946 = vmul.f32 %v1943, 1.442695
    %v1947 = vpow.pop %v1946
    %v1948 = vadd.f32 %v1945, 1.0
    %v1949 = vadd.f32 %v1947, 1.0
    %v1950 = vrcp.pop %v1948
    %v1951 = vmul.f32 1.0, %v1950
    %v1952 = vrcp.pop %v1949
    %v1953 = vmul.f32 1.0, %v1952
    %v1954 = vadd.f32 %v1935, %v130
    %v1955 = vmul.f32 %v1951, %v1954
    %v1956 = vadd.f32 %v256, %v1955
    %v1957 = vtanh.pop %v1956
    %v1958 = vsub.f32 1.0, %v1953
    %v1959 = vmul.f32 %v1958, %v1957
    %v1961 = vrot.slane %v1669, 6
    %v1963 = vmul.f32 %v1953, %v1961
    %v1964 = vadd.f32 %v1959, %v1963
    %v1965 = vpack.c.bf16 %v1964, %v1964
    %1966 = vmatprep.subr.bf16.mxu0 %v588
    %1967 = vmatpush1.bf16.msra.mxu0 %v587
    %1968 = vmatprep.subr.bf16.mxu0 %v591
    %1969 = vmatpush1.bf16.msra.mxu0 %v590
    %1970 = vmatprep.subr.bf16.mxu0 %v594
    %1971 = vmatpush1.bf16.msra.mxu0 %v593
    %1972 = vmatprep.subr.bf16.mxu0 %v597
    %1973 = vmatpush1.bf16.msra.mxu0 %v596
    %1974 = vmatprep.subr.bf16.mxu0 %v600
    %1975 = vmatpush1.bf16.msra.mxu0 %v599
    %1976 = vmatprep.subr.bf16.mxu0 %v603
    %1977 = vmatpush1.bf16.msra.mxu0 %v602
    %1978 = vmatprep.subr.bf16.mxu0 %v606
    %1979 = vmatpush1.bf16.msra.mxu0 %v605
    %1980 = vmatprep.subr.bf16.mxu0 %v609
    %1981 = vmatpush1.bf16.msra.mxu0 %v608
    %1982 = vmatprep.subr.bf16.mxu0 0
    %1983 = vmatpush1.bf16.msra.mxu0 0
    %1984 = vmatprep.subr.bf16.mxu0 0
    %1985 = vmatpush1.bf16.msra.mxu0 0
    %1986 = vmatprep.subr.bf16.mxu0 0
    %1987 = vmatpush1.bf16.msra.mxu0 0
    %1988 = vmatprep.subr.bf16.mxu0 0
    %1989 = vmatpush1.bf16.msra.mxu0 0
    %1990 = vmatprep.subr.bf16.mxu0 0
    %1991 = vmatpush1.bf16.msra.mxu0 0
    %1992 = vmatprep.subr.bf16.mxu0 0
    %1993 = vmatpush1.bf16.msra.mxu0 0
    %1994 = vmatprep.subr.bf16.mxu0 0
    %1995 = vmatpush1.bf16.msra.mxu0 0
    %1996 = vmatprep.subr.bf16.mxu0 0
    %1997 = vmatpush1.bf16.msra.mxu0 0
    %1998 = vmatprep.mubr.bf16.mxu0 0
    %1999 = vmatmul.mubr.bf16.gmra.mrb[0].mxu0 %v1965
    %v2000 = vpop.f32.mrb[0].mxu0
    %v2001 = vadd.f32 %v495, %v2000
    %v2002 = vpop.f32.mrb[0].mxu0
    %v2003 = vadd.f32 %v499, %v2002
    %v2004 = vpop.f32.mrb[0].mxu0
    %v2005 = vpop.f32.mrb[0].mxu0
    %2006 = vdwg.mxu0
    %2007 = vmatprep.subr.bf16.mxu0 0
    %2008 = vmatpush1.bf16.msra.mxu0 %v589
    %2009 = vmatprep.subr.bf16.mxu0 0
    %2010 = vmatpush1.bf16.msra.mxu0 %v592
    %2011 = vmatprep.subr.bf16.mxu0 0
    %2012 = vmatpush1.bf16.msra.mxu0 %v595
    %2013 = vmatprep.subr.bf16.mxu0 0
    %2014 = vmatpush1.bf16.msra.mxu0 %v598
    %2015 = vmatprep.subr.bf16.mxu0 0
    %2016 = vmatpush1.bf16.msra.mxu0 %v601
    %2017 = vmatprep.subr.bf16.mxu0 0
    %2018 = vmatpush1.bf16.msra.mxu0 %v604
    %2019 = vmatprep.subr.bf16.mxu0 0
    %2020 = vmatpush1.bf16.msra.mxu0 %v607
    %2021 = vmatprep.subr.bf16.mxu0 0
    %2022 = vmatpush1.bf16.msra.mxu0 %v610
    %2023 = vmatprep.subr.bf16.mxu0 0
    %2024 = vmatpush1.bf16.msra.mxu0 0
    %2025 = vmatprep.subr.bf16.mxu0 0
    %2026 = vmatpush1.bf16.msra.mxu0 0
    %2027 = vmatprep.subr.bf16.mxu0 0
    %2028 = vmatpush1.bf16.msra.mxu0 0
    %2029 = vmatprep.subr.bf16.mxu0 0
    %2030 = vmatpush1.bf16.msra.mxu0 0
    %2031 = vmatprep.subr.bf16.mxu0 0
    %2032 = vmatpush1.bf16.msra.mxu0 0
    %2033 = vmatprep.subr.bf16.mxu0 0
    %2034 = vmatpush1.bf16.msra.mxu0 0
    %2035 = vmatprep.subr.bf16.mxu0 0
    %2036 = vmatpush1.bf16.msra.mxu0 0
    %2037 = vmatprep.subr.bf16.mxu0 0
    %2038 = vmatpush1.bf16.msra.mxu0 0
    %2039 = vmatprep.mubr.bf16.mxu0 0
    %2040 = vmatmul.mubr.bf16.gmra.mrb[0].mxu0 %v1965
    %v2041 = vpop.f32.mrb[0].mxu0
    %v2042 = vadd.f32 %v503, %v2041
    %v2043 = vpop.f32.mrb[0].mxu0
    %v2044 = vpop.f32.mrb[0].mxu0
    %v2045 = vpop.f32.mrb[0].mxu0
    %2046 = vdwg.mxu0
    %v2047 = vpack.c.bf16 %v1858, %v1858
    %2048 = vmatprep.subr.bf16.mxu0 %v797
    %2049 = vmatpush1.bf16.msra.mxu0 %v796
    %2050 = vmatprep.subr.bf16.mxu0 %v800
    %2051 = vmatpush1.bf16.msra.mxu0 %v799
    %2052 = vmatprep.subr.bf16.mxu0 %v803
    %2053 = vmatpush1.bf16.msra.mxu0 %v802
    %2054 = vmatprep.subr.bf16.mxu0 %v806
    %2055 = vmatpush1.bf16.msra.mxu0 %v805
    %2056 = vmatprep.subr.bf16.mxu0 %v809
    %2057 = vmatpush1.bf16.msra.mxu0 %v808
    %2058 = vmatprep.subr.bf16.mxu0 %v812
    %2059 = vmatpush1.bf16.msra.mxu0 %v811
    %2060 = vmatprep.subr.bf16.mxu0 %v815
    %2061 = vmatpush1.bf16.msra.mxu0 %v814
    %2062 = vmatprep.subr.bf16.mxu0 %v818
    %2063 = vmatpush1.bf16.msra.mxu0 %v817
    %2064 = vmatprep.subr.bf16.mxu0 0
    %2065 = vmatpush1.bf16.msra.mxu0 0
    %2066 = vmatprep.subr.bf16.mxu0 0
    %2067 = vmatpush1.bf16.msra.mxu0 0
    %2068 = vmatprep.subr.bf16.mxu0 0
    %2069 = vmatpush1.bf16.msra.mxu0 0
    %2070 = vmatprep.subr.bf16.mxu0 0
    %2071 = vmatpush1.bf16.msra.mxu0 0
    %2072 = vmatprep.subr.bf16.mxu0 0
    %2073 = vmatpush1.bf16.msra.mxu0 0
    %2074 = vmatprep.subr.bf16.mxu0 0
    %2075 = vmatpush1.bf16.msra.mxu0 0
    %2076 = vmatprep.subr.bf16.mxu0 0
    %2077 = vmatpush1.bf16.msra.mxu0 0
    %2078 = vmatprep.subr.bf16.mxu0 0
    %2079 = vmatpush1.bf16.msra.mxu0 0
    %2080 = vmatprep.mubr.bf16.mxu0 0
    %2081 = vmatmul.mubr.bf16.gmra.mrb[0].mxu0 %v2047
    %v2082 = vpop.f32.mrb[0].mxu0
    %v2083 = vadd.f32 0.0, %v2082
    %v2084 = vpop.f32.mrb[0].mxu0
    %v2085 = vadd.f32 0.0, %v2084
    %v2086 = vpop.f32.mrb[0].mxu0
    %v2087 = vpop.f32.mrb[0].mxu0
    %2088 = vdwg.mxu0
    %2089 = vmatprep.subr.bf16.mxu0 0
    %2090 = vmatpush1.bf16.msra.mxu0 %v798
    %2091 = vmatprep.subr.bf16.mxu0 0
    %2092 = vmatpush1.bf16.msra.mxu0 %v801
    %2093 = vmatprep.subr.bf16.mxu0 0
    %2094 = vmatpush1.bf16.msra.mxu0 %v804
    %2095 = vmatprep.subr.bf16.mxu0 0
    %2096 = vmatpush1.bf16.msra.mxu0 %v807
    %2097 = vmatprep.subr.bf16.mxu0 0
    %2098 = vmatpush1.bf16.msra.mxu0 %v810
    %2099 = vmatprep.subr.bf16.mxu0 0
    %2100 = vmatpush1.bf16.msra.mxu0 %v813
    %2101 = vmatprep.subr.bf16.mxu0 0
    %2102 = vmatpush1.bf16.msra.mxu0 %v816
    %2103 = vmatprep.subr.bf16.mxu0 0
    %2104 = vmatpush1.bf16.msra.mxu0 %v819
    %2105 = vmatprep.subr.bf16.mxu0 0
    %2106 = vmatpush1.bf16.msra.mxu0 0
    %2107 = vmatprep.subr.bf16.mxu0 0
    %2108 = vmatpush1.bf16.msra.mxu0 0
    %2109 = vmatprep.subr.bf16.mxu0 0
    %2110 = vmatpush1.bf16.msra.mxu0 0
    %2111 = vmatprep.subr.bf16.mxu0 0
    %2112 = vmatpush1.bf16.msra.mxu0 0
    %2113 = vmatprep.subr.bf16.mxu0 0
    %2114 = vmatpush1.bf16.msra.mxu0 0
    %2115 = vmatprep.subr.bf16.mxu0 0
    %2116 = vmatpush1.bf16.msra.mxu0 0
    %2117 = vmatprep.subr.bf16.mxu0 0
    %2118 = vmatpush1.bf16.msra.mxu0 0
    %2119 = vmatprep.subr.bf16.mxu0 0
    %2120 = vmatpush1.bf16.msra.mxu0 0
    %2121 = vmatprep.mubr.bf16.mxu0 0
    %2122 = vmatmul.mubr.bf16.gmra.mrb[0].mxu0 %v2047
    %v2123 = vpop.f32.mrb[0].mxu0
    %v2124 = vadd.f32 0.0, %v2123
    %v2125 = vpop.f32.mrb[0].mxu0
    %v2126 = vpop.f32.mrb[0].mxu0
    %v2127 = vpop.f32.mrb[0].mxu0
    %2128 = vdwg.mxu0
    %v2129 = vadd.f32 %v2001, %v2083
    %v2130 = vadd.f32 %v2003, %v2085
    %v2131 = vxor.u32 %v2129, 2147483648
    %v2132 = vxor.u32 %v2130, 2147483648
    %v2133 = vmul.f32 %v2131, 1.442695
    %v2134 = vpow.pop %v2133
    %v2135 = vmul.f32 %v2132, 1.442695
    %v2136 = vpow.pop %v2135
    %v2137 = vadd.f32 %v2134, 1.0
    %v2138 = vadd.f32 %v2136, 1.0
    %v2139 = vrcp.pop %v2137
    %v2140 = vmul.f32 1.0, %v2139
    %v2141 = vrcp.pop %v2138
    %v2142 = vmul.f32 1.0, %v2141
    %v2143 = vadd.f32 %v2124, %v131
    %v2144 = vmul.f32 %v2140, %v2143
    %v2145 = vadd.f32 %v2042, %v2144
    %v2146 = vtanh.pop %v2145
    %v2147 = vsub.f32 1.0, %v2142
    %v2148 = vmul.f32 %v2147, %v2146
    %v2149 = vmul.f32 %v2142, %v1858
    %v2150 = vadd.f32 %v2148, %v2149
    %2151 = vmatprep.subr.bf16.mxu0 %v340
    %2152 = vmatpush1.bf16.msra.mxu0 %v339
    %2153 = vmatprep.subr.bf16.mxu0 %v343
    %2154 = vmatpush1.bf16.msra.mxu0 %v342
    %2155 = vmatprep.subr.bf16.mxu0 %v346
    %2156 = vmatpush1.bf16.msra.mxu0 %v345
    %2157 = vmatprep.subr.bf16.mxu0 %v349
    %2158 = vmatpush1.bf16.msra.mxu0 %v348
    %2159 = vmatprep.subr.bf16.mxu0 %v352
    %2160 = vmatpush1.bf16.msra.mxu0 %v351
    %2161 = vmatprep.subr.bf16.mxu0 %v355
    %2162 = vmatpush1.bf16.msra.mxu0 %v354
    %2163 = vmatprep.subr.bf16.mxu0 %v358
    %2164 = vmatpush1.bf16.msra.mxu0 %v357
    %2165 = vmatprep.subr.bf16.mxu0 %v361
    %2166 = vmatpush1.bf16.msra.mxu0 %v360
    %2167 = vmatprep.subr.bf16.mxu0 0
    %2168 = vmatpush1.bf16.msra.mxu0 0
    %2169 = vmatprep.subr.bf16.mxu0 0
    %2170 = vmatpush1.bf16.msra.mxu0 0
    %2171 = vmatprep.subr.bf16.mxu0 0
    %2172 = vmatpush1.bf16.msra.mxu0 0
    %2173 = vmatprep.subr.bf16.mxu0 0
    %2174 = vmatpush1.bf16.msra.mxu0 0
    %2175 = vmatprep.subr.bf16.mxu0 0
    %2176 = vmatpush1.bf16.msra.mxu0 0
    %2177 = vmatprep.subr.bf16.mxu0 0
    %2178 = vmatpush1.bf16.msra.mxu0 0
    %2179 = vmatprep.subr.bf16.mxu0 0
    %2180 = vmatpush1.bf16.msra.mxu0 0
    %2181 = vmatprep.subr.bf16.mxu0 0
    %2182 = vmatpush1.bf16.msra.mxu0 0
    %2183 = vmatprep.mubr.bf16.mxu0 0
    %2184 = vmatmul.mubr.bf16.gmra.mrb[0].mxu0 %v1965
    %v2185 = vpop.f32.mrb[0].mxu0
    %v2186 = vadd.f32 0.0, %v2185
    %v2187 = vpop.f32.mrb[0].mxu0
    %v2188 = vadd.f32 0.0, %v2187
    %v2189 = vpop.f32.mrb[0].mxu0
    %v2190 = vpop.f32.mrb[0].mxu0
    %2191 = vdwg.mxu0
    %2192 = vmatprep.subr.bf16.mxu0 0
    %2193 = vmatpush1.bf16.msra.mxu0 %v341
    %2194 = vmatprep.subr.bf16.mxu0 0
    %2195 = vmatpush1.bf16.msra.mxu0 %v344
    %2196 = vmatprep.subr.bf16.mxu0 0
    %2197 = vmatpush1.bf16.msra.mxu0 %v347
    %2198 = vmatprep.subr.bf16.mxu0 0
    %2199 = vmatpush1.bf16.msra.mxu0 %v350
    %2200 = vmatprep.subr.bf16.mxu0 0
    %2201 = vmatpush1.bf16.msra.mxu0 %v353
    %2202 = vmatprep.subr.bf16.mxu0 0
    %2203 = vmatpush1.bf16.msra.mxu0 %v356
    %2204 = vmatprep.subr.bf16.mxu0 0
    %2205 = vmatpush1.bf16.msra.mxu0 %v359
    %2206 = vmatprep.subr.bf16.mxu0 0
    %2207 = vmatpush1.bf16.msra.mxu0 %v362
    %2208 = vmatprep.subr.bf16.mxu0 0
    %2209 = vmatpush1.bf16.msra.mxu0 0
    %2210 = vmatprep.subr.bf16.mxu0 0
    %2211 = vmatpush1.bf16.msra.mxu0 0
    %2212 = vmatprep.subr.bf16.mxu0 0
    %2213 = vmatpush1.bf16.msra.mxu0 0
    %2214 = vmatprep.subr.bf16.mxu0 0
    %2215 = vmatpush1.bf16.msra.mxu0 0
    %2216 = vmatprep.subr.bf16.mxu0 0
    %2217 = vmatpush1.bf16.msra.mxu0 0
    %2218 = vmatprep.subr.bf16.mxu0 0
    %2219 = vmatpush1.bf16.msra.mxu0 0
    %2220 = vmatprep.subr.bf16.mxu0 0
    %2221 = vmatpush1.bf16.msra.mxu0 0
    %2222 = vmatprep.subr.bf16.mxu0 0
    %2223 = vmatpush1.bf16.msra.mxu0 0
    %2224 = vmatprep.mubr.bf16.mxu0 0
    %2225 = vmatmul.mubr.bf16.gmra.mrb[0].mxu0 %v1965
    %v2226 = vpop.f32.mrb[0].mxu0
    %v2227 = vadd.f32 0.0, %v2226
    %v2228 = vpop.f32.mrb[0].mxu0
    %v2229 = vpop.f32.mrb[0].mxu0
    %v2230 = vpop.f32.mrb[0].mxu0
    %2231 = vdwg.mxu0
    %v2234 = vrot.slane %v2186, 6
    %v2235 = vrot.slane %v2188, 6
    %v2238 = vadd.f32 %v214, %v2234
    %v2239 = vadd.f32 %v216, %v2235
    %v2240 = vxor.u32 %v2238, 2147483648
    %v2241 = vxor.u32 %v2239, 2147483648
    %v2242 = vmul.f32 %v2240, 1.442695
    %v2243 = vpow.pop %v2242
    %v2244 = vmul.f32 %v2241, 1.442695
    %v2245 = vpow.pop %v2244
    %v2246 = vadd.f32 %v2243, 1.0
    %v2247 = vadd.f32 %v2245, 1.0
    %v2248 = vrcp.pop %v2246
    %v2249 = vmul.f32 1.0, %v2248
    %v2250 = vrcp.pop %v2247
    %v2251 = vmul.f32 1.0, %v2250
    %v2252 = vadd.f32 %v2227, %v130
    %v2254 = vrot.slane %v2252, 6
    %v2256 = vmul.f32 %v2249, %v2254
    %v2257 = vadd.f32 %v256, %v2256
    %v2258 = vtanh.pop %v2257
    %v2259 = vsub.f32 1.0, %v2251
    %v2260 = vmul.f32 %v2259, %v2258
    %v2262 = vrot.slane %v1964, 6
    %v2264 = vmul.f32 %v2251, %v2262
    %v2265 = vadd.f32 %v2260, %v2264
    %v2266 = vpack.c.bf16 %v2265, %v2265
    %v2268 = vrot.slane %v2266, 1
    %2270 = vmatprep.subr.bf16.mxu0 %v588
    %2271 = vmatpush1.bf16.msra.mxu0 %v587
    %2272 = vmatprep.subr.bf16.mxu0 %v591
    %2273 = vmatpush1.bf16.msra.mxu0 %v590
    %2274 = vmatprep.subr.bf16.mxu0 %v594
    %2275 = vmatpush1.bf16.msra.mxu0 %v593
    %2276 = vmatprep.subr.bf16.mxu0 %v597
    %2277 = vmatpush1.bf16.msra.mxu0 %v596
    %2278 = vmatprep.subr.bf16.mxu0 %v600
    %2279 = vmatpush1.bf16.msra.mxu0 %v599
    %2280 = vmatprep.subr.bf16.mxu0 %v603
    %2281 = vmatpush1.bf16.msra.mxu0 %v602
    %2282 = vmatprep.subr.bf16.mxu0 %v606
    %2283 = vmatpush1.bf16.msra.mxu0 %v605
    %2284 = vmatprep.subr.bf16.mxu0 %v609
    %2285 = vmatpush1.bf16.msra.mxu0 %v608
    %2286 = vmatprep.subr.bf16.mxu0 0
    %2287 = vmatpush1.bf16.msra.mxu0 0
    %2288 = vmatprep.subr.bf16.mxu0 0
    %2289 = vmatpush1.bf16.msra.mxu0 0
    %2290 = vmatprep.subr.bf16.mxu0 0
    %2291 = vmatpush1.bf16.msra.mxu0 0
    %2292 = vmatprep.subr.bf16.mxu0 0
    %2293 = vmatpush1.bf16.msra.mxu0 0
    %2294 = vmatprep.subr.bf16.mxu0 0
    %2295 = vmatpush1.bf16.msra.mxu0 0
    %2296 = vmatprep.subr.bf16.mxu0 0
    %2297 = vmatpush1.bf16.msra.mxu0 0
    %2298 = vmatprep.subr.bf16.mxu0 0
    %2299 = vmatpush1.bf16.msra.mxu0 0
    %2300 = vmatprep.subr.bf16.mxu0 0
    %2301 = vmatpush1.bf16.msra.mxu0 0
    %2302 = vmatprep.mubr.bf16.mxu0 0
    %2303 = vmatmul.mubr.bf16.gmra.mrb[0].mxu0 %v2268
    %v2304 = vpop.f32.mrb[0].mxu0
    %v2305 = vadd.f32 %v495, %v2304
    %v2306 = vpop.f32.mrb[0].mxu0
    %v2307 = vadd.f32 %v499, %v2306
    %v2308 = vpop.f32.mrb[0].mxu0
    %v2309 = vpop.f32.mrb[0].mxu0
    %2310 = vdwg.mxu0
    %2311 = vmatprep.subr.bf16.mxu0 0
    %2312 = vmatpush1.bf16.msra.mxu0 %v589
    %2313 = vmatprep.subr.bf16.mxu0 0
    %2314 = vmatpush1.bf16.msra.mxu0 %v592
    %2315 = vmatprep.subr.bf16.mxu0 0
    %2316 = vmatpush1.bf16.msra.mxu0 %v595
    %2317 = vmatprep.subr.bf16.mxu0 0
    %2318 = vmatpush1.bf16.msra.mxu0 %v598
    %2319 = vmatprep.subr.bf16.mxu0 0
    %2320 = vmatpush1.bf16.msra.mxu0 %v601
    %2321 = vmatprep.subr.bf16.mxu0 0
    %2322 = vmatpush1.bf16.msra.mxu0 %v604
    %2323 = vmatprep.subr.bf16.mxu0 0
    %2324 = vmatpush1.bf16.msra.mxu0 %v607
    %2325 = vmatprep.subr.bf16.mxu0 0
    %2326 = vmatpush1.bf16.msra.mxu0 %v610
    %2327 = vmatprep.subr.bf16.mxu0 0
    %2328 = vmatpush1.bf16.msra.mxu0 0
    %2329 = vmatprep.subr.bf16.mxu0 0
    %2330 = vmatpush1.bf16.msra.mxu0 0
    %2331 = vmatprep.subr.bf16.mxu0 0
    %2332 = vmatpush1.bf16.msra.mxu0 0
    %2333 = vmatprep.subr.bf16.mxu0 0
    %2334 = vmatpush1.bf16.msra.mxu0 0
    %2335 = vmatprep.subr.bf16.mxu0 0
    %2336 = vmatpush1.bf16.msra.mxu0 0
    %2337 = vmatprep.subr.bf16.mxu0 0
    %2338 = vmatpush1.bf16.msra.mxu0 0
    %2339 = vmatprep.subr.bf16.mxu0 0
    %2340 = vmatpush1.bf16.msra.mxu0 0
    %2341 = vmatprep.subr.bf16.mxu0 0
    %2342 = vmatpush1.bf16.msra.mxu0 0
    %2343 = vmatprep.mubr.bf16.mxu0 0
    %2344 = vmatmul.mubr.bf16.gmra.mrb[0].mxu0 %v2268
    %v2345 = vpop.f32.mrb[0].mxu0
    %v2346 = vadd.f32 %v503, %v2345
    %v2347 = vpop.f32.mrb[0].mxu0
    %v2348 = vpop.f32.mrb[0].mxu0
    %v2349 = vpop.f32.mrb[0].mxu0
    %2350 = vdwg.mxu0
    %v2351 = vpack.c.bf16 %v2150, %v2150
    %2352 = vmatprep.subr.bf16.mxu0 %v797
    %2353 = vmatpush1.bf16.msra.mxu0 %v796
    %2354 = vmatprep.subr.bf16.mxu0 %v800
    %2355 = vmatpush1.bf16.msra.mxu0 %v799
    %2356 = vmatprep.subr.bf16.mxu0 %v803
    %2357 = vmatpush1.bf16.msra.mxu0 %v802
    %2358 = vmatprep.subr.bf16.mxu0 %v806
    %2359 = vmatpush1.bf16.msra.mxu0 %v805
    %2360 = vmatprep.subr.bf16.mxu0 %v809
    %2361 = vmatpush1.bf16.msra.mxu0 %v808
    %2362 = vmatprep.subr.bf16.mxu0 %v812
    %2363 = vmatpush1.bf16.msra.mxu0 %v811
    %2364 = vmatprep.subr.bf16.mxu0 %v815
    %2365 = vmatpush1.bf16.msra.mxu0 %v814
    %2366 = vmatprep.subr.bf16.mxu0 %v818
    %2367 = vmatpush1.bf16.msra.mxu0 %v817
    %2368 = vmatprep.subr.bf16.mxu0 0
    %2369 = vmatpush1.bf16.msra.mxu0 0
    %2370 = vmatprep.subr.bf16.mxu0 0
    %2371 = vmatpush1.bf16.msra.mxu0 0
    %2372 = vmatprep.subr.bf16.mxu0 0
    %2373 = vmatpush1.bf16.msra.mxu0 0
    %2374 = vmatprep.subr.bf16.mxu0 0
    %2375 = vmatpush1.bf16.msra.mxu0 0
    %2376 = vmatprep.subr.bf16.mxu0 0
    %2377 = vmatpush1.bf16.msra.mxu0 0
    %2378 = vmatprep.subr.bf16.mxu0 0
    %2379 = vmatpush1.bf16.msra.mxu0 0
    %2380 = vmatprep.subr.bf16.mxu0 0
    %2381 = vmatpush1.bf16.msra.mxu0 0
    %2382 = vmatprep.subr.bf16.mxu0 0
    %2383 = vmatpush1.bf16.msra.mxu0 0
    %2384 = vmatprep.mubr.bf16.mxu0 0
    %2385 = vmatmul.mubr.bf16.gmra.mrb[0].mxu0 %v2351
    %v2386 = vpop.f32.mrb[0].mxu0
    %v2387 = vadd.f32 0.0, %v2386
    %v2388 = vpop.f32.mrb[0].mxu0
    %v2389 = vadd.f32 0.0, %v2388
    %v2390 = vpop.f32.mrb[0].mxu0
    %v2391 = vpop.f32.mrb[0].mxu0
    %2392 = vdwg.mxu0
    %2393 = vmatprep.subr.bf16.mxu0 0
    %2394 = vmatpush1.bf16.msra.mxu0 %v798
    %2395 = vmatprep.subr.bf16.mxu0 0
    %2396 = vmatpush1.bf16.msra.mxu0 %v801
    %2397 = vmatprep.subr.bf16.mxu0 0
    %2398 = vmatpush1.bf16.msra.mxu0 %v804
    %2399 = vmatprep.subr.bf16.mxu0 0
    %2400 = vmatpush1.bf16.msra.mxu0 %v807
    %2401 = vmatprep.subr.bf16.mxu0 0
    %2402 = vmatpush1.bf16.msra.mxu0 %v810
    %2403 = vmatprep.subr.bf16.mxu0 0
    %2404 = vmatpush1.bf16.msra.mxu0 %v813
    %2405 = vmatprep.subr.bf16.mxu0 0
    %2406 = vmatpush1.bf16.msra.mxu0 %v816
    %2407 = vmatprep.subr.bf16.mxu0 0
    %2408 = vmatpush1.bf16.msra.mxu0 %v819
    %2409 = vmatprep.subr.bf16.mxu0 0
    %2410 = vmatpush1.bf16.msra.mxu0 0
    %2411 = vmatprep.subr.bf16.mxu0 0
    %2412 = vmatpush1.bf16.msra.mxu0 0
    %2413 = vmatprep.subr.bf16.mxu0 0
    %2414 = vmatpush1.bf16.msra.mxu0 0
    %2415 = vmatprep.subr.bf16.mxu0 0
    %2416 = vmatpush1.bf16.msra.mxu0 0
    %2417 = vmatprep.subr.bf16.mxu0 0
    %2418 = vmatpush1.bf16.msra.mxu0 0
    %2419 = vmatprep.subr.bf16.mxu0 0
    %2420 = vmatpush1.bf16.msra.mxu0 0
    %2421 = vmatprep.subr.bf16.mxu0 0
    %2422 = vmatpush1.bf16.msra.mxu0 0
    %2423 = vmatprep.subr.bf16.mxu0 0
    %2424 = vmatpush1.bf16.msra.mxu0 0
    %2425 = vmatprep.mubr.bf16.mxu0 0
    %2426 = vmatmul.mubr.bf16.gmra.mrb[0].mxu0 %v2351
    %v2427 = vpop.f32.mrb[0].mxu0
    %v2428 = vadd.f32 0.0, %v2427
    %v2429 = vpop.f32.mrb[0].mxu0
    %v2430 = vpop.f32.mrb[0].mxu0
    %v2431 = vpop.f32.mrb[0].mxu0
    %2432 = vdwg.mxu0
    %v2433 = vadd.f32 %v2305, %v2387
    %v2434 = vadd.f32 %v2307, %v2389
    %v2435 = vxor.u32 %v2433, 2147483648
    %v2436 = vxor.u32 %v2434, 2147483648
    %v2437 = vmul.f32 %v2435, 1.442695
    %v2438 = vpow.pop %v2437
    %v2439 = vmul.f32 %v2436, 1.442695
    %v2440 = vpow.pop %v2439
    %v2441 = vadd.f32 %v2438, 1.0
    %v2442 = vadd.f32 %v2440, 1.0
    %v2443 = vrcp.pop %v2441
    %v2444 = vmul.f32 1.0, %v2443
    %v2445 = vrcp.pop %v2442
    %v2446 = vmul.f32 1.0, %v2445
    %v2447 = vadd.f32 %v2428, %v131
    %v2448 = vmul.f32 %v2444, %v2447
    %v2449 = vadd.f32 %v2346, %v2448
    %v2450 = vtanh.pop %v2449
    %v2451 = vsub.f32 1.0, %v2446
    %v2452 = vmul.f32 %v2451, %v2450
    %v2453 = vmul.f32 %v2446, %v2150
    %v2454 = vadd.f32 %v2452, %v2453
    %2455 = vmatprep.subr.bf16.mxu0 %v340
    %2456 = vmatpush1.bf16.msra.mxu0 %v339
    %2457 = vmatprep.subr.bf16.mxu0 %v343
    %2458 = vmatpush1.bf16.msra.mxu0 %v342
    %2459 = vmatprep.subr.bf16.mxu0 %v346
    %2460 = vmatpush1.bf16.msra.mxu0 %v345
    %2461 = vmatprep.subr.bf16.mxu0 %v349
    %2462 = vmatpush1.bf16.msra.mxu0 %v348
    %2463 = vmatprep.subr.bf16.mxu0 %v352
    %2464 = vmatpush1.bf16.msra.mxu0 %v351
    %2465 = vmatprep.subr.bf16.mxu0 %v355
    %2466 = vmatpush1.bf16.msra.mxu0 %v354
    %2467 = vmatprep.subr.bf16.mxu0 %v358
    %2468 = vmatpush1.bf16.msra.mxu0 %v357
    %2469 = vmatprep.subr.bf16.mxu0 %v361
    %2470 = vmatpush1.bf16.msra.mxu0 %v360
    %2471 = vmatprep.subr.bf16.mxu0 0
    %2472 = vmatpush1.bf16.msra.mxu0 0
    %2473 = vmatprep.subr.bf16.mxu0 0
    %2474 = vmatpush1.bf16.msra.mxu0 0
    %2475 = vmatprep.subr.bf16.mxu0 0
    %2476 = vmatpush1.bf16.msra.mxu0 0
    %2477 = vmatprep.subr.bf16.mxu0 0
    %2478 = vmatpush1.bf16.msra.mxu0 0
    %2479 = vmatprep.subr.bf16.mxu0 0
    %2480 = vmatpush1.bf16.msra.mxu0 0
    %2481 = vmatprep.subr.bf16.mxu0 0
    %2482 = vmatpush1.bf16.msra.mxu0 0
    %2483 = vmatprep.subr.bf16.mxu0 0
    %2484 = vmatpush1.bf16.msra.mxu0 0
    %2485 = vmatprep.subr.bf16.mxu0 0
    %2486 = vmatpush1.bf16.msra.mxu0 0
    %2487 = vmatprep.mubr.bf16.mxu0 0
    %2488 = vmatmul.mubr.bf16.gmra.mrb[0].mxu0 %v2268
    %v2489 = vpop.f32.mrb[0].mxu0
    %v2490 = vadd.f32 0.0, %v2489
    %v2491 = vpop.f32.mrb[0].mxu0
    %v2492 = vadd.f32 0.0, %v2491
    %v2493 = vpop.f32.mrb[0].mxu0
    %v2494 = vpop.f32.mrb[0].mxu0
    %2495 = vdwg.mxu0
    %2496 = vmatprep.subr.bf16.mxu0 0
    %2497 = vmatpush1.bf16.msra.mxu0 %v341
    %2498 = vmatprep.subr.bf16.mxu0 0
    %2499 = vmatpush1.bf16.msra.mxu0 %v344
    %2500 = vmatprep.subr.bf16.mxu0 0
    %2501 = vmatpush1.bf16.msra.mxu0 %v347
    %2502 = vmatprep.subr.bf16.mxu0 0
    %2503 = vmatpush1.bf16.msra.mxu0 %v350
    %2504 = vmatprep.subr.bf16.mxu0 0
    %2505 = vmatpush1.bf16.msra.mxu0 %v353
    %2506 = vmatprep.subr.bf16.mxu0 0
    %2507 = vmatpush1.bf16.msra.mxu0 %v356
    %2508 = vmatprep.subr.bf16.mxu0 0
    %2509 = vmatpush1.bf16.msra.mxu0 %v359
    %2510 = vmatprep.subr.bf16.mxu0 0
    %2511 = vmatpush1.bf16.msra.mxu0 %v362
    %2512 = vmatprep.subr.bf16.mxu0 0
    %2513 = vmatpush1.bf16.msra.mxu0 0
    %2514 = vmatprep.subr.bf16.mxu0 0
    %2515 = vmatpush1.bf16.msra.mxu0 0
    %2516 = vmatprep.subr.bf16.mxu0 0
    %2517 = vmatpush1.bf16.msra.mxu0 0
    %2518 = vmatprep.subr.bf16.mxu0 0
    %2519 = vmatpush1.bf16.msra.mxu0 0
    %2520 = vmatprep.subr.bf16.mxu0 0
    %2521 = vmatpush1.bf16.msra.mxu0 0
    %2522 = vmatprep.subr.bf16.mxu0 0
    %2523 = vmatpush1.bf16.msra.mxu0 0
    %2524 = vmatprep.subr.bf16.mxu0 0
    %2525 = vmatpush1.bf16.msra.mxu0 0
    %2526 = vmatprep.subr.bf16.mxu0 0
    %2527 = vmatpush1.bf16.msra.mxu0 0
    %2528 = vmatprep.mubr.bf16.mxu0 0
    %2529 = vmatmul.mubr.bf16.gmra.mrb[0].mxu0 %v2268
    %v2530 = vpop.f32.mrb[0].mxu0
    %v2531 = vadd.f32 0.0, %v2530
    %v2532 = vpop.f32.mrb[0].mxu0
    %v2533 = vpop.f32.mrb[0].mxu0
    %v2534 = vpop.f32.mrb[0].mxu0
    %2535 = vdwg.mxu0
    %v2538 = vrot.slane %v2490, 4
    %v2539 = vrot.slane %v2492, 4
    %v2542 = vadd.f32 %v214, %v2538
    %v2543 = vadd.f32 %v216, %v2539
    %v2544 = vxor.u32 %v2542, 2147483648
    %v2545 = vxor.u32 %v2543, 2147483648
    %v2546 = vmul.f32 %v2544, 1.442695
    %v2547 = vpow.pop %v2546
    %v2548 = vmul.f32 %v2545, 1.442695
    %v2549 = vpow.pop %v2548
    %v2550 = vadd.f32 %v2547, 1.0
    %v2551 = vadd.f32 %v2549, 1.0
    %v2552 = vrcp.pop %v2550
    %v2553 = vmul.f32 1.0, %v2552
    %v2554 = vrcp.pop %v2551
    %v2555 = vmul.f32 1.0, %v2554
    %v2556 = vadd.f32 %v2531, %v130
    %v2558 = vrot.slane %v2556, 4
    %v2560 = vmul.f32 %v2553, %v2558
    %v2561 = vadd.f32 %v256, %v2560
    %v2562 = vtanh.pop %v2561
    %v2563 = vsub.f32 1.0, %v2555
    %v2564 = vmul.f32 %v2563, %v2562
    %v2566 = vrot.slane %v2265, 6
    %v2568 = vmul.f32 %v2555, %v2566
    %v2569 = vadd.f32 %v2564, %v2568
    %v2570 = vpack.c.bf16 %v2569, %v2569
    %v2572 = vrot.slane %v2570, 2
    %2574 = vmatprep.subr.bf16.mxu0 %v588
    %2575 = vmatpush1.bf16.msra.mxu0 %v587
    %2576 = vmatprep.subr.bf16.mxu0 %v591
    %2577 = vmatpush1.bf16.msra.mxu0 %v590
    %2578 = vmatprep.subr.bf16.mxu0 %v594
    %2579 = vmatpush1.bf16.msra.mxu0 %v593
    %2580 = vmatprep.subr.bf16.mxu0 %v597
    %2581 = vmatpush1.bf16.msra.mxu0 %v596
    %2582 = vmatprep.subr.bf16.mxu0 %v600
    %2583 = vmatpush1.bf16.msra.mxu0 %v599
    %2584 = vmatprep.subr.bf16.mxu0 %v603
    %2585 = vmatpush1.bf16.msra.mxu0 %v602
    %2586 = vmatprep.subr.bf16.mxu0 %v606
    %2587 = vmatpush1.bf16.msra.mxu0 %v605
    %2588 = vmatprep.subr.bf16.mxu0 %v609
    %2589 = vmatpush1.bf16.msra.mxu0 %v608
    %2590 = vmatprep.subr.bf16.mxu0 0
    %2591 = vmatpush1.bf16.msra.mxu0 0
    %2592 = vmatprep.subr.bf16.mxu0 0
    %2593 = vmatpush1.bf16.msra.mxu0 0
    %2594 = vmatprep.subr.bf16.mxu0 0
    %2595 = vmatpush1.bf16.msra.mxu0 0
    %2596 = vmatprep.subr.bf16.mxu0 0
    %2597 = vmatpush1.bf16.msra.mxu0 0
    %2598 = vmatprep.subr.bf16.mxu0 0
    %2599 = vmatpush1.bf16.msra.mxu0 0
    %2600 = vmatprep.subr.bf16.mxu0 0
    %2601 = vmatpush1.bf16.msra.mxu0 0
    %2602 = vmatprep.subr.bf16.mxu0 0
    %2603 = vmatpush1.bf16.msra.mxu0 0
    %2604 = vmatprep.subr.bf16.mxu0 0
    %2605 = vmatpush1.bf16.msra.mxu0 0
    %2606 = vmatprep.mubr.bf16.mxu0 0
    %2607 = vmatmul.mubr.bf16.gmra.mrb[0].mxu0 %v2572
    %v2608 = vpop.f32.mrb[0].mxu0
    %v2609 = vadd.f32 %v495, %v2608
    %v2610 = vpop.f32.mrb[0].mxu0
    %v2611 = vadd.f32 %v499, %v2610
    %v2612 = vpop.f32.mrb[0].mxu0
    %v2613 = vpop.f32.mrb[0].mxu0
    %2614 = vdwg.mxu0
    %2615 = vmatprep.subr.bf16.mxu0 0
    %2616 = vmatpush1.bf16.msra.mxu0 %v589
    %2617 = vmatprep.subr.bf16.mxu0 0
    %2618 = vmatpush1.bf16.msra.mxu0 %v592
    %2619 = vmatprep.subr.bf16.mxu0 0
    %2620 = vmatpush1.bf16.msra.mxu0 %v595
    %2621 = vmatprep.subr.bf16.mxu0 0
    %2622 = vmatpush1.bf16.msra.mxu0 %v598
    %2623 = vmatprep.subr.bf16.mxu0 0
    %2624 = vmatpush1.bf16.msra.mxu0 %v601
    %2625 = vmatprep.subr.bf16.mxu0 0
    %2626 = vmatpush1.bf16.msra.mxu0 %v604
    %2627 = vmatprep.subr.bf16.mxu0 0
    %2628 = vmatpush1.bf16.msra.mxu0 %v607
    %2629 = vmatprep.subr.bf16.mxu0 0
    %2630 = vmatpush1.bf16.msra.mxu0 %v610
    %2631 = vmatprep.subr.bf16.mxu0 0
    %2632 = vmatpush1.bf16.msra.mxu0 0
    %2633 = vmatprep.subr.bf16.mxu0 0
    %2634 = vmatpush1.bf16.msra.mxu0 0
    %2635 = vmatprep.subr.bf16.mxu0 0
    %2636 = vmatpush1.bf16.msra.mxu0 0
    %2637 = vmatprep.subr.bf16.mxu0 0
    %2638 = vmatpush1.bf16.msra.mxu0 0
    %2639 = vmatprep.subr.bf16.mxu0 0
    %2640 = vmatpush1.bf16.msra.mxu0 0
    %2641 = vmatprep.subr.bf16.mxu0 0
    %2642 = vmatpush1.bf16.msra.mxu0 0
    %2643 = vmatprep.subr.bf16.mxu0 0
    %2644 = vmatpush1.bf16.msra.mxu0 0
    %2645 = vmatprep.subr.bf16.mxu0 0
    %2646 = vmatpush1.bf16.msra.mxu0 0
    %2647 = vmatprep.mubr.bf16.mxu0 0
    %2648 = vmatmul.mubr.bf16.gmra.mrb[0].mxu0 %v2572
    %v2649 = vpop.f32.mrb[0].mxu0
    %v2650 = vadd.f32 %v503, %v2649
    %v2651 = vpop.f32.mrb[0].mxu0
    %v2652 = vpop.f32.mrb[0].mxu0
    %v2653 = vpop.f32.mrb[0].mxu0
    %2654 = vdwg.mxu0
    %v2655 = vpack.c.bf16 %v2454, %v2454
    %2656 = vmatprep.subr.bf16.mxu0 %v797
    %2657 = vmatpush1.bf16.msra.mxu0 %v796
    %2658 = vmatprep.subr.bf16.mxu0 %v800
    %2659 = vmatpush1.bf16.msra.mxu0 %v799
    %2660 = vmatprep.subr.bf16.mxu0 %v803
    %2661 = vmatpush1.bf16.msra.mxu0 %v802
    %2662 = vmatprep.subr.bf16.mxu0 %v806
    %2663 = vmatpush1.bf16.msra.mxu0 %v805
    %2664 = vmatprep.subr.bf16.mxu0 %v809
    %2665 = vmatpush1.bf16.msra.mxu0 %v808
    %2666 = vmatprep.subr.bf16.mxu0 %v812
    %2667 = vmatpush1.bf16.msra.mxu0 %v811
    %2668 = vmatprep.subr.bf16.mxu0 %v815
    %2669 = vmatpush1.bf16.msra.mxu0 %v814
    %2670 = vmatprep.subr.bf16.mxu0 %v818
    %2671 = vmatpush1.bf16.msra.mxu0 %v817
    %2672 = vmatprep.subr.bf16.mxu0 0
    %2673 = vmatpush1.bf16.msra.mxu0 0
    %2674 = vmatprep.subr.bf16.mxu0 0
    %2675 = vmatpush1.bf16.msra.mxu0 0
    %2676 = vmatprep.subr.bf16.mxu0 0
    %2677 = vmatpush1.bf16.msra.mxu0 0
    %2678 = vmatprep.subr.bf16.mxu0 0
    %2679 = vmatpush1.bf16.msra.mxu0 0
    %2680 = vmatprep.subr.bf16.mxu0 0
    %2681 = vmatpush1.bf16.msra.mxu0 0
    %2682 = vmatprep.subr.bf16.mxu0 0
    %2683 = vmatpush1.bf16.msra.mxu0 0
    %2684 = vmatprep.subr.bf16.mxu0 0
    %2685 = vmatpush1.bf16.msra.mxu0 0
    %2686 = vmatprep.subr.bf16.mxu0 0
    %2687 = vmatpush1.bf16.msra.mxu0 0
    %2688 = vmatprep.mubr.bf16.mxu0 0
    %2689 = vmatmul.mubr.bf16.gmra.mrb[0].mxu0 %v2655
    %v2690 = vpop.f32.mrb[0].mxu0
    %v2691 = vadd.f32 0.0, %v2690
    %v2692 = vpop.f32.mrb[0].mxu0
    %v2693 = vadd.f32 0.0, %v2692
    %v2694 = vpop.f32.mrb[0].mxu0
    %v2695 = vpop.f32.mrb[0].mxu0
    %2696 = vdwg.mxu0
    %2697 = vmatprep.subr.bf16.mxu0 0
    %2698 = vmatpush1.bf16.msra.mxu0 %v798
    %2699 = vmatprep.subr.bf16.mxu0 0
    %2700 = vmatpush1.bf16.msra.mxu0 %v801
    %2701 = vmatprep.subr.bf16.mxu0 0
    %2702 = vmatpush1.bf16.msra.mxu0 %v804
    %2703 = vmatprep.subr.bf16.mxu0 0
    %2704 = vmatpush1.bf16.msra.mxu0 %v807
    %2705 = vmatprep.subr.bf16.mxu0 0
    %2706 = vmatpush1.bf16.msra.mxu0 %v810
    %2707 = vmatprep.subr.bf16.mxu0 0
    %2708 = vmatpush1.bf16.msra.mxu0 %v813
    %2709 = vmatprep.subr.bf16.mxu0 0
    %2710 = vmatpush1.bf16.msra.mxu0 %v816
    %2711 = vmatprep.subr.bf16.mxu0 0
    %2712 = vmatpush1.bf16.msra.mxu0 %v819
    %2713 = vmatprep.subr.bf16.mxu0 0
    %2714 = vmatpush1.bf16.msra.mxu0 0
    %2715 = vmatprep.subr.bf16.mxu0 0
    %2716 = vmatpush1.bf16.msra.mxu0 0
    %2717 = vmatprep.subr.bf16.mxu0 0
    %2718 = vmatpush1.bf16.msra.mxu0 0
    %2719 = vmatprep.subr.bf16.mxu0 0
    %2720 = vmatpush1.bf16.msra.mxu0 0
    %2721 = vmatprep.subr.bf16.mxu0 0
    %2722 = vmatpush1.bf16.msra.mxu0 0
    %2723 = vmatprep.subr.bf16.mxu0 0
    %2724 = vmatpush1.bf16.msra.mxu0 0
    %2725 = vmatprep.subr.bf16.mxu0 0
    %2726 = vmatpush1.bf16.msra.mxu0 0
    %2727 = vmatprep.subr.bf16.mxu0 0
    %2728 = vmatpush1.bf16.msra.mxu0 0
    %2729 = vmatprep.mubr.bf16.mxu0 0
    %2730 = vmatmul.mubr.bf16.gmra.mrb[0].mxu0 %v2655
    %v2731 = vpop.f32.mrb[0].mxu0
    %v2732 = vadd.f32 0.0, %v2731
    %v2733 = vpop.f32.mrb[0].mxu0
    %v2734 = vpop.f32.mrb[0].mxu0
    %v2735 = vpop.f32.mrb[0].mxu0
    %2736 = vdwg.mxu0
    %v2737 = vadd.f32 %v2609, %v2691
    %v2738 = vadd.f32 %v2611, %v2693
    %v2739 = vxor.u32 %v2737, 2147483648
    %v2740 = vxor.u32 %v2738, 2147483648
    %v2741 = vmul.f32 %v2739, 1.442695
    %v2742 = vpow.pop %v2741
    %v2743 = vmul.f32 %v2740, 1.442695
    %v2744 = vpow.pop %v2743
    %v2745 = vadd.f32 %v2742, 1.0
    %v2746 = vadd.f32 %v2744, 1.0
    %v2747 = vrcp.pop %v2745
    %v2748 = vmul.f32 1.0, %v2747
    %v2749 = vrcp.pop %v2746
    %v2750 = vmul.f32 1.0, %v2749
    %v2751 = vadd.f32 %v2732, %v131
    %v2752 = vmul.f32 %v2748, %v2751
    %v2753 = vadd.f32 %v2650, %v2752
    %v2754 = vtanh.pop %v2753
    %v2755 = vsub.f32 1.0, %v2750
    %v2756 = vmul.f32 %v2755, %v2754
    %v2757 = vmul.f32 %v2750, %v2454
    %v2758 = vadd.f32 %v2756, %v2757
    %2759 = vmatprep.subr.bf16.mxu0 %v340
    %2760 = vmatpush1.bf16.msra.mxu0 %v339
    %2761 = vmatprep.subr.bf16.mxu0 %v343
    %2762 = vmatpush1.bf16.msra.mxu0 %v342
    %2763 = vmatprep.subr.bf16.mxu0 %v346
    %2764 = vmatpush1.bf16.msra.mxu0 %v345
    %2765 = vmatprep.subr.bf16.mxu0 %v349
    %2766 = vmatpush1.bf16.msra.mxu0 %v348
    %2767 = vmatprep.subr.bf16.mxu0 %v352
    %2768 = vmatpush1.bf16.msra.mxu0 %v351
    %2769 = vmatprep.subr.bf16.mxu0 %v355
    %2770 = vmatpush1.bf16.msra.mxu0 %v354
    %2771 = vmatprep.subr.bf16.mxu0 %v358
    %2772 = vmatpush1.bf16.msra.mxu0 %v357
    %2773 = vmatprep.subr.bf16.mxu0 %v361
    %2774 = vmatpush1.bf16.msra.mxu0 %v360
    %2775 = vmatprep.subr.bf16.mxu0 0
    %2776 = vmatpush1.bf16.msra.mxu0 0
    %2777 = vmatprep.subr.bf16.mxu0 0
    %2778 = vmatpush1.bf16.msra.mxu0 0
    %2779 = vmatprep.subr.bf16.mxu0 0
    %2780 = vmatpush1.bf16.msra.mxu0 0
    %2781 = vmatprep.subr.bf16.mxu0 0
    %2782 = vmatpush1.bf16.msra.mxu0 0
    %2783 = vmatprep.subr.bf16.mxu0 0
    %2784 = vmatpush1.bf16.msra.mxu0 0
    %2785 = vmatprep.subr.bf16.mxu0 0
    %2786 = vmatpush1.bf16.msra.mxu0 0
    %2787 = vmatprep.subr.bf16.mxu0 0
    %2788 = vmatpush1.bf16.msra.mxu0 0
    %2789 = vmatprep.subr.bf16.mxu0 0
    %2790 = vmatpush1.bf16.msra.mxu0 0
    %2791 = vmatprep.mubr.bf16.mxu0 0
    %2792 = vmatmul.mubr.bf16.gmra.mrb[0].mxu0 %v2572
    %v2793 = vpop.f32.mrb[0].mxu0
    %v2794 = vadd.f32 0.0, %v2793
    %v2795 = vpop.f32.mrb[0].mxu0
    %v2796 = vadd.f32 0.0, %v2795
    %v2797 = vpop.f32.mrb[0].mxu0
    %v2798 = vpop.f32.mrb[0].mxu0
    %2799 = vdwg.mxu0
    %2800 = vmatprep.subr.bf16.mxu0 0
    %2801 = vmatpush1.bf16.msra.mxu0 %v341
    %2802 = vmatprep.subr.bf16.mxu0 0
    %2803 = vmatpush1.bf16.msra.mxu0 %v344
    %2804 = vmatprep.subr.bf16.mxu0 0
    %2805 = vmatpush1.bf16.msra.mxu0 %v347
    %2806 = vmatprep.subr.bf16.mxu0 0
    %2807 = vmatpush1.bf16.msra.mxu0 %v350
    %2808 = vmatprep.subr.bf16.mxu0 0
    %2809 = vmatpush1.bf16.msra.mxu0 %v353
    %2810 = vmatprep.subr.bf16.mxu0 0
    %2811 = vmatpush1.bf16.msra.mxu0 %v356
    %2812 = vmatprep.subr.bf16.mxu0 0
    %2813 = vmatpush1.bf16.msra.mxu0 %v359
    %2814 = vmatprep.subr.bf16.mxu0 0
    %2815 = vmatpush1.bf16.msra.mxu0 %v362
    %2816 = vmatprep.subr.bf16.mxu0 0
    %2817 = vmatpush1.bf16.msra.mxu0 0
    %2818 = vmatprep.subr.bf16.mxu0 0
    %2819 = vmatpush1.bf16.msra.mxu0 0
    %2820 = vmatprep.subr.bf16.mxu0 0
    %2821 = vmatpush1.bf16.msra.mxu0 0
    %2822 = vmatprep.subr.bf16.mxu0 0
    %2823 = vmatpush1.bf16.msra.mxu0 0
    %2824 = vmatprep.subr.bf16.mxu0 0
    %2825 = vmatpush1.bf16.msra.mxu0 0
    %2826 = vmatprep.subr.bf16.mxu0 0
    %2827 = vmatpush1.bf16.msra.mxu0 0
    %2828 = vmatprep.subr.bf16.mxu0 0
    %2829 = vmatpush1.bf16.msra.mxu0 0
    %2830 = vmatprep.subr.bf16.mxu0 0
    %2831 = vmatpush1.bf16.msra.mxu0 0
    %2832 = vmatprep.mubr.bf16.mxu0 0
    %2833 = vmatmul.mubr.bf16.gmra.mrb[0].mxu0 %v2572
    %v2834 = vpop.f32.mrb[0].mxu0
    %v2835 = vadd.f32 0.0, %v2834
    %v2836 = vpop.f32.mrb[0].mxu0
    %v2837 = vpop.f32.mrb[0].mxu0
    %v2838 = vpop.f32.mrb[0].mxu0
    %2839 = vdwg.mxu0
    %v2842 = vrot.slane %v2794, 2
    %v2843 = vrot.slane %v2796, 2
    %v2846 = vadd.f32 %v214, %v2842
    %v2847 = vadd.f32 %v216, %v2843
    %v2848 = vxor.u32 %v2846, 2147483648
    %v2849 = vxor.u32 %v2847, 2147483648
    %v2850 = vmul.f32 %v2848, 1.442695
    %v2851 = vpow.pop %v2850
    %v2852 = vmul.f32 %v2849, 1.442695
    %v2853 = vpow.pop %v2852
    %v2854 = vadd.f32 %v2851, 1.0
    %v2855 = vadd.f32 %v2853, 1.0
    %v2856 = vrcp.pop %v2854
    %v2857 = vmul.f32 1.0, %v2856
    %v2858 = vrcp.pop %v2855
    %v2859 = vmul.f32 1.0, %v2858
    %v2860 = vadd.f32 %v2835, %v130
    %v2862 = vrot.slane %v2860, 2
    %v2864 = vmul.f32 %v2857, %v2862
    %v2865 = vadd.f32 %v256, %v2864
    %v2866 = vtanh.pop %v2865
    %v2867 = vsub.f32 1.0, %v2859
    %v2868 = vmul.f32 %v2867, %v2866
    %v2870 = vrot.slane %v2569, 6
    %v2872 = vmul.f32 %v2859, %v2870
    %v2873 = vadd.f32 %v2868, %v2872
    %v2874 = vpack.c.bf16 %v2873, %v2873
    %v2876 = vrot.slane %v2874, 3
    %2878 = vmatprep.subr.bf16.mxu0 %v588
    %2879 = vmatpush1.bf16.msra.mxu0 %v587
    %2880 = vmatprep.subr.bf16.mxu0 %v591
    %2881 = vmatpush1.bf16.msra.mxu0 %v590
    %2882 = vmatprep.subr.bf16.mxu0 %v594
    %2883 = vmatpush1.bf16.msra.mxu0 %v593
    %2884 = vmatprep.subr.bf16.mxu0 %v597
    %2885 = vmatpush1.bf16.msra.mxu0 %v596
    %2886 = vmatprep.subr.bf16.mxu0 %v600
    %2887 = vmatpush1.bf16.msra.mxu0 %v599
    %2888 = vmatprep.subr.bf16.mxu0 %v603
    %2889 = vmatpush1.bf16.msra.mxu0 %v602
    %2890 = vmatprep.subr.bf16.mxu0 %v606
    %2891 = vmatpush1.bf16.msra.mxu0 %v605
    %2892 = vmatprep.subr.bf16.mxu0 %v609
    %2893 = vmatpush1.bf16.msra.mxu0 %v608
    %2894 = vmatprep.subr.bf16.mxu0 0
    %2895 = vmatpush1.bf16.msra.mxu0 0
    %2896 = vmatprep.subr.bf16.mxu0 0
    %2897 = vmatpush1.bf16.msra.mxu0 0
    %2898 = vmatprep.subr.bf16.mxu0 0
    %2899 = vmatpush1.bf16.msra.mxu0 0
    %2900 = vmatprep.subr.bf16.mxu0 0
    %2901 = vmatpush1.bf16.msra.mxu0 0
    %2902 = vmatprep.subr.bf16.mxu0 0
    %2903 = vmatpush1.bf16.msra.mxu0 0
    %2904 = vmatprep.subr.bf16.mxu0 0
    %2905 = vmatpush1.bf16.msra.mxu0 0
    %2906 = vmatprep.subr.bf16.mxu0 0
    %2907 = vmatpush1.bf16.msra.mxu0 0
    %2908 = vmatprep.subr.bf16.mxu0 0
    %2909 = vmatpush1.bf16.msra.mxu0 0
    %2910 = vmatprep.mubr.bf16.mxu0 0
    %2911 = vmatmul.mubr.bf16.gmra.mrb[0].mxu0 %v2876
    %v2912 = vpop.f32.mrb[0].mxu0
    %v2913 = vadd.f32 %v495, %v2912
    %v2914 = vpop.f32.mrb[0].mxu0
    %v2915 = vadd.f32 %v499, %v2914
    %v2916 = vpop.f32.mrb[0].mxu0
    %v2917 = vpop.f32.mrb[0].mxu0
    %2918 = vdwg.mxu0
    %2919 = vmatprep.subr.bf16.mxu0 0
    %2920 = vmatpush1.bf16.msra.mxu0 %v589
    %2921 = vmatprep.subr.bf16.mxu0 0
    %2922 = vmatpush1.bf16.msra.mxu0 %v592
    %2923 = vmatprep.subr.bf16.mxu0 0
    %2924 = vmatpush1.bf16.msra.mxu0 %v595
    %2925 = vmatprep.subr.bf16.mxu0 0
    %2926 = vmatpush1.bf16.msra.mxu0 %v598
    %2927 = vmatprep.subr.bf16.mxu0 0
    %2928 = vmatpush1.bf16.msra.mxu0 %v601
    %2929 = vmatprep.subr.bf16.mxu0 0
    %2930 = vmatpush1.bf16.msra.mxu0 %v604
    %2931 = vmatprep.subr.bf16.mxu0 0
    %2932 = vmatpush1.bf16.msra.mxu0 %v607
    %2933 = vmatprep.subr.bf16.mxu0 0
    %2934 = vmatpush1.bf16.msra.mxu0 %v610
    %2935 = vmatprep.subr.bf16.mxu0 0
    %2936 = vmatpush1.bf16.msra.mxu0 0
    %2937 = vmatprep.subr.bf16.mxu0 0
    %2938 = vmatpush1.bf16.msra.mxu0 0
    %2939 = vmatprep.subr.bf16.mxu0 0
    %2940 = vmatpush1.bf16.msra.mxu0 0
    %2941 = vmatprep.subr.bf16.mxu0 0
    %2942 = vmatpush1.bf16.msra.mxu0 0
    %2943 = vmatprep.subr.bf16.mxu0 0
    %2944 = vmatpush1.bf16.msra.mxu0 0
    %2945 = vmatprep.subr.bf16.mxu0 0
    %2946 = vmatpush1.bf16.msra.mxu0 0
    %2947 = vmatprep.subr.bf16.mxu0 0
    %2948 = vmatpush1.bf16.msra.mxu0 0
    %2949 = vmatprep.subr.bf16.mxu0 0
    %2950 = vmatpush1.bf16.msra.mxu0 0
    %2951 = vmatprep.mubr.bf16.mxu0 0
    %2952 = vmatmul.mubr.bf16.gmra.mrb[0].mxu0 %v2876
    %v2953 = vpop.f32.mrb[0].mxu0
    %v2954 = vadd.f32 %v503, %v2953
    %v2955 = vpop.f32.mrb[0].mxu0
    %v2956 = vpop.f32.mrb[0].mxu0
    %v2957 = vpop.f32.mrb[0].mxu0
    %2958 = vdwg.mxu0
    %v2959 = vpack.c.bf16 %v2758, %v2758
    %2960 = vmatprep.subr.bf16.mxu0 %v797
    %2961 = vmatpush1.bf16.msra.mxu0 %v796
    %2962 = vmatprep.subr.bf16.mxu0 %v800
    %2963 = vmatpush1.bf16.msra.mxu0 %v799
    %2964 = vmatprep.subr.bf16.mxu0 %v803
    %2965 = vmatpush1.bf16.msra.mxu0 %v802
    %2966 = vmatprep.subr.bf16.mxu0 %v806
    %2967 = vmatpush1.bf16.msra.mxu0 %v805
    %2968 = vmatprep.subr.bf16.mxu0 %v809
    %2969 = vmatpush1.bf16.msra.mxu0 %v808
    %2970 = vmatprep.subr.bf16.mxu0 %v812
    %2971 = vmatpush1.bf16.msra.mxu0 %v811
    %2972 = vmatprep.subr.bf16.mxu0 %v815
    %2973 = vmatpush1.bf16.msra.mxu0 %v814
    %2974 = vmatprep.subr.bf16.mxu0 %v818
    %2975 = vmatpush1.bf16.msra.mxu0 %v817
    %2976 = vmatprep.subr.bf16.mxu0 0
    %2977 = vmatpush1.bf16.msra.mxu0 0
    %2978 = vmatprep.subr.bf16.mxu0 0
    %2979 = vmatpush1.bf16.msra.mxu0 0
    %2980 = vmatprep.subr.bf16.mxu0 0
    %2981 = vmatpush1.bf16.msra.mxu0 0
    %2982 = vmatprep.subr.bf16.mxu0 0
    %2983 = vmatpush1.bf16.msra.mxu0 0
    %2984 = vmatprep.subr.bf16.mxu0 0
    %2985 = vmatpush1.bf16.msra.mxu0 0
    %2986 = vmatprep.subr.bf16.mxu0 0
    %2987 = vmatpush1.bf16.msra.mxu0 0
    %2988 = vmatprep.subr.bf16.mxu0 0
    %2989 = vmatpush1.bf16.msra.mxu0 0
    %2990 = vmatprep.subr.bf16.mxu0 0
    %2991 = vmatpush1.bf16.msra.mxu0 0
    %2992 = vmatprep.mubr.bf16.mxu0 0
    %2993 = vmatmul.mubr.bf16.gmra.mrb[0].mxu0 %v2959
    %v2994 = vpop.f32.mrb[0].mxu0
    %v2995 = vadd.f32 0.0, %v2994
    %v2996 = vpop.f32.mrb[0].mxu0
    %v2997 = vadd.f32 0.0, %v2996
    %v2998 = vpop.f32.mrb[0].mxu0
    %v2999 = vpop.f32.mrb[0].mxu0
    %3000 = vdwg.mxu0
    %3001 = vmatprep.subr.bf16.mxu0 0
    %3002 = vmatpush1.bf16.msra.mxu0 %v798
    %3003 = vmatprep.subr.bf16.mxu0 0
    %3004 = vmatpush1.bf16.msra.mxu0 %v801
    %3005 = vmatprep.subr.bf16.mxu0 0
    %3006 = vmatpush1.bf16.msra.mxu0 %v804
    %3007 = vmatprep.subr.bf16.mxu0 0
    %3008 = vmatpush1.bf16.msra.mxu0 %v807
    %3009 = vmatprep.subr.bf16.mxu0 0
    %3010 = vmatpush1.bf16.msra.mxu0 %v810
    %3011 = vmatprep.subr.bf16.mxu0 0
    %3012 = vmatpush1.bf16.msra.mxu0 %v813
    %3013 = vmatprep.subr.bf16.mxu0 0
    %3014 = vmatpush1.bf16.msra.mxu0 %v816
    %3015 = vmatprep.subr.bf16.mxu0 0
    %3016 = vmatpush1.bf16.msra.mxu0 %v819
    %3017 = vmatprep.subr.bf16.mxu0 0
    %3018 = vmatpush1.bf16.msra.mxu0 0
    %3019 = vmatprep.subr.bf16.mxu0 0
    %3020 = vmatpush1.bf16.msra.mxu0 0
    %3021 = vmatprep.subr.bf16.mxu0 0
    %3022 = vmatpush1.bf16.msra.mxu0 0
    %3023 = vmatprep.subr.bf16.mxu0 0
    %3024 = vmatpush1.bf16.msra.mxu0 0
    %3025 = vmatprep.subr.bf16.mxu0 0
    %3026 = vmatpush1.bf16.msra.mxu0 0
    %3027 = vmatprep.subr.bf16.mxu0 0
    %3028 = vmatpush1.bf16.msra.mxu0 0
    %3029 = vmatprep.subr.bf16.mxu0 0
    %3030 = vmatpush1.bf16.msra.mxu0 0
    %3031 = vmatprep.subr.bf16.mxu0 0
    %3032 = vmatpush1.bf16.msra.mxu0 0
    %3033 = vmatprep.mubr.bf16.mxu0 0
    %3034 = vmatmul.mubr.bf16.gmra.mrb[0].mxu0 %v2959
    %v3035 = vpop.f32.mrb[0].mxu0
    %v3036 = vadd.f32 0.0, %v3035
    %v3037 = vpop.f32.mrb[0].mxu0
    %v3038 = vpop.f32.mrb[0].mxu0
    %v3039 = vpop.f32.mrb[0].mxu0
    %3040 = vdwg.mxu0
    %v3041 = vadd.f32 %v2913, %v2995
    %v3042 = vadd.f32 %v2915, %v2997
    %v3043 = vxor.u32 %v3041, 2147483648
    %v3044 = vxor.u32 %v3042, 2147483648
    %v3045 = vmul.f32 %v3043, 1.442695
    %v3046 = vpow.pop %v3045
    %v3047 = vmul.f32 %v3044, 1.442695
    %v3048 = vpow.pop %v3047
    %v3049 = vadd.f32 %v3046, 1.0
    %v3050 = vadd.f32 %v3048, 1.0
    %v3051 = vrcp.pop %v3049
    %v3052 = vmul.f32 1.0, %v3051
    %v3053 = vrcp.pop %v3050
    %v3054 = vmul.f32 1.0, %v3053
    %v3055 = vadd.f32 %v3036, %v131
    %v3056 = vmul.f32 %v3052, %v3055
    %v3057 = vadd.f32 %v2954, %v3056
    %v3058 = vtanh.pop %v3057
    %v3059 = vsub.f32 1.0, %v3054
    %v3060 = vmul.f32 %v3059, %v3058
    %v3061 = vmul.f32 %v3054, %v2758
    %v3062 = vadd.f32 %v3060, %v3061
    %v3063 = vmul.f32 %v3062, %v132
    %vm3064 = vcmask 1041408
    %v3065 = vsel %vm3064, %v3063, 0.0
    %3066 = vadd.xlane.f32.xlu0 %v3065
    %v3067 = vpop.xlane.xlu0 %3066
    %v3068 = vadd.f32 %v3067, %v133
    %vm3069 = vcmask 1024
    %3070 = vst.msk [vmem:[%s3] sm:$0x3] %vm3069, %v3068
    // Predicated region
    $region18: #{gru_model_forward.1} parent=1 // pred_check
      _
    $region19: #{gru_model_forward.1} parent=1 // pred_check_branch
      %3072 = sbr.rel (0) target = $region21
    $region20: #{gru_model_forward.1} parent=1 // pred_region
      _
    $region21: #{gru_model_forward.1} parent=1 // pred_fallthru
      _
    // Predicated region
    $region22: #{gru_model_forward.1} parent=1 // pred_check
      _
    $region23: #{gru_model_forward.1} parent=1 // pred_check_branch
      %3074 = sbr.rel (0) target = $region25
    $region24: #{gru_model_forward.1} parent=1 // pred_region
      _
    $region25: #{gru_model_forward.1} parent=1 // pred_fallthru
      _
    %3075 = vsyncpa [#allocation3], 1

</llo_original>
